<compile_context>
chip_gen: v7x
topology: tpu7x:2x2x1
jax: 0.10.0
libtpu: 0.0.40
codegen_flags: <defaults>
</compile_context>

<pallas_src>
import functools

import jax
import jax.numpy as jnp
import numpy as np
from jax.experimental import pallas as pl
from jax.experimental.pallas import tpu as pltpu


# ------------------------------ fused kernel ---------------------------------
def _rdb5c_kernel(x_ref, w1_ref, b1_ref, w2_ref, b2_ref, w3_ref, b3_ref,
                  w4_ref, b4_ref, w5_ref, b5_ref, o_ref, feat_ref,
                  *, nf, gc, H, W, lpad, compute_dtype):
    HW = H * W

    # Zero the whole scratch once: the flat left/right zero pads absorb the
    # row-overflow taps; interiors are overwritten below.
    feat_ref[...] = jnp.zeros(feat_ref.shape, feat_ref.dtype)
    # x occupies channel slice [0:nf] (it is also the residual).
    feat_ref[0:nf, lpad:lpad + HW] = x_ref[0].astype(jnp.float32)

    # Column-validity masks (only column wrap needs masking; row overflow
    # lands in the zero padding of the flattened buffer).
    ww = jax.lax.broadcasted_iota(jnp.int32, (1, HW), 1) % W
    mask_l = (ww != 0).astype(jnp.float32)        # taps with kw == 0
    mask_r = (ww != W - 1).astype(jnp.float32)    # taps with kw == 2

    def conv3x3(cin, w_ref, b_ref):
        # im2col: 9 shifted (cin, HW) views stacked along the channel axis.
        pieces = []
        for kh in range(3):
            for kw in range(3):
                start = lpad + (kh - 1) * W + (kw - 1)
                tap = feat_ref[0:cin, start:start + HW]
                if kw == 0:
                    tap = tap * mask_l
                elif kw == 2:
                    tap = tap * mask_r
                pieces.append(tap)
        patches = jnp.concatenate(pieces, axis=0)                # (9*cin, HW)
        acc = jnp.dot(w_ref[...].astype(compute_dtype),
                      patches.astype(compute_dtype),
                      preferred_element_type=jnp.float32)        # (cout, HW)
        return acc + b_ref[...]                                  # bias (cout,1)

    lrelu = lambda t: jnp.where(t >= 0.0, t, 0.2 * t)

    # conv1..conv4: LeakyReLU then append to the dense feature stack
    # (this IS the torch.cat -- just a channel offset in the scratch).
    offs = nf
    for cin, w_ref, b_ref in ((nf,          w1_ref, b1_ref),
                              (nf + gc,     w2_ref, b2_ref),
                              (nf + 2 * gc, w3_ref, b3_ref),
                              (nf + 3 * gc, w4_ref, b4_ref)):
        y = lrelu(conv3x3(cin, w_ref, b_ref))                    # (gc, HW)
        feat_ref[offs:offs + gc, lpad:lpad + HW] = y
        offs += gc

    # conv5 (no activation) + residual fuse: x5 * 0.2 + x.
    y5 = conv3x3(nf + 4 * gc, w5_ref, b5_ref)                    # (nf, HW)
    out = y5 * 0.2 + feat_ref[0:nf, lpad:lpad + HW]
    o_ref[0] = out.astype(o_ref.dtype)


# ------------------------------ module wrapper --------------------------------
def residual_dense_block_5c(x_nchw, params, *, compute_dtype=jnp.float32):
    """Matches ResidualDenseBlock_5C.forward. Input/output are NCHW.

    params: list of 5 (w_hwio, b) with w_hwio shape (3, 3, Cin, Cout)."""
    N, nf, H, W = x_nchw.shape
    HW = H * W
    gc = params[0][0].shape[-1]
    c_total = nf + 4 * gc

    # Flat spatial layout: left pad rounded to a lane multiple (aligned
    # interior stores), right pad of W+1 absorbs the +1-row taps.
    lpad = -(-(W + 1) // 128) * 128
    width = lpad + HW + (W + 1)

    x_flat = x_nchw.reshape(N, nf, HW)            # free reshape, NCHW-natural

    # Pre-transpose weights once: (3,3,Cin,Cout) -> (Cout, 9*Cin); bias (Cout,1).
    w_mats, b_cols = [], []
    for (w_hwio, b) in params:
        cin, cout = w_hwio.shape[2], w_hwio.shape[3]
        w_mats.append(jnp.transpose(w_hwio.reshape(9 * cin, cout)))
        b_cols.append(b.reshape(cout, 1))

    kernel = functools.partial(_rdb5c_kernel, nf=nf, gc=gc, H=H, W=W,
                               lpad=lpad, compute_dtype=compute_dtype)

    def full_spec(shape):
        return pl.BlockSpec(shape, lambda n, _s=len(shape): (0,) * _s)

    in_specs = [pl.BlockSpec((1, nf, HW), lambda n: (n, 0, 0))]
    args = [x_flat]
    for w_m, b_c in zip(w_mats, b_cols):
        in_specs.append(full_spec(w_m.shape))
        in_specs.append(full_spec(b_c.shape))
        args.extend([w_m, b_c])

    out = pl.pallas_call(
        kernel,
        out_shape=jax.ShapeDtypeStruct((N, nf, HW), x_nchw.dtype),
        grid_spec=pltpu.PrefetchScalarGridSpec(
            num_scalar_prefetch=0,
            grid=(N,),
            in_specs=in_specs,
            out_specs=pl.BlockSpec((1, nf, HW), lambda n: (n, 0, 0)),
            scratch_shapes=[pltpu.VMEM((c_total, width), jnp.float32)],
        ),
        compiler_params=pltpu.CompilerParams(
            dimension_semantics=("parallel",),
            vmem_limit_bytes=64 << 20,
        ),
    )(*args)
    return out.reshape(N, nf, H, W)


# ----------------------------- parameter creation -----------------------------
def make_params(key, nf=16, gc=8, scale=0.1):
    """Deterministic kaiming_normal_(fan_in, a=0) * scale, zero bias.
    Weight layout HWIO: (3, 3, Cin, Cout)."""
    specs = [
        (nf, gc),             # conv1
        (nf + gc, gc),        # conv2
        (nf + 2 * gc, gc),    # conv3
        (nf + 3 * gc, gc),    # conv4
        (nf + 4 * gc, nf),    # conv5
    ]
    params = []
    keys = jax.random.split(key, len(specs))
    for k, (cin, cout) in zip(keys, specs):
        fan_in = cin * 3 * 3
        std = np.sqrt(2.0 / fan_in) * scale
        w = jax.random.normal(k, (3, 3, cin, cout), jnp.float32) * std
        b = jnp.zeros((cout,), jnp.float32)
        params.append((w, b))
    return params


# ----------------------------- pure-JAX reference ------------------------------
def _conv_ref(x_nchw, w_hwio, b):
    out = jax.lax.conv_general_dilated(
        x_nchw, w_hwio, window_strides=(1, 1), padding=((1, 1), (1, 1)),
        dimension_numbers=('NCHW', 'HWIO', 'NCHW'))
    return out + b.reshape(1, -1, 1, 1)


def _block_ref(x_nchw, params):
    lrelu = lambda t: jnp.where(t >= 0, t, 0.2 * t)
    (w1, b1), (w2, b2), (w3, b3), (w4, b4), (w5, b5) = params
    x = x_nchw
    x1 = lrelu(_conv_ref(x, w1, b1))
    x2 = lrelu(_conv_ref(jnp.concatenate([x, x1], 1), w2, b2))
    x3 = lrelu(_conv_ref(jnp.concatenate([x, x1, x2], 1), w3, b3))
    x4 = lrelu(_conv_ref(jnp.concatenate([x, x1, x2, x3], 1), w4, b4))
    x5 = _conv_ref(jnp.concatenate([x, x1, x2, x3, x4], 1), w5, b5)
    return x5 * 0.2 + x


# ------------------------------------- main ------------------------------------
if __name__ == "__main__":
    key = jax.random.PRNGKey(0)
    k_x, k_p = jax.random.split(key)

    N, NF, GC, H, W = 2, 16, 8, 16, 16
    x = jax.random.normal(k_x, (N, NF, H, W), jnp.float32)   # NCHW like PyTorch
    params = make_params(k_p, nf=NF, gc=GC, scale=0.1)

    out = jax.block_until_ready(residual_dense_block_5c(x, params))

    ref = jax.block_until_ready(_block_ref(x, params))
    np.testing.assert_allclose(np.asarray(out), np.asarray(ref),
                               rtol=1e-4, atol=1e-4)
    assert out.shape == x.shape and out.dtype == x.dtype

    print("KERNEL_OK")
</pallas_src>

<mosaic_0001>
module attributes {stable_mosaic.version = 11 : i64} {
  func.func @_rdb5c_kernel(%arg0: i32, %arg1: memref<1x16x256xf32, #tpu.memory_space<vmem>>, %arg2: memref<8x144xf32, #tpu.memory_space<vmem>>, %arg3: memref<8x1xf32, #tpu.memory_space<vmem>>, %arg4: memref<8x216xf32, #tpu.memory_space<vmem>>, %arg5: memref<8x1xf32, #tpu.memory_space<vmem>>, %arg6: memref<8x288xf32, #tpu.memory_space<vmem>>, %arg7: memref<8x1xf32, #tpu.memory_space<vmem>>, %arg8: memref<8x360xf32, #tpu.memory_space<vmem>>, %arg9: memref<8x1xf32, #tpu.memory_space<vmem>>, %arg10: memref<16x432xf32, #tpu.memory_space<vmem>>, %arg11: memref<16x1xf32, #tpu.memory_space<vmem>>, %arg12: memref<1x16x256xf32, #tpu.memory_space<vmem>>, %arg13: memref<48x401xf32, #tpu.memory_space<vmem>>) attributes {dimension_semantics = [#tpu.dimension_semantics<parallel>], iteration_bounds = array<i64: 2>, scalar_prefetch = 0 : i64, scratch_operands = 1 : i64, tpu.core_type = #tpu.core_type<tc>, window_params = [{transform_indices = @transform_0, window_bounds = array<i64: 1, 16, 256>}, {pipeline_mode = #tpu.pipeline_mode<synchronous>, transform_indices = @transform_1, window_bounds = array<i64: 8, 144>}, {pipeline_mode = #tpu.pipeline_mode<synchronous>, transform_indices = @transform_2, window_bounds = array<i64: 8, 1>}, {pipeline_mode = #tpu.pipeline_mode<synchronous>, transform_indices = @transform_3, window_bounds = array<i64: 8, 216>}, {pipeline_mode = #tpu.pipeline_mode<synchronous>, transform_indices = @transform_4, window_bounds = array<i64: 8, 1>}, {pipeline_mode = #tpu.pipeline_mode<synchronous>, transform_indices = @transform_5, window_bounds = array<i64: 8, 288>}, {pipeline_mode = #tpu.pipeline_mode<synchronous>, transform_indices = @transform_6, window_bounds = array<i64: 8, 1>}, {pipeline_mode = #tpu.pipeline_mode<synchronous>, transform_indices = @transform_7, window_bounds = array<i64: 8, 360>}, {pipeline_mode = #tpu.pipeline_mode<synchronous>, transform_indices = @transform_8, window_bounds = array<i64: 8, 1>}, {pipeline_mode = #tpu.pipeline_mode<synchronous>, transform_indices = @transform_9, window_bounds = array<i64: 16, 432>}, {pipeline_mode = #tpu.pipeline_mode<synchronous>, transform_indices = @transform_10, window_bounds = array<i64: 16, 1>}, {transform_indices = @transform_11, window_bounds = array<i64: 1, 16, 256>}]} {
    %cst = arith.constant 0.000000e+00 : f32
    %0 = vector.broadcast %cst : f32 to vector<48x401xf32>
    %c0 = arith.constant 0 : index
    %c0_0 = arith.constant 0 : index
    %1 = vector.load %arg13[%c0, %c0_0] : memref<48x401xf32, #tpu.memory_space<vmem>>, vector<48x401xf32>
    tpu.vector_store %arg13[%c0, %c0_0], %0 {strides = array<i32>} : memref<48x401xf32, #tpu.memory_space<vmem>>, vector<48x401xf32>,
    %c0_1 = arith.constant 0 : index
    %c0_2 = arith.constant 0 : index
    %c0_3 = arith.constant 0 : index
    %2 = vector.load %arg1[%c0_1, %c0_2, %c0_3] : memref<1x16x256xf32, #tpu.memory_space<vmem>>, vector<1x16x256xf32>
    %3 = vector.shape_cast %2 : vector<1x16x256xf32> to vector<16x256xf32>
    %c0_4 = arith.constant 0 : index
    %c128 = arith.constant 128 : index
    %4 = vector.load %arg13[%c0_4, %c128] : memref<48x401xf32, #tpu.memory_space<vmem>>, vector<16x256xf32>
    tpu.vector_store %arg13[%c0_4, %c128], %3 {strides = array<i32>} : memref<48x401xf32, #tpu.memory_space<vmem>>, vector<16x256xf32>,
    %5 = tpu.iota {dimensions = array<i32: 1>} : vector<1x256xi32>
    %c16_i32 = arith.constant 16 : i32
    %c0_i32 = arith.constant 0 : i32
    %6 = arith.cmpi eq, %c16_i32, %c0_i32 : i32
    %c1_i32 = arith.constant 1 : i32
    %7 = arith.select %6, %c1_i32, %c16_i32 : i32
    %8 = vector.broadcast %7 : i32 to vector<1x256xi32>
    %9 = arith.remsi %5, %8 : vector<1x256xi32>
    %c0_i32_5 = arith.constant 0 : i32
    %10 = vector.broadcast %c0_i32_5 : i32 to vector<1x256xi32>
    %11 = arith.cmpi ne, %9, %10 : vector<1x256xi32>
    %c0_i32_6 = arith.constant 0 : i32
    %12 = vector.broadcast %c0_i32_6 : i32 to vector<1x256xi32>
    %13 = arith.cmpi slt, %9, %12 : vector<1x256xi32>
    %c0_i32_7 = arith.constant 0 : i32
    %14 = arith.cmpi slt, %7, %c0_i32_7 : i32
    %15 = vector.broadcast %14 : i1 to vector<1x256xi1>
    %16 = vector.broadcast %15 : vector<1x256xi1> to vector<1x256xi1>
    %17 = arith.xori %13, %16 : vector<1x256xi1>
    %18 = arith.andi %17, %11 : vector<1x256xi1>
    %19 = vector.broadcast %7 : i32 to vector<1x256xi32>
    %20 = arith.addi %9, %19 : vector<1x256xi32>
    %21 = arith.select %18, %20, %9 : vector<1x256xi1>, vector<1x256xi32>
    %c0_i32_8 = arith.constant 0 : i32
    %22 = vector.broadcast %c0_i32_8 : i32 to vector<1x256xi32>
    %23 = arith.cmpi ne, %21, %22 : vector<1x256xi32>
    %24 = arith.extui %23 : vector<1x256xi1> to vector<1x256xi32>
    %25 = arith.sitofp %24 : vector<1x256xi32> to vector<1x256xf32>
    %c15_i32 = arith.constant 15 : i32
    %26 = vector.broadcast %c15_i32 : i32 to vector<1x256xi32>
    %27 = arith.cmpi ne, %21, %26 : vector<1x256xi32>
    %28 = arith.extui %27 : vector<1x256xi1> to vector<1x256xi32>
    %29 = arith.sitofp %28 : vector<1x256xi32> to vector<1x256xf32>
    %c0_9 = arith.constant 0 : index
    %c111 = arith.constant 111 : index
    %30 = vector.load %arg13[%c0_9, %c111] : memref<48x401xf32, #tpu.memory_space<vmem>>, vector<16x256xf32>
    %31 = vector.broadcast %25 : vector<1x256xf32> to vector<16x256xf32>
    %32 = arith.mulf %30, %31 : vector<16x256xf32>
    %c0_10 = arith.constant 0 : index
    %c112 = arith.constant 112 : index
    %33 = vector.load %arg13[%c0_10, %c112] : memref<48x401xf32, #tpu.memory_space<vmem>>, vector<16x256xf32>
    %c0_11 = arith.constant 0 : index
    %c113 = arith.constant 113 : index
    %34 = vector.load %arg13[%c0_11, %c113] : memref<48x401xf32, #tpu.memory_space<vmem>>, vector<16x256xf32>
    %35 = vector.broadcast %29 : vector<1x256xf32> to vector<16x256xf32>
    %36 = arith.mulf %34, %35 : vector<16x256xf32>
    %c0_12 = arith.constant 0 : index
    %c127 = arith.constant 127 : index
    %37 = vector.load %arg13[%c0_12, %c127] : memref<48x401xf32, #tpu.memory_space<vmem>>, vector<16x256xf32>
    %38 = vector.broadcast %25 : vector<1x256xf32> to vector<16x256xf32>
    %39 = arith.mulf %37, %38 : vector<16x256xf32>
    %c0_13 = arith.constant 0 : index
    %c128_14 = arith.constant 128 : index
    %40 = vector.load %arg13[%c0_13, %c128_14] : memref<48x401xf32, #tpu.memory_space<vmem>>, vector<16x256xf32>
    %c0_15 = arith.constant 0 : index
    %c129 = arith.constant 129 : index
    %41 = vector.load %arg13[%c0_15, %c129] : memref<48x401xf32, #tpu.memory_space<vmem>>, vector<16x256xf32>
    %42 = vector.broadcast %29 : vector<1x256xf32> to vector<16x256xf32>
    %43 = arith.mulf %41, %42 : vector<16x256xf32>
    %c0_16 = arith.constant 0 : index
    %c143 = arith.constant 143 : index
    %44 = vector.load %arg13[%c0_16, %c143] : memref<48x401xf32, #tpu.memory_space<vmem>>, vector<16x256xf32>
    %45 = vector.broadcast %25 : vector<1x256xf32> to vector<16x256xf32>
    %46 = arith.mulf %44, %45 : vector<16x256xf32>
    %c0_17 = arith.constant 0 : index
    %c144 = arith.constant 144 : index
    %47 = vector.load %arg13[%c0_17, %c144] : memref<48x401xf32, #tpu.memory_space<vmem>>, vector<16x256xf32>
    %c0_18 = arith.constant 0 : index
    %c145 = arith.constant 145 : index
    %48 = vector.load %arg13[%c0_18, %c145] : memref<48x401xf32, #tpu.memory_space<vmem>>, vector<16x256xf32>
    %49 = vector.broadcast %29 : vector<1x256xf32> to vector<16x256xf32>
    %50 = arith.mulf %48, %49 : vector<16x256xf32>
    %51 = tpu.concatenate %32, %33, %36, %39, %40, %43, %46, %47, %50 in 0 : vector<16x256xf32>, vector<16x256xf32>, vector<16x256xf32>, vector<16x256xf32>, vector<16x256xf32>, vector<16x256xf32>, vector<16x256xf32>, vector<16x256xf32>, vector<16x256xf32> -> vector<144x256xf32>
    %c0_19 = arith.constant 0 : index
    %c0_20 = arith.constant 0 : index
    %52 = vector.load %arg2[%c0_19, %c0_20] : memref<8x144xf32, #tpu.memory_space<vmem>>, vector<8x144xf32>
    %cst_21 = arith.constant dense<0.000000e+00> : vector<8x256xf32>
    %53 = tpu.matmul %52, %51, %cst_21 {dimension_numbers = #tpu.dot_dimension_numbers<[1], [0], [0], [1], [0, 0, 1, 1], [], []>} : vector<8x144xf32>, vector<144x256xf32>, vector<8x256xf32> -> vector<8x256xf32>
    %c0_22 = arith.constant 0 : index
    %c0_23 = arith.constant 0 : index
    %54 = vector.load %arg3[%c0_22, %c0_23] : memref<8x1xf32, #tpu.memory_space<vmem>>, vector<8x1xf32>
    %55 = vector.broadcast %54 : vector<8x1xf32> to vector<8x256xf32>
    %56 = arith.addf %53, %55 : vector<8x256xf32>
    %cst_24 = arith.constant 0.000000e+00 : f32
    %57 = vector.broadcast %cst_24 : f32 to vector<8x256xf32>
    %58 = arith.cmpf oge, %56, %57 : vector<8x256xf32>
    %cst_25 = arith.constant 2.000000e-01 : f32
    %59 = vector.broadcast %cst_25 : f32 to vector<8x256xf32>
    %60 = arith.mulf %59, %56 : vector<8x256xf32>
    %61 = arith.select %58, %56, %60 : vector<8x256xi1>, vector<8x256xf32>
    %c16 = arith.constant 16 : index
    %c128_26 = arith.constant 128 : index
    %62 = vector.load %arg13[%c16, %c128_26] : memref<48x401xf32, #tpu.memory_space<vmem>>, vector<8x256xf32>
    tpu.vector_store %arg13[%c16, %c128_26], %61 {strides = array<i32>} : memref<48x401xf32, #tpu.memory_space<vmem>>, vector<8x256xf32>,
    %c0_27 = arith.constant 0 : index
    %c111_28 = arith.constant 111 : index
    %63 = vector.load %arg13[%c0_27, %c111_28] : memref<48x401xf32, #tpu.memory_space<vmem>>, vector<24x256xf32>
    %64 = vector.broadcast %25 : vector<1x256xf32> to vector<24x256xf32>
    %65 = arith.mulf %63, %64 : vector<24x256xf32>
    %c0_29 = arith.constant 0 : index
    %c112_30 = arith.constant 112 : index
    %66 = vector.load %arg13[%c0_29, %c112_30] : memref<48x401xf32, #tpu.memory_space<vmem>>, vector<24x256xf32>
    %c0_31 = arith.constant 0 : index
    %c113_32 = arith.constant 113 : index
    %67 = vector.load %arg13[%c0_31, %c113_32] : memref<48x401xf32, #tpu.memory_space<vmem>>, vector<24x256xf32>
    %68 = vector.broadcast %29 : vector<1x256xf32> to vector<24x256xf32>
    %69 = arith.mulf %67, %68 : vector<24x256xf32>
    %c0_33 = arith.constant 0 : index
    %c127_34 = arith.constant 127 : index
    %70 = vector.load %arg13[%c0_33, %c127_34] : memref<48x401xf32, #tpu.memory_space<vmem>>, vector<24x256xf32>
    %71 = vector.broadcast %25 : vector<1x256xf32> to vector<24x256xf32>
    %72 = arith.mulf %70, %71 : vector<24x256xf32>
    %c0_35 = arith.constant 0 : index
    %c128_36 = arith.constant 128 : index
    %73 = vector.load %arg13[%c0_35, %c128_36] : memref<48x401xf32, #tpu.memory_space<vmem>>, vector<24x256xf32>
    %c0_37 = arith.constant 0 : index
    %c129_38 = arith.constant 129 : index
    %74 = vector.load %arg13[%c0_37, %c129_38] : memref<48x401xf32, #tpu.memory_space<vmem>>, vector<24x256xf32>
    %75 = vector.broadcast %29 : vector<1x256xf32> to vector<24x256xf32>
    %76 = arith.mulf %74, %75 : vector<24x256xf32>
    %c0_39 = arith.constant 0 : index
    %c143_40 = arith.constant 143 : index
    %77 = vector.load %arg13[%c0_39, %c143_40] : memref<48x401xf32, #tpu.memory_space<vmem>>, vector<24x256xf32>
    %78 = vector.broadcast %25 : vector<1x256xf32> to vector<24x256xf32>
    %79 = arith.mulf %77, %78 : vector<24x256xf32>
    %c0_41 = arith.constant 0 : index
    %c144_42 = arith.constant 144 : index
    %80 = vector.load %arg13[%c0_41, %c144_42] : memref<48x401xf32, #tpu.memory_space<vmem>>, vector<24x256xf32>
    %c0_43 = arith.constant 0 : index
    %c145_44 = arith.constant 145 : index
    %81 = vector.load %arg13[%c0_43, %c145_44] : memref<48x401xf32, #tpu.memory_space<vmem>>, vector<24x256xf32>
    %82 = vector.broadcast %29 : vector<1x256xf32> to vector<24x256xf32>
    %83 = arith.mulf %81, %82 : vector<24x256xf32>
    %84 = tpu.concatenate %65, %66, %69, %72, %73, %76, %79, %80, %83 in 0 : vector<24x256xf32>, vector<24x256xf32>, vector<24x256xf32>, vector<24x256xf32>, vector<24x256xf32>, vector<24x256xf32>, vector<24x256xf32>, vector<24x256xf32>, vector<24x256xf32> -> vector<216x256xf32>
    %c0_45 = arith.constant 0 : index
    %c0_46 = arith.constant 0 : index
    %85 = vector.load %arg4[%c0_45, %c0_46] : memref<8x216xf32, #tpu.memory_space<vmem>>, vector<8x216xf32>
    %cst_47 = arith.constant dense<0.000000e+00> : vector<8x256xf32>
    %86 = tpu.matmul %85, %84, %cst_47 {dimension_numbers = #tpu.dot_dimension_numbers<[1], [0], [0], [1], [0, 0, 1, 1], [], []>} : vector<8x216xf32>, vector<216x256xf32>, vector<8x256xf32> -> vector<8x256xf32>
    %c0_48 = arith.constant 0 : index
    %c0_49 = arith.constant 0 : index
    %87 = vector.load %arg5[%c0_48, %c0_49] : memref<8x1xf32, #tpu.memory_space<vmem>>, vector<8x1xf32>
    %88 = vector.broadcast %87 : vector<8x1xf32> to vector<8x256xf32>
    %89 = arith.addf %86, %88 : vector<8x256xf32>
    %cst_50 = arith.constant 0.000000e+00 : f32
    %90 = vector.broadcast %cst_50 : f32 to vector<8x256xf32>
    %91 = arith.cmpf oge, %89, %90 : vector<8x256xf32>
    %cst_51 = arith.constant 2.000000e-01 : f32
    %92 = vector.broadcast %cst_51 : f32 to vector<8x256xf32>
    %93 = arith.mulf %92, %89 : vector<8x256xf32>
    %94 = arith.select %91, %89, %93 : vector<8x256xi1>, vector<8x256xf32>
    %c24 = arith.constant 24 : index
    %c128_52 = arith.constant 128 : index
    %95 = vector.load %arg13[%c24, %c128_52] : memref<48x401xf32, #tpu.memory_space<vmem>>, vector<8x256xf32>
    tpu.vector_store %arg13[%c24, %c128_52], %94 {strides = array<i32>} : memref<48x401xf32, #tpu.memory_space<vmem>>, vector<8x256xf32>,
    %c0_53 = arith.constant 0 : index
    %c111_54 = arith.constant 111 : index
    %96 = vector.load %arg13[%c0_53, %c111_54] : memref<48x401xf32, #tpu.memory_space<vmem>>, vector<32x256xf32>
    %97 = vector.broadcast %25 : vector<1x256xf32> to vector<32x256xf32>
    %98 = arith.mulf %96, %97 : vector<32x256xf32>
    %c0_55 = arith.constant 0 : index
    %c112_56 = arith.constant 112 : index
    %99 = vector.load %arg13[%c0_55, %c112_56] : memref<48x401xf32, #tpu.memory_space<vmem>>, vector<32x256xf32>
    %c0_57 = arith.constant 0 : index
    %c113_58 = arith.constant 113 : index
    %100 = vector.load %arg13[%c0_57, %c113_58] : memref<48x401xf32, #tpu.memory_space<vmem>>, vector<32x256xf32>
    %101 = vector.broadcast %29 : vector<1x256xf32> to vector<32x256xf32>
    %102 = arith.mulf %100, %101 : vector<32x256xf32>
    %c0_59 = arith.constant 0 : index
    %c127_60 = arith.constant 127 : index
    %103 = vector.load %arg13[%c0_59, %c127_60] : memref<48x401xf32, #tpu.memory_space<vmem>>, vector<32x256xf32>
    %104 = vector.broadcast %25 : vector<1x256xf32> to vector<32x256xf32>
    %105 = arith.mulf %103, %104 : vector<32x256xf32>
    %c0_61 = arith.constant 0 : index
    %c128_62 = arith.constant 128 : index
    %106 = vector.load %arg13[%c0_61, %c128_62] : memref<48x401xf32, #tpu.memory_space<vmem>>, vector<32x256xf32>
    %c0_63 = arith.constant 0 : index
    %c129_64 = arith.constant 129 : index
    %107 = vector.load %arg13[%c0_63, %c129_64] : memref<48x401xf32, #tpu.memory_space<vmem>>, vector<32x256xf32>
    %108 = vector.broadcast %29 : vector<1x256xf32> to vector<32x256xf32>
    %109 = arith.mulf %107, %108 : vector<32x256xf32>
    %c0_65 = arith.constant 0 : index
    %c143_66 = arith.constant 143 : index
    %110 = vector.load %arg13[%c0_65, %c143_66] : memref<48x401xf32, #tpu.memory_space<vmem>>, vector<32x256xf32>
    %111 = vector.broadcast %25 : vector<1x256xf32> to vector<32x256xf32>
    %112 = arith.mulf %110, %111 : vector<32x256xf32>
    %c0_67 = arith.constant 0 : index
    %c144_68 = arith.constant 144 : index
    %113 = vector.load %arg13[%c0_67, %c144_68] : memref<48x401xf32, #tpu.memory_space<vmem>>, vector<32x256xf32>
    %c0_69 = arith.constant 0 : index
    %c145_70 = arith.constant 145 : index
    %114 = vector.load %arg13[%c0_69, %c145_70] : memref<48x401xf32, #tpu.memory_space<vmem>>, vector<32x256xf32>
    %115 = vector.broadcast %29 : vector<1x256xf32> to vector<32x256xf32>
    %116 = arith.mulf %114, %115 : vector<32x256xf32>
    %117 = tpu.concatenate %98, %99, %102, %105, %106, %109, %112, %113, %116 in 0 : vector<32x256xf32>, vector<32x256xf32>, vector<32x256xf32>, vector<32x256xf32>, vector<32x256xf32>, vector<32x256xf32>, vector<32x256xf32>, vector<32x256xf32>, vector<32x256xf32> -> vector<288x256xf32>
    %c0_71 = arith.constant 0 : index
    %c0_72 = arith.constant 0 : index
    %118 = vector.load %arg6[%c0_71, %c0_72] : memref<8x288xf32, #tpu.memory_space<vmem>>, vector<8x288xf32>
    %cst_73 = arith.constant dense<0.000000e+00> : vector<8x256xf32>
    %119 = tpu.matmul %118, %117, %cst_73 {dimension_numbers = #tpu.dot_dimension_numbers<[1], [0], [0], [1], [0, 0, 1, 1], [], []>} : vector<8x288xf32>, vector<288x256xf32>, vector<8x256xf32> -> vector<8x256xf32>
    %c0_74 = arith.constant 0 : index
    %c0_75 = arith.constant 0 : index
    %120 = vector.load %arg7[%c0_74, %c0_75] : memref<8x1xf32, #tpu.memory_space<vmem>>, vector<8x1xf32>
    %121 = vector.broadcast %120 : vector<8x1xf32> to vector<8x256xf32>
    %122 = arith.addf %119, %121 : vector<8x256xf32>
    %cst_76 = arith.constant 0.000000e+00 : f32
    %123 = vector.broadcast %cst_76 : f32 to vector<8x256xf32>
    %124 = arith.cmpf oge, %122, %123 : vector<8x256xf32>
    %cst_77 = arith.constant 2.000000e-01 : f32
    %125 = vector.broadcast %cst_77 : f32 to vector<8x256xf32>
    %126 = arith.mulf %125, %122 : vector<8x256xf32>
    %127 = arith.select %124, %122, %126 : vector<8x256xi1>, vector<8x256xf32>
    %c32 = arith.constant 32 : index
    %c128_78 = arith.constant 128 : index
    %128 = vector.load %arg13[%c32, %c128_78] : memref<48x401xf32, #tpu.memory_space<vmem>>, vector<8x256xf32>
    tpu.vector_store %arg13[%c32, %c128_78], %127 {strides = array<i32>} : memref<48x401xf32, #tpu.memory_space<vmem>>, vector<8x256xf32>,
    %c0_79 = arith.constant 0 : index
    %c111_80 = arith.constant 111 : index
    %129 = vector.load %arg13[%c0_79, %c111_80] : memref<48x401xf32, #tpu.memory_space<vmem>>, vector<40x256xf32>
    %130 = vector.broadcast %25 : vector<1x256xf32> to vector<40x256xf32>
    %131 = arith.mulf %129, %130 : vector<40x256xf32>
    %c0_81 = arith.constant 0 : index
    %c112_82 = arith.constant 112 : index
    %132 = vector.load %arg13[%c0_81, %c112_82] : memref<48x401xf32, #tpu.memory_space<vmem>>, vector<40x256xf32>
    %c0_83 = arith.constant 0 : index
    %c113_84 = arith.constant 113 : index
    %133 = vector.load %arg13[%c0_83, %c113_84] : memref<48x401xf32, #tpu.memory_space<vmem>>, vector<40x256xf32>
    %134 = vector.broadcast %29 : vector<1x256xf32> to vector<40x256xf32>
    %135 = arith.mulf %133, %134 : vector<40x256xf32>
    %c0_85 = arith.constant 0 : index
    %c127_86 = arith.constant 127 : index
    %136 = vector.load %arg13[%c0_85, %c127_86] : memref<48x401xf32, #tpu.memory_space<vmem>>, vector<40x256xf32>
    %137 = vector.broadcast %25 : vector<1x256xf32> to vector<40x256xf32>
    %138 = arith.mulf %136, %137 : vector<40x256xf32>
    %c0_87 = arith.constant 0 : index
    %c128_88 = arith.constant 128 : index
    %139 = vector.load %arg13[%c0_87, %c128_88] : memref<48x401xf32, #tpu.memory_space<vmem>>, vector<40x256xf32>
    %c0_89 = arith.constant 0 : index
    %c129_90 = arith.constant 129 : index
    %140 = vector.load %arg13[%c0_89, %c129_90] : memref<48x401xf32, #tpu.memory_space<vmem>>, vector<40x256xf32>
    %141 = vector.broadcast %29 : vector<1x256xf32> to vector<40x256xf32>
    %142 = arith.mulf %140, %141 : vector<40x256xf32>
    %c0_91 = arith.constant 0 : index
    %c143_92 = arith.constant 143 : index
    %143 = vector.load %arg13[%c0_91, %c143_92] : memref<48x401xf32, #tpu.memory_space<vmem>>, vector<40x256xf32>
    %144 = vector.broadcast %25 : vector<1x256xf32> to vector<40x256xf32>
    %145 = arith.mulf %143, %144 : vector<40x256xf32>
    %c0_93 = arith.constant 0 : index
    %c144_94 = arith.constant 144 : index
    %146 = vector.load %arg13[%c0_93, %c144_94] : memref<48x401xf32, #tpu.memory_space<vmem>>, vector<40x256xf32>
    %c0_95 = arith.constant 0 : index
    %c145_96 = arith.constant 145 : index
    %147 = vector.load %arg13[%c0_95, %c145_96] : memref<48x401xf32, #tpu.memory_space<vmem>>, vector<40x256xf32>
    %148 = vector.broadcast %29 : vector<1x256xf32> to vector<40x256xf32>
    %149 = arith.mulf %147, %148 : vector<40x256xf32>
    %150 = tpu.concatenate %131, %132, %135, %138, %139, %142, %145, %146, %149 in 0 : vector<40x256xf32>, vector<40x256xf32>, vector<40x256xf32>, vector<40x256xf32>, vector<40x256xf32>, vector<40x256xf32>, vector<40x256xf32>, vector<40x256xf32>, vector<40x256xf32> -> vector<360x256xf32>
    %c0_97 = arith.constant 0 : index
    %c0_98 = arith.constant 0 : index
    %151 = vector.load %arg8[%c0_97, %c0_98] : memref<8x360xf32, #tpu.memory_space<vmem>>, vector<8x360xf32>
    %cst_99 = arith.constant dense<0.000000e+00> : vector<8x256xf32>
    %152 = tpu.matmul %151, %150, %cst_99 {dimension_numbers = #tpu.dot_dimension_numbers<[1], [0], [0], [1], [0, 0, 1, 1], [], []>} : vector<8x360xf32>, vector<360x256xf32>, vector<8x256xf32> -> vector<8x256xf32>
    %c0_100 = arith.constant 0 : index
    %c0_101 = arith.constant 0 : index
    %153 = vector.load %arg9[%c0_100, %c0_101] : memref<8x1xf32, #tpu.memory_space<vmem>>, vector<8x1xf32>
    %154 = vector.broadcast %153 : vector<8x1xf32> to vector<8x256xf32>
    %155 = arith.addf %152, %154 : vector<8x256xf32>
    %cst_102 = arith.constant 0.000000e+00 : f32
    %156 = vector.broadcast %cst_102 : f32 to vector<8x256xf32>
    %157 = arith.cmpf oge, %155, %156 : vector<8x256xf32>
    %cst_103 = arith.constant 2.000000e-01 : f32
    %158 = vector.broadcast %cst_103 : f32 to vector<8x256xf32>
    %159 = arith.mulf %158, %155 : vector<8x256xf32>
    %160 = arith.select %157, %155, %159 : vector<8x256xi1>, vector<8x256xf32>
    %c40 = arith.constant 40 : index
    %c128_104 = arith.constant 128 : index
    %161 = vector.load %arg13[%c40, %c128_104] : memref<48x401xf32, #tpu.memory_space<vmem>>, vector<8x256xf32>
    tpu.vector_store %arg13[%c40, %c128_104], %160 {strides = array<i32>} : memref<48x401xf32, #tpu.memory_space<vmem>>, vector<8x256xf32>,
    %c0_105 = arith.constant 0 : index
    %c111_106 = arith.constant 111 : index
    %162 = vector.load %arg13[%c0_105, %c111_106] : memref<48x401xf32, #tpu.memory_space<vmem>>, vector<48x256xf32>
    %163 = vector.broadcast %25 : vector<1x256xf32> to vector<48x256xf32>
    %164 = arith.mulf %162, %163 : vector<48x256xf32>
    %c0_107 = arith.constant 0 : index
    %c112_108 = arith.constant 112 : index
    %165 = vector.load %arg13[%c0_107, %c112_108] : memref<48x401xf32, #tpu.memory_space<vmem>>, vector<48x256xf32>
    %c0_109 = arith.constant 0 : index
    %c113_110 = arith.constant 113 : index
    %166 = vector.load %arg13[%c0_109, %c113_110] : memref<48x401xf32, #tpu.memory_space<vmem>>, vector<48x256xf32>
    %167 = vector.broadcast %29 : vector<1x256xf32> to vector<48x256xf32>
    %168 = arith.mulf %166, %167 : vector<48x256xf32>
    %c0_111 = arith.constant 0 : index
    %c127_112 = arith.constant 127 : index
    %169 = vector.load %arg13[%c0_111, %c127_112] : memref<48x401xf32, #tpu.memory_space<vmem>>, vector<48x256xf32>
    %170 = vector.broadcast %25 : vector<1x256xf32> to vector<48x256xf32>
    %171 = arith.mulf %169, %170 : vector<48x256xf32>
    %c0_113 = arith.constant 0 : index
    %c128_114 = arith.constant 128 : index
    %172 = vector.load %arg13[%c0_113, %c128_114] : memref<48x401xf32, #tpu.memory_space<vmem>>, vector<48x256xf32>
    %c0_115 = arith.constant 0 : index
    %c129_116 = arith.constant 129 : index
    %173 = vector.load %arg13[%c0_115, %c129_116] : memref<48x401xf32, #tpu.memory_space<vmem>>, vector<48x256xf32>
    %174 = vector.broadcast %29 : vector<1x256xf32> to vector<48x256xf32>
    %175 = arith.mulf %173, %174 : vector<48x256xf32>
    %c0_117 = arith.constant 0 : index
    %c143_118 = arith.constant 143 : index
    %176 = vector.load %arg13[%c0_117, %c143_118] : memref<48x401xf32, #tpu.memory_space<vmem>>, vector<48x256xf32>
    %177 = vector.broadcast %25 : vector<1x256xf32> to vector<48x256xf32>
    %178 = arith.mulf %176, %177 : vector<48x256xf32>
    %c0_119 = arith.constant 0 : index
    %c144_120 = arith.constant 144 : index
    %179 = vector.load %arg13[%c0_119, %c144_120] : memref<48x401xf32, #tpu.memory_space<vmem>>, vector<48x256xf32>
    %c0_121 = arith.constant 0 : index
    %c145_122 = arith.constant 145 : index
    %180 = vector.load %arg13[%c0_121, %c145_122] : memref<48x401xf32, #tpu.memory_space<vmem>>, vector<48x256xf32>
    %181 = vector.broadcast %29 : vector<1x256xf32> to vector<48x256xf32>
    %182 = arith.mulf %180, %181 : vector<48x256xf32>
    %183 = tpu.concatenate %164, %165, %168, %171, %172, %175, %178, %179, %182 in 0 : vector<48x256xf32>, vector<48x256xf32>, vector<48x256xf32>, vector<48x256xf32>, vector<48x256xf32>, vector<48x256xf32>, vector<48x256xf32>, vector<48x256xf32>, vector<48x256xf32> -> vector<432x256xf32>
    %c0_123 = arith.constant 0 : index
    %c0_124 = arith.constant 0 : index
    %184 = vector.load %arg10[%c0_123, %c0_124] : memref<16x432xf32, #tpu.memory_space<vmem>>, vector<16x432xf32>
    %cst_125 = arith.constant dense<0.000000e+00> : vector<16x256xf32>
    %185 = tpu.matmul %184, %183, %cst_125 {dimension_numbers = #tpu.dot_dimension_numbers<[1], [0], [0], [1], [0, 0, 1, 1], [], []>} : vector<16x432xf32>, vector<432x256xf32>, vector<16x256xf32> -> vector<16x256xf32>
    %c0_126 = arith.constant 0 : index
    %c0_127 = arith.constant 0 : index
    %186 = vector.load %arg11[%c0_126, %c0_127] : memref<16x1xf32, #tpu.memory_space<vmem>>, vector<16x1xf32>
    %187 = vector.broadcast %186 : vector<16x1xf32> to vector<16x256xf32>
    %188 = arith.addf %185, %187 : vector<16x256xf32>
    %cst_128 = arith.constant 2.000000e-01 : f32
    %189 = vector.broadcast %cst_128 : f32 to vector<16x256xf32>
    %190 = arith.mulf %188, %189 : vector<16x256xf32>
    %c0_129 = arith.constant 0 : index
    %c128_130 = arith.constant 128 : index
    %191 = vector.load %arg13[%c0_129, %c128_130] : memref<48x401xf32, #tpu.memory_space<vmem>>, vector<16x256xf32>
    %192 = arith.addf %190, %191 : vector<16x256xf32>
    %c0_131 = arith.constant 0 : index
    %c0_132 = arith.constant 0 : index
    %c0_133 = arith.constant 0 : index
    %193 = vector.load %arg12[%c0_131, %c0_132, %c0_133] : memref<1x16x256xf32, #tpu.memory_space<vmem>>, vector<1x16x256xf32>
    %194 = vector.shape_cast %193 : vector<1x16x256xf32> to vector<16x256xf32>
    %195 = vector.shape_cast %192 : vector<16x256xf32> to vector<1x16x256xf32>
    tpu.vector_store %arg12[%c0_131, %c0_132, %c0_133], %195 {strides = array<i32>} : memref<1x16x256xf32, #tpu.memory_space<vmem>>, vector<1x16x256xf32>,
    return
  }
  func.func @transform_0(%arg0: i32) -> (i32, i32, i32) {
    %c0_i32 = arith.constant 0 : i32
    %c0_i32_0 = arith.constant 0 : i32
    %c0_i32_1 = arith.constant 0 : i32
    return %arg0, %c0_i32, %c0_i32_0 : i32, i32, i32
  }
  func.func @transform_1(%arg0: i32) -> (i32, i32) {
    %c0_i32 = arith.constant 0 : i32
    %c0_i32_0 = arith.constant 0 : i32
    %c0_i32_1 = arith.constant 0 : i32
    return %c0_i32, %c0_i32_0 : i32, i32
  }
  func.func @transform_2(%arg0: i32) -> (i32, i32) {
    %c0_i32 = arith.constant 0 : i32
    %c0_i32_0 = arith.constant 0 : i32
    %c0_i32_1 = arith.constant 0 : i32
    return %c0_i32, %c0_i32_0 : i32, i32
  }
  func.func @transform_3(%arg0: i32) -> (i32, i32) {
    %c0_i32 = arith.constant 0 : i32
    %c0_i32_0 = arith.constant 0 : i32
    %c0_i32_1 = arith.constant 0 : i32
    return %c0_i32, %c0_i32_0 : i32, i32
  }
  func.func @transform_4(%arg0: i32) -> (i32, i32) {
    %c0_i32 = arith.constant 0 : i32
    %c0_i32_0 = arith.constant 0 : i32
    %c0_i32_1 = arith.constant 0 : i32
    return %c0_i32, %c0_i32_0 : i32, i32
  }
  func.func @transform_5(%arg0: i32) -> (i32, i32) {
    %c0_i32 = arith.constant 0 : i32
    %c0_i32_0 = arith.constant 0 : i32
    %c0_i32_1 = arith.constant 0 : i32
    return %c0_i32, %c0_i32_0 : i32, i32
  }
  func.func @transform_6(%arg0: i32) -> (i32, i32) {
    %c0_i32 = arith.constant 0 : i32
    %c0_i32_0 = arith.constant 0 : i32
    %c0_i32_1 = arith.constant 0 : i32
    return %c0_i32, %c0_i32_0 : i32, i32
  }
  func.func @transform_7(%arg0: i32) -> (i32, i32) {
    %c0_i32 = arith.constant 0 : i32
    %c0_i32_0 = arith.constant 0 : i32
    %c0_i32_1 = arith.constant 0 : i32
    return %c0_i32, %c0_i32_0 : i32, i32
  }
  func.func @transform_8(%arg0: i32) -> (i32, i32) {
    %c0_i32 = arith.constant 0 : i32
    %c0_i32_0 = arith.constant 0 : i32
    %c0_i32_1 = arith.constant 0 : i32
    return %c0_i32, %c0_i32_0 : i32, i32
  }
  func.func @transform_9(%arg0: i32) -> (i32, i32) {
    %c0_i32 = arith.constant 0 : i32
    %c0_i32_0 = arith.constant 0 : i32
    %c0_i32_1 = arith.constant 0 : i32
    return %c0_i32, %c0_i32_0 : i32, i32
  }
  func.func @transform_10(%arg0: i32) -> (i32, i32) {
    %c0_i32 = arith.constant 0 : i32
    %c0_i32_0 = arith.constant 0 : i32
    %c0_i32_1 = arith.constant 0 : i32
    return %c0_i32, %c0_i32_0 : i32, i32
  }
  func.func @transform_11(%arg0: i32) -> (i32, i32, i32) {
    %c0_i32 = arith.constant 0 : i32
    %c0_i32_0 = arith.constant 0 : i32
    %c0_i32_1 = arith.constant 0 : i32
    return %arg0, %c0_i32, %c0_i32_0 : i32, i32, i32
  }
}

</mosaic_0001>

<llo_original>
// kernel: tpu_custom_call.1
$region0: #{tpu_custom_call.1}
  #allocation0 [shape = 'u32[]', space=smem, size = 0x4, offset = 0x4, fixed_abs, tag = 'smem constant byte address 0x4 - core index']
  #allocation1 [shape = 'u32[144,128]{1,0:T(1,128)}', space=vmem, size = 0x12000, scoped, tag = 'internal scratch']
  #allocation2 [shape = 'f32[48,401]{1,0:T(8,128)}', space=vmem, size = 0x18000, scoped, tag = 'scratch operand']
  %s0 = inlined_call_operand.hbm [shape: f32[2,16,256], index: 0, kind: input, shape index: {}]
  %s1 = inlined_call_operand.hbm [shape: f32[8,144], index: 1, kind: input, shape index: {}]
  %s2 = inlined_call_operand.hbm [shape: f32[8,1], index: 2, kind: input, shape index: {}]
  %s3 = inlined_call_operand.hbm [shape: f32[8,216], index: 3, kind: input, shape index: {}]
  %s4 = inlined_call_operand.hbm [shape: f32[8,1], index: 4, kind: input, shape index: {}]
  %s5 = inlined_call_operand.hbm [shape: f32[8,288], index: 5, kind: input, shape index: {}]
  %s6 = inlined_call_operand.hbm [shape: f32[8,1], index: 6, kind: input, shape index: {}]
  %s7 = inlined_call_operand.hbm [shape: f32[8,360], index: 7, kind: input, shape index: {}]
  %s8 = inlined_call_operand.hbm [shape: f32[8,1], index: 8, kind: input, shape index: {}]
  %s9 = inlined_call_operand.hbm [shape: f32[16,432], index: 9, kind: input, shape index: {}]
  %s10 = inlined_call_operand.hbm [shape: f32[16,1], index: 10, kind: input, shape index: {}]
  %s11 = inlined_call_operand.hbm [shape: f32[2,16,256], index: 11, kind: output, shape index: {}]
  %s12 = sld [smem:[#allocation0]]
  $region121: #{tpu_custom_call.1} parent=0
    _
  %s14 = ssub.s32 1, %s12
  %s15 = scalar_select 0, %s14, %s12
  $region1: #{tpu_custom_call.1} parent=0
    #allocation3 [shape = 'u8[32768]{0}', space=vmem, size = 0x8000, scoped, tag = 'input window, operand 0']
    #allocation4 [shape = 's32[2]{0}', space=sflag, size = 0x8, scoped, tag = 'scoped memory for tpu_custom_call.1']
    #allocation5 [shape = 's32[2]{0}', space=sflag, size = 0x8, scoped, tag = 'scoped memory for tpu_custom_call.1']
    #allocation6 [shape = 'u8[8192]{0}', space=vmem, size = 0x2000, scoped, tag = 'input window, operand 1, single buffered']
    #allocation7 [shape = 's32[1]{0}', space=sflag, size = 0x4, scoped, tag = 'scoped memory for tpu_custom_call.1']
    #allocation8 [shape = 'u8[4096]{0}', space=vmem, size = 0x1000, scoped, tag = 'input window, operand 2, single buffered']
    #allocation9 [shape = 'u8[8192]{0}', space=vmem, size = 0x2000, scoped, tag = 'input window, operand 3, single buffered']
    #allocation10 [shape = 's32[1]{0}', space=sflag, size = 0x4, scoped, tag = 'scoped memory for tpu_custom_call.1']
    #allocation11 [shape = 'u8[4096]{0}', space=vmem, size = 0x1000, scoped, tag = 'input window, operand 4, single buffered']
    #allocation12 [shape = 'u8[12288]{0}', space=vmem, size = 0x3000, scoped, tag = 'input window, operand 5, single buffered']
    #allocation13 [shape = 's32[1]{0}', space=sflag, size = 0x4, scoped, tag = 'scoped memory for tpu_custom_call.1']
    #allocation14 [shape = 'u8[4096]{0}', space=vmem, size = 0x1000, scoped, tag = 'input window, operand 6, single buffered']
    #allocation15 [shape = 'u8[12288]{0}', space=vmem, size = 0x3000, scoped, tag = 'input window, operand 7, single buffered']
    #allocation16 [shape = 's32[1]{0}', space=sflag, size = 0x4, scoped, tag = 'scoped memory for tpu_custom_call.1']
    #allocation17 [shape = 'u8[4096]{0}', space=vmem, size = 0x1000, scoped, tag = 'input window, operand 8, single buffered']
    #allocation18 [shape = 'u8[32768]{0}', space=vmem, size = 0x8000, scoped, tag = 'input window, operand 9, single buffered']
    #allocation19 [shape = 's32[1]{0}', space=sflag, size = 0x4, scoped, tag = 'scoped memory for tpu_custom_call.1']
    #allocation20 [shape = 'u8[8192]{0}', space=vmem, size = 0x2000, scoped, tag = 'input window, operand 10, single buffered']
    #allocation21 [shape = 'u8[32768]{0}', space=vmem, size = 0x8000, scoped, tag = 'output window, operand 0']
    %16 = vsyncpa [#allocation4], 0
    %s17 = scalar_lea.sflag [#allocation4], 1
    %18 = vsyncpa %s17, 0
    %19 = vsyncpa [#allocation7], 0
    %20 = vsyncpa [#allocation10], 0
    %21 = vsyncpa [#allocation13], 0
    %22 = vsyncpa [#allocation16], 0
    %23 = vsyncpa [#allocation19], 0
    %24 = vsyncpa [#allocation5], 0
    %s25 = scalar_lea.sflag [#allocation5], 1
    %26 = vsyncpa %s25, 0
    loop: start=0, step=1, limit=4
    $region2: #{tpu_custom_call.1} parent=1 // loop_pre_header
      _
    $region3: #{tpu_custom_call.1} parent=1 // loop_header
      %s28 = sphi 0, %s32
      %p29 = scmp.ge.s32.totalorder %s28, 4
      %s38 = sphi 0, %s40
      %s41 = sphi 0, %s38
      %s42 = sphi 0, %s41
      %s58 = sphi 0, %s42
      %s62 = sphi 0, %s62
      %s64 = sphi 0, %s62
      %s65 = sphi 0, %s64
      %s79 = sphi 0, %s65
      %s83 = sphi 0, %s83
      %s85 = sphi 0, %s83
      %s86 = sphi 0, %s85
      %s100 = sphi 0, %s86
      %s104 = sphi 0, %s104
      %s106 = sphi 0, %s104
      %s107 = sphi 0, %s106
      %s121 = sphi 0, %s107
      %s125 = sphi 0, %s125
      %s127 = sphi 0, %s125
      %s128 = sphi 0, %s127
      %s142 = sphi 0, %s128
      %s146 = sphi 0, %s146
      %s148 = sphi 0, %s146
      %s149 = sphi 0, %s148
      %s163 = sphi 0, %s149
      %s167 = sphi 0, %s167
      %s169 = sphi 0, %s167
      %s170 = sphi 0, %s169
      %s184 = sphi 0, %s170
      %s188 = sphi 0, %s188
      %s190 = sphi 0, %s188
      %s191 = sphi 0, %s190
      %s205 = sphi 0, %s191
      %s209 = sphi 0, %s209
      %s211 = sphi 0, %s209
      %s212 = sphi 0, %s211
      %s226 = sphi 0, %s212
      %s230 = sphi 0, %s230
      %s232 = sphi 0, %s230
      %s233 = sphi 0, %s232
      %s247 = sphi 0, %s233
      %s251 = sphi 0, %s251
      %s253 = sphi 0, %s251
      %s254 = sphi 0, %s253
      %s268 = sphi 0, %s254
      %s274 = sphi 0, %s276
      %s277 = sphi 0, %s274
      %s278 = sphi 0, %s277
      %s294 = sphi 0, %s278
    $region4: #{tpu_custom_call.1} parent=1 // loop_header_branch
      %31 = sbr.rel (%p29) target = $region8
    $region5: #{tpu_custom_call.1} parent=1 // loop_body
      %s33 = ssub.s32 %s28, 1
      %s34 = ssub.s32 %s28, 2
      %s35 = sadd.s32 %s28, 1
      %s36 = ssub.s32 %s28, %s35
      %p37 = scmp.eq.s32.totalorder %s36, 0
      %s39 = sadd.s32 %s38, 1
      %s40 = scalar_select %p37, %s38, %s39
      %p43 = pneg %p37
      %p44 = scmp.eq.s32.totalorder %s28, 1
      %p45 = por %p43, %p44
      %p46 = scmp.ne.s32.totalorder %s38, %s41
      %p47 = scmp.eq.s32.totalorder %s28, 0
      %p48 = por %p46, %p47
      %p49 = scmp.ne.s32.totalorder %s38, %s41
      %p50 = scmp.eq.s32.totalorder %s33, 1
      %p51 = por %p49, %p50
      %p52 = scmp.ne.s32.totalorder %s41, %s42
      %p53 = scmp.eq.s32.totalorder %s33, 0
      %p54 = por %p52, %p53
      %p55 = scmp.ne.s32.totalorder %s41, %s42
      %p56 = scmp.eq.s32.totalorder %s34, 1
      %p57 = por %p55, %p56
      %p59 = scmp.ne.s32.totalorder %s42, %s58
      %p60 = scmp.eq.s32.totalorder %s34, 0
      %p61 = por %p59, %p60
      %s63 = sadd.s32 %s62, 1
      %p66 = scmp.eq.s32.totalorder %s28, 1
      %p67 = scmp.ne.s32.totalorder %s62, %s64
      %p68 = scmp.eq.s32.totalorder %s28, 0
      %p69 = por %p67, %p68
      %p70 = scmp.ne.s32.totalorder %s62, %s64
      %p71 = scmp.eq.s32.totalorder %s33, 1
      %p72 = por %p70, %p71
      %p73 = scmp.ne.s32.totalorder %s64, %s65
      %p74 = scmp.eq.s32.totalorder %s33, 0
      %p75 = por %p73, %p74
      %p76 = scmp.ne.s32.totalorder %s64, %s65
      %p77 = scmp.eq.s32.totalorder %s34, 1
      %p78 = por %p76, %p77
      %p80 = scmp.ne.s32.totalorder %s65, %s79
      %p81 = scmp.eq.s32.totalorder %s34, 0
      %p82 = por %p80, %p81
      %s84 = sadd.s32 %s83, 1
      %p87 = scmp.eq.s32.totalorder %s28, 1
      %p88 = scmp.ne.s32.totalorder %s83, %s85
      %p89 = scmp.eq.s32.totalorder %s28, 0
      %p90 = por %p88, %p89
      %p91 = scmp.ne.s32.totalorder %s83, %s85
      %p92 = scmp.eq.s32.totalorder %s33, 1
      %p93 = por %p91, %p92
      %p94 = scmp.ne.s32.totalorder %s85, %s86
      %p95 = scmp.eq.s32.totalorder %s33, 0
      %p96 = por %p94, %p95
      %p97 = scmp.ne.s32.totalorder %s85, %s86
      %p98 = scmp.eq.s32.totalorder %s34, 1
      %p99 = por %p97, %p98
      %p101 = scmp.ne.s32.totalorder %s86, %s100
      %p102 = scmp.eq.s32.totalorder %s34, 0
      %p103 = por %p101, %p102
      %s105 = sadd.s32 %s104, 1
      %p108 = scmp.eq.s32.totalorder %s28, 1
      %p109 = scmp.ne.s32.totalorder %s104, %s106
      %p110 = scmp.eq.s32.totalorder %s28, 0
      %p111 = por %p109, %p110
      %p112 = scmp.ne.s32.totalorder %s104, %s106
      %p113 = scmp.eq.s32.totalorder %s33, 1
      %p114 = por %p112, %p113
      %p115 = scmp.ne.s32.totalorder %s106, %s107
      %p116 = scmp.eq.s32.totalorder %s33, 0
      %p117 = por %p115, %p116
      %p118 = scmp.ne.s32.totalorder %s106, %s107
      %p119 = scmp.eq.s32.totalorder %s34, 1
      %p120 = por %p118, %p119
      %p122 = scmp.ne.s32.totalorder %s107, %s121
      %p123 = scmp.eq.s32.totalorder %s34, 0
      %p124 = por %p122, %p123
      %s126 = sadd.s32 %s125, 1
      %p129 = scmp.eq.s32.totalorder %s28, 1
      %p130 = scmp.ne.s32.totalorder %s125, %s127
      %p131 = scmp.eq.s32.totalorder %s28, 0
      %p132 = por %p130, %p131
      %p133 = scmp.ne.s32.totalorder %s125, %s127
      %p134 = scmp.eq.s32.totalorder %s33, 1
      %p135 = por %p133, %p134
      %p136 = scmp.ne.s32.totalorder %s127, %s128
      %p137 = scmp.eq.s32.totalorder %s33, 0
      %p138 = por %p136, %p137
      %p139 = scmp.ne.s32.totalorder %s127, %s128
      %p140 = scmp.eq.s32.totalorder %s34, 1
      %p141 = por %p139, %p140
      %p143 = scmp.ne.s32.totalorder %s128, %s142
      %p144 = scmp.eq.s32.totalorder %s34, 0
      %p145 = por %p143, %p144
      %s147 = sadd.s32 %s146, 1
      %p150 = scmp.eq.s32.totalorder %s28, 1
      %p151 = scmp.ne.s32.totalorder %s146, %s148
      %p152 = scmp.eq.s32.totalorder %s28, 0
      %p153 = por %p151, %p152
      %p154 = scmp.ne.s32.totalorder %s146, %s148
      %p155 = scmp.eq.s32.totalorder %s33, 1
      %p156 = por %p154, %p155
      %p157 = scmp.ne.s32.totalorder %s148, %s149
      %p158 = scmp.eq.s32.totalorder %s33, 0
      %p159 = por %p157, %p158
      %p160 = scmp.ne.s32.totalorder %s148, %s149
      %p161 = scmp.eq.s32.totalorder %s34, 1
      %p162 = por %p160, %p161
      %p164 = scmp.ne.s32.totalorder %s149, %s163
      %p165 = scmp.eq.s32.totalorder %s34, 0
      %p166 = por %p164, %p165
      %s168 = sadd.s32 %s167, 1
      %p171 = scmp.eq.s32.totalorder %s28, 1
      %p172 = scmp.ne.s32.totalorder %s167, %s169
      %p173 = scmp.eq.s32.totalorder %s28, 0
      %p174 = por %p172, %p173
      %p175 = scmp.ne.s32.totalorder %s167, %s169
      %p176 = scmp.eq.s32.totalorder %s33, 1
      %p177 = por %p175, %p176
      %p178 = scmp.ne.s32.totalorder %s169, %s170
      %p179 = scmp.eq.s32.totalorder %s33, 0
      %p180 = por %p178, %p179
      %p181 = scmp.ne.s32.totalorder %s169, %s170
      %p182 = scmp.eq.s32.totalorder %s34, 1
      %p183 = por %p181, %p182
      %p185 = scmp.ne.s32.totalorder %s170, %s184
      %p186 = scmp.eq.s32.totalorder %s34, 0
      %p187 = por %p185, %p186
      %s189 = sadd.s32 %s188, 1
      %p192 = scmp.eq.s32.totalorder %s28, 1
      %p193 = scmp.ne.s32.totalorder %s188, %s190
      %p194 = scmp.eq.s32.totalorder %s28, 0
      %p195 = por %p193, %p194
      %p196 = scmp.ne.s32.totalorder %s188, %s190
      %p197 = scmp.eq.s32.totalorder %s33, 1
      %p198 = por %p196, %p197
      %p199 = scmp.ne.s32.totalorder %s190, %s191
      %p200 = scmp.eq.s32.totalorder %s33, 0
      %p201 = por %p199, %p200
      %p202 = scmp.ne.s32.totalorder %s190, %s191
      %p203 = scmp.eq.s32.totalorder %s34, 1
      %p204 = por %p202, %p203
      %p206 = scmp.ne.s32.totalorder %s191, %s205
      %p207 = scmp.eq.s32.totalorder %s34, 0
      %p208 = por %p206, %p207
      %s210 = sadd.s32 %s209, 1
      %p213 = scmp.eq.s32.totalorder %s28, 1
      %p214 = scmp.ne.s32.totalorder %s209, %s211
      %p215 = scmp.eq.s32.totalorder %s28, 0
      %p216 = por %p214, %p215
      %p217 = scmp.ne.s32.totalorder %s209, %s211
      %p218 = scmp.eq.s32.totalorder %s33, 1
      %p219 = por %p217, %p218
      %p220 = scmp.ne.s32.totalorder %s211, %s212
      %p221 = scmp.eq.s32.totalorder %s33, 0
      %p222 = por %p220, %p221
      %p223 = scmp.ne.s32.totalorder %s211, %s212
      %p224 = scmp.eq.s32.totalorder %s34, 1
      %p225 = por %p223, %p224
      %p227 = scmp.ne.s32.totalorder %s212, %s226
      %p228 = scmp.eq.s32.totalorder %s34, 0
      %p229 = por %p227, %p228
      %s231 = sadd.s32 %s230, 1
      %p234 = scmp.eq.s32.totalorder %s28, 1
      %p235 = scmp.ne.s32.totalorder %s230, %s232
      %p236 = scmp.eq.s32.totalorder %s28, 0
      %p237 = por %p235, %p236
      %p238 = scmp.ne.s32.totalorder %s230, %s232
      %p239 = scmp.eq.s32.totalorder %s33, 1
      %p240 = por %p238, %p239
      %p241 = scmp.ne.s32.totalorder %s232, %s233
      %p242 = scmp.eq.s32.totalorder %s33, 0
      %p243 = por %p241, %p242
      %p244 = scmp.ne.s32.totalorder %s232, %s233
      %p245 = scmp.eq.s32.totalorder %s34, 1
      %p246 = por %p244, %p245
      %p248 = scmp.ne.s32.totalorder %s233, %s247
      %p249 = scmp.eq.s32.totalorder %s34, 0
      %p250 = por %p248, %p249
      %s252 = sadd.s32 %s251, 1
      %p255 = scmp.eq.s32.totalorder %s28, 1
      %p256 = scmp.ne.s32.totalorder %s251, %s253
      %p257 = scmp.eq.s32.totalorder %s28, 0
      %p258 = por %p256, %p257
      %p259 = scmp.ne.s32.totalorder %s251, %s253
      %p260 = scmp.eq.s32.totalorder %s33, 1
      %p261 = por %p259, %p260
      %p262 = scmp.ne.s32.totalorder %s253, %s254
      %p263 = scmp.eq.s32.totalorder %s33, 0
      %p264 = por %p262, %p263
      %p265 = scmp.ne.s32.totalorder %s253, %s254
      %p266 = scmp.eq.s32.totalorder %s34, 1
      %p267 = por %p265, %p266
      %p269 = scmp.ne.s32.totalorder %s254, %s268
      %p270 = scmp.eq.s32.totalorder %s34, 0
      %p271 = por %p269, %p270
      %s272 = ssub.s32 %s28, %s35
      %p273 = scmp.eq.s32.totalorder %s272, 0
      %s275 = sadd.s32 %s274, 1
      %s276 = scalar_select %p273, %s274, %s275
      %p279 = pneg %p273
      %p280 = scmp.eq.s32.totalorder %s28, 1
      %p281 = por %p279, %p280
      %p282 = scmp.ne.s32.totalorder %s274, %s277
      %p283 = scmp.eq.s32.totalorder %s28, 0
      %p284 = por %p282, %p283
      %p285 = scmp.ne.s32.totalorder %s274, %s277
      %p286 = scmp.eq.s32.totalorder %s33, 1
      %p287 = por %p285, %p286
      %p288 = scmp.ne.s32.totalorder %s277, %s278
      %p289 = scmp.eq.s32.totalorder %s33, 0
      %p290 = por %p288, %p289
      %p291 = scmp.ne.s32.totalorder %s277, %s278
      %p292 = scmp.eq.s32.totalorder %s34, 1
      %p293 = por %p291, %p292
      %p295 = scmp.ne.s32.totalorder %s278, %s294
      %p296 = scmp.eq.s32.totalorder %s34, 0
      %p297 = por %p295, %p296
      %p298 = scmp.le.s32.totalorder 1, %s28
      %p299 = scmp.lt.s32.totalorder %s28, 3
      %p300 = pnand %p298, %p299
      %p301 = pneg %p300
      // Predicated region
      $region9: #{tpu_custom_call.1} parent=5 // pred_check
        _
      $region10: #{tpu_custom_call.1} parent=5 // pred_check_branch
        %303 = sbr.rel (%p300) target = $region12
      $region11: #{tpu_custom_call.1} parent=5 // pred_region
        %s304 = ssub.s32 %s28, 1
        // Predicated region
        $region13: #{tpu_custom_call.1} parent=11 // pred_check
          %p305 = pneg %p75
        $region14: #{tpu_custom_call.1} parent=11 // pred_check_branch
          %307 = sbr.rel (%p305) target = $region16
        $region15: #{tpu_custom_call.1} parent=11 // pred_region
          %s309 = ssub.s32 256, 256
          %310 = vsyncadd [#allocation7], %s309
          %s312 = sshll.u32 [#allocation6], 4
          %s313 = int_to_ptr.vmem [resolvable:$true] %s312
          %315 = dma.hbm_to_vmem [thread:$0]  %s1, 256, %s313, [#allocation7]
        $region16: #{tpu_custom_call.1} parent=11 // pred_fallthru
          _
        // Predicated region
        $region17: #{tpu_custom_call.1} parent=11 // pred_check
          %p316 = pneg %p96
        $region18: #{tpu_custom_call.1} parent=11 // pred_check_branch
          %318 = sbr.rel (%p316) target = $region20
        $region19: #{tpu_custom_call.1} parent=11 // pred_region
          %s320 = ssub.s32 128, 128
          %321 = vsyncadd [#allocation7], %s320
          %s323 = sshll.u32 [#allocation8], 4
          %s324 = int_to_ptr.vmem [resolvable:$true] %s323
          %326 = dma.hbm_to_vmem [thread:$0]  %s2, 128, %s324, [#allocation7]
        $region20: #{tpu_custom_call.1} parent=11 // pred_fallthru
          _
        // Predicated region
        $region21: #{tpu_custom_call.1} parent=11 // pred_check
          %p327 = pneg %p117
        $region22: #{tpu_custom_call.1} parent=11 // pred_check_branch
          %329 = sbr.rel (%p327) target = $region24
        $region23: #{tpu_custom_call.1} parent=11 // pred_region
          %s331 = ssub.s32 256, 256
          %332 = vsyncadd [#allocation10], %s331
          %s334 = sshll.u32 [#allocation9], 4
          %s335 = int_to_ptr.vmem [resolvable:$true] %s334
          %337 = dma.hbm_to_vmem [thread:$0]  %s3, 256, %s335, [#allocation10]
        $region24: #{tpu_custom_call.1} parent=11 // pred_fallthru
          _
        // Predicated region
        $region25: #{tpu_custom_call.1} parent=11 // pred_check
          %p338 = pneg %p138
        $region26: #{tpu_custom_call.1} parent=11 // pred_check_branch
          %340 = sbr.rel (%p338) target = $region28
        $region27: #{tpu_custom_call.1} parent=11 // pred_region
          %s342 = ssub.s32 128, 128
          %343 = vsyncadd [#allocation10], %s342
          %s345 = sshll.u32 [#allocation11], 4
          %s346 = int_to_ptr.vmem [resolvable:$true] %s345
          %348 = dma.hbm_to_vmem [thread:$0]  %s4, 128, %s346, [#allocation10]
        $region28: #{tpu_custom_call.1} parent=11 // pred_fallthru
          _
        // Predicated region
        $region29: #{tpu_custom_call.1} parent=11 // pred_check
          %p349 = pneg %p159
        $region30: #{tpu_custom_call.1} parent=11 // pred_check_branch
          %351 = sbr.rel (%p349) target = $region32
        $region31: #{tpu_custom_call.1} parent=11 // pred_region
          %s353 = ssub.s32 384, 384
          %354 = vsyncadd [#allocation13], %s353
          %s356 = sshll.u32 [#allocation12], 4
          %s357 = int_to_ptr.vmem [resolvable:$true] %s356
          %359 = dma.hbm_to_vmem [thread:$0]  %s5, 384, %s357, [#allocation13]
        $region32: #{tpu_custom_call.1} parent=11 // pred_fallthru
          _
        // Predicated region
        $region33: #{tpu_custom_call.1} parent=11 // pred_check
          %p360 = pneg %p180
        $region34: #{tpu_custom_call.1} parent=11 // pred_check_branch
          %362 = sbr.rel (%p360) target = $region36
        $region35: #{tpu_custom_call.1} parent=11 // pred_region
          %s364 = ssub.s32 128, 128
          %365 = vsyncadd [#allocation13], %s364
          %s367 = sshll.u32 [#allocation14], 4
          %s368 = int_to_ptr.vmem [resolvable:$true] %s367
          %370 = dma.hbm_to_vmem [thread:$0]  %s6, 128, %s368, [#allocation13]
        $region36: #{tpu_custom_call.1} parent=11 // pred_fallthru
          _
        // Predicated region
        $region37: #{tpu_custom_call.1} parent=11 // pred_check
          %p371 = pneg %p201
        $region38: #{tpu_custom_call.1} parent=11 // pred_check_branch
          %373 = sbr.rel (%p371) target = $region40
        $region39: #{tpu_custom_call.1} parent=11 // pred_region
          %s375 = ssub.s32 384, 384
          %376 = vsyncadd [#allocation16], %s375
          %s378 = sshll.u32 [#allocation15], 4
          %s379 = int_to_ptr.vmem [resolvable:$true] %s378
          %381 = dma.hbm_to_vmem [thread:$0]  %s7, 384, %s379, [#allocation16]
        $region40: #{tpu_custom_call.1} parent=11 // pred_fallthru
          _
        // Predicated region
        $region41: #{tpu_custom_call.1} parent=11 // pred_check
          %p382 = pneg %p222
        $region42: #{tpu_custom_call.1} parent=11 // pred_check_branch
          %384 = sbr.rel (%p382) target = $region44
        $region43: #{tpu_custom_call.1} parent=11 // pred_region
          %s386 = ssub.s32 128, 128
          %387 = vsyncadd [#allocation16], %s386
          %s389 = sshll.u32 [#allocation17], 4
          %s390 = int_to_ptr.vmem [resolvable:$true] %s389
          %392 = dma.hbm_to_vmem [thread:$0]  %s8, 128, %s390, [#allocation16]
        $region44: #{tpu_custom_call.1} parent=11 // pred_fallthru
          _
        // Predicated region
        $region45: #{tpu_custom_call.1} parent=11 // pred_check
          %p393 = pneg %p243
        $region46: #{tpu_custom_call.1} parent=11 // pred_check_branch
          %395 = sbr.rel (%p393) target = $region48
        $region47: #{tpu_custom_call.1} parent=11 // pred_region
          %s397 = ssub.s32 1024, 1024
          %398 = vsyncadd [#allocation19], %s397
          %s399 = sshll.u32 [#allocation18], 4
          %s400 = int_to_ptr.vmem [resolvable:$true] %s399
          %405 = dma.hbm_to_vmem [thread:$0]  %s9, 1024, %s400, [#allocation19], 512, 512, 32
        $region48: #{tpu_custom_call.1} parent=11 // pred_fallthru
          _
        // Predicated region
        $region49: #{tpu_custom_call.1} parent=11 // pred_check
          %p406 = pneg %p264
        $region50: #{tpu_custom_call.1} parent=11 // pred_check_branch
          %408 = sbr.rel (%p406) target = $region52
        $region51: #{tpu_custom_call.1} parent=11 // pred_region
          %s410 = ssub.s32 256, 256
          %411 = vsyncadd [#allocation19], %s410
          %s412 = sshll.u32 [#allocation20], 4
          %s413 = int_to_ptr.vmem [resolvable:$true] %s412
          %418 = dma.hbm_to_vmem [thread:$0]  %s10, 256, %s413, [#allocation19], 128, 128, 8
        $region52: #{tpu_custom_call.1} parent=11 // pred_fallthru
          _
      $region12: #{tpu_custom_call.1} parent=5 // pred_fallthru
        _
      %p419 = scmp.lt.s32.totalorder %s28, 2
      // Predicated region
      $region53: #{tpu_custom_call.1} parent=5 // pred_check
        %p420 = pneg %p419
      $region54: #{tpu_custom_call.1} parent=5 // pred_check_branch
        %422 = sbr.rel (%p420) target = $region56
      $region55: #{tpu_custom_call.1} parent=5 // pred_region
        // Predicated region
        $region57: #{tpu_custom_call.1} parent=55 // pred_check
          %p423 = pneg %p48
        $region58: #{tpu_custom_call.1} parent=55 // pred_check_branch
          %425 = sbr.rel (%p423) target = $region60
        $region59: #{tpu_custom_call.1} parent=55 // pred_region
          %s426 = sand.u32 %s38, 1
          %s427 = scalar_lea.sflag [#allocation4], %s426
          %s428 = sand.u32 %s38, 1
          %s429 = smul.addr %s428, 32
          %s430 = scalar_lea.vmem [#allocation3], %s429
          %s432 = ssub.s32 512, 512
          %433 = vsyncadd %s427, %s432
          %s434 = smul.addr %s28, 4
          %s435 = smul.addr %s434, 128
          %s436 = scalar_lea.hbm %s0, %s435
          %s437 = sshll.u32 %s430, 4
          %s438 = int_to_ptr.vmem [resolvable:$true] %s437
          %443 = dma.hbm_to_vmem [thread:$0]  %s436, 512, %s438, %s427, 256, 256, 16
        $region60: #{tpu_custom_call.1} parent=55 // pred_fallthru
          _
      $region56: #{tpu_custom_call.1} parent=5 // pred_fallthru
        _
      %p444 = scmp.le.s32.totalorder 1, %s28
      %p445 = scmp.lt.s32.totalorder %s28, 3
      %p446 = pnand %p444, %p445
      %p447 = pneg %p446
      // Predicated region
      $region61: #{tpu_custom_call.1} parent=5 // pred_check
        _
      $region62: #{tpu_custom_call.1} parent=5 // pred_check_branch
        %449 = sbr.rel (%p446) target = $region64
      $region63: #{tpu_custom_call.1} parent=5 // pred_region
        %s450 = ssub.s32 %s28, 1
        %s451 = sand.u32 %s41, 1
        %s452 = scalar_lea.sflag [#allocation4], %s451
        %s453 = sand.u32 %s41, 1
        %s454 = smul.addr %s453, 32
        %s455 = scalar_lea.vmem [#allocation3], %s454
        // Predicated region
        $region65: #{tpu_custom_call.1} parent=63 // pred_check
          %p456 = pneg %p54
        $region66: #{tpu_custom_call.1} parent=63 // pred_check_branch
          %458 = sbr.rel (%p456) target = $region68
        $region67: #{tpu_custom_call.1} parent=63 // pred_region
          %459 = dma.done %s452, 512
        $region68: #{tpu_custom_call.1} parent=63 // pred_fallthru
          _
        // Predicated region
        $region69: #{tpu_custom_call.1} parent=63 // pred_check
          %p460 = pneg %p75
        $region70: #{tpu_custom_call.1} parent=63 // pred_check_branch
          %462 = sbr.rel (%p460) target = $region72
        $region71: #{tpu_custom_call.1} parent=63 // pred_region
          %463 = dma.done [#allocation7], 256
        $region72: #{tpu_custom_call.1} parent=63 // pred_fallthru
          _
        // Predicated region
        $region73: #{tpu_custom_call.1} parent=63 // pred_check
          %p464 = pneg %p96
        $region74: #{tpu_custom_call.1} parent=63 // pred_check_branch
          %466 = sbr.rel (%p464) target = $region76
        $region75: #{tpu_custom_call.1} parent=63 // pred_region
          %467 = dma.done [#allocation7], 128
        $region76: #{tpu_custom_call.1} parent=63 // pred_fallthru
          _
        // Predicated region
        $region77: #{tpu_custom_call.1} parent=63 // pred_check
          %p468 = pneg %p117
        $region78: #{tpu_custom_call.1} parent=63 // pred_check_branch
          %470 = sbr.rel (%p468) target = $region80
        $region79: #{tpu_custom_call.1} parent=63 // pred_region
          %471 = dma.done [#allocation10], 256
        $region80: #{tpu_custom_call.1} parent=63 // pred_fallthru
          _
        // Predicated region
        $region81: #{tpu_custom_call.1} parent=63 // pred_check
          %p472 = pneg %p138
        $region82: #{tpu_custom_call.1} parent=63 // pred_check_branch
          %474 = sbr.rel (%p472) target = $region84
        $region83: #{tpu_custom_call.1} parent=63 // pred_region
          %475 = dma.done [#allocation10], 128
        $region84: #{tpu_custom_call.1} parent=63 // pred_fallthru
          _
        // Predicated region
        $region85: #{tpu_custom_call.1} parent=63 // pred_check
          %p476 = pneg %p159
        $region86: #{tpu_custom_call.1} parent=63 // pred_check_branch
          %478 = sbr.rel (%p476) target = $region88
        $region87: #{tpu_custom_call.1} parent=63 // pred_region
          %479 = dma.done [#allocation13], 384
        $region88: #{tpu_custom_call.1} parent=63 // pred_fallthru
          _
        // Predicated region
        $region89: #{tpu_custom_call.1} parent=63 // pred_check
          %p480 = pneg %p180
        $region90: #{tpu_custom_call.1} parent=63 // pred_check_branch
          %482 = sbr.rel (%p480) target = $region92
        $region91: #{tpu_custom_call.1} parent=63 // pred_region
          %483 = dma.done [#allocation13], 128
        $region92: #{tpu_custom_call.1} parent=63 // pred_fallthru
          _
        // Predicated region
        $region93: #{tpu_custom_call.1} parent=63 // pred_check
          %p484 = pneg %p201
        $region94: #{tpu_custom_call.1} parent=63 // pred_check_branch
          %486 = sbr.rel (%p484) target = $region96
        $region95: #{tpu_custom_call.1} parent=63 // pred_region
          %487 = dma.done [#allocation16], 384
        $region96: #{tpu_custom_call.1} parent=63 // pred_fallthru
          _
        // Predicated region
        $region97: #{tpu_custom_call.1} parent=63 // pred_check
          %p488 = pneg %p222
        $region98: #{tpu_custom_call.1} parent=63 // pred_check_branch
          %490 = sbr.rel (%p488) target = $region100
        $region99: #{tpu_custom_call.1} parent=63 // pred_region
          %491 = dma.done [#allocation16], 128
        $region100: #{tpu_custom_call.1} parent=63 // pred_fallthru
          _
        // Predicated region
        $region101: #{tpu_custom_call.1} parent=63 // pred_check
          %p492 = pneg %p243
        $region102: #{tpu_custom_call.1} parent=63 // pred_check_branch
          %494 = sbr.rel (%p492) target = $region104
        $region103: #{tpu_custom_call.1} parent=63 // pred_region
          %495 = dma.done [#allocation19], 1024
        $region104: #{tpu_custom_call.1} parent=63 // pred_fallthru
          _
        // Predicated region
        $region105: #{tpu_custom_call.1} parent=63 // pred_check
          %p496 = pneg %p264
        $region106: #{tpu_custom_call.1} parent=63 // pred_check_branch
          %498 = sbr.rel (%p496) target = $region108
        $region107: #{tpu_custom_call.1} parent=63 // pred_region
          %499 = dma.done [#allocation19], 256
        $region108: #{tpu_custom_call.1} parent=63 // pred_fallthru
          _
        %s500 = sand.u32 %s41, 1
        %s501 = scalar_lea.sflag [#allocation4], %s500
        %s502 = sand.u32 %s41, 1
        %s503 = smul.addr %s502, 32
        %s504 = scalar_lea.vmem [#allocation3], %s503
        %p505 = pneg %p54
        %p506 = pneg %p51
        %p507 = pneg %p75
        %p508 = pneg %p72
        %p509 = pneg %p96
        %p510 = pneg %p93
        %p511 = pneg %p117
        %p512 = pneg %p114
        %p513 = pneg %p138
        %p514 = pneg %p135
        %p515 = pneg %p159
        %p516 = pneg %p156
        %p517 = pneg %p180
        %p518 = pneg %p177
        %p519 = pneg %p201
        %p520 = pneg %p198
        %p521 = pneg %p222
        %p522 = pneg %p219
        %p523 = pneg %p243
        %p524 = pneg %p240
        %p525 = pneg %p264
        %p526 = pneg %p261
        %p527 = pneg %p290
        %p528 = pneg %p287
        %s529 = sand.u32 %s277, 1
        %s530 = scalar_lea.sflag [#allocation5], %s529
        %s531 = sand.u32 %s277, 1
        %s532 = smul.addr %s531, 32
        %s533 = scalar_lea.vmem [#allocation21], %s532
        %534 = vst [vmem:[#allocation2] sm:$0xff] 0.0
        %535 = vst [vmem:[#allocation2 + $0x8] sm:$0xff] 0.0
        %536 = vst [vmem:[#allocation2 + $0x10] sm:$0xff] 0.0
        %vm537 = vcmask 138240
        %538 = vst.msk [vmem:[#allocation2 + $0x18] sm:$0xff] %vm537, 0.0
        %539 = vst [vmem:[#allocation2 + $0x20] sm:$0xff] 0.0
        %540 = vst [vmem:[#allocation2 + $0x28] sm:$0xff] 0.0
        %541 = vst [vmem:[#allocation2 + $0x30] sm:$0xff] 0.0
        %542 = vst.msk [vmem:[#allocation2 + $0x38] sm:$0xff] %vm537, 0.0
        %543 = vst [vmem:[#allocation2 + $0x40] sm:$0xff] 0.0
        %544 = vst [vmem:[#allocation2 + $0x48] sm:$0xff] 0.0
        %545 = vst [vmem:[#allocation2 + $0x50] sm:$0xff] 0.0
        %546 = vst.msk [vmem:[#allocation2 + $0x58] sm:$0xff] %vm537, 0.0
        %547 = vst [vmem:[#allocation2 + $0x60] sm:$0xff] 0.0
        %548 = vst [vmem:[#allocation2 + $0x68] sm:$0xff] 0.0
        %549 = vst [vmem:[#allocation2 + $0x70] sm:$0xff] 0.0
        %550 = vst.msk [vmem:[#allocation2 + $0x78] sm:$0xff] %vm537, 0.0
        %551 = vst [vmem:[#allocation2 + $0x80] sm:$0xff] 0.0
        %552 = vst [vmem:[#allocation2 + $0x88] sm:$0xff] 0.0
        %553 = vst [vmem:[#allocation2 + $0x90] sm:$0xff] 0.0
        %554 = vst.msk [vmem:[#allocation2 + $0x98] sm:$0xff] %vm537, 0.0
        %555 = vst [vmem:[#allocation2 + $0xa0] sm:$0xff] 0.0
        %556 = vst [vmem:[#allocation2 + $0xa8] sm:$0xff] 0.0
        %557 = vst [vmem:[#allocation2 + $0xb0] sm:$0xff] 0.0
        %558 = vst.msk [vmem:[#allocation2 + $0xb8] sm:$0xff] %vm537, 0.0
        %v559 = vld [vmem:[%s455] sm:$0xff]
        %v560 = vld [vmem:[%s455 + $0x8] sm:$0xff]
        %v561 = vld [vmem:[%s455 + $0x10] sm:$0xff]
        %v562 = vld [vmem:[%s455 + $0x18] sm:$0xff]
        %563 = vst [vmem:[#allocation2 + $0x8] sm:$0xff] %v559
        %564 = vst [vmem:[#allocation2 + $0x10] sm:$0xff] %v560
        %565 = vst [vmem:[#allocation2 + $0x28] sm:$0xff] %v561
        %566 = vst [vmem:[#allocation2 + $0x30] sm:$0xff] %v562
        %v567 = vlaneseq
        %v568 = vand.u32 %v567, 127
        %v569 = vadd.s32 %v568, 128
        %vm570 = vcmp.lt.s32.totalorder %v568, 0
        %v571 = vsub.s32 0, %v568
        %v572 = vsel %vm570, %v571, %v568
        %v573 = vshrl.u32 %v572, 4
        %v574 = vand.u32 %v572, 15
        %v575 = vsub.s32 0, %v574
        %v576 = vsel %vm570, %v575, %v574
        %vm577 = vcmp.lt.s32.totalorder %v569, 0
        %v578 = vsub.s32 0, %v569
        %v579 = vsel %vm577, %v578, %v569
        %v580 = vshrl.u32 %v579, 4
        %v581 = vand.u32 %v579, 15
        %v582 = vsub.s32 0, %v581
        %v583 = vsel %vm577, %v582, %v581
        %vm584 = vcmp.ne.s32.totalorder %v576, 0
        %vm585 = vcmp.ne.s32.totalorder %v583, 0
        %vm586 = vcmp.lt.s32.totalorder %v576, 0
        %vm587 = vcmp.lt.s32.totalorder %v583, 0
        %vm588 = vmand %vm586, %vm584
        %vm589 = vmand %vm587, %vm585
        %v590 = vadd.s32 %v576, 16
        %v591 = vadd.s32 %v583, 16
        %v592 = vsel %vm588, %v590, %v576
        %v593 = vsel %vm589, %v591, %v583
        %vm594 = vcmp.ne.s32.totalorder %v592, 0
        %vm595 = vcmp.ne.s32.totalorder %v593, 0
        %v596 = vsel %vm594, 1, 0
        %v597 = vsel %vm595, 1, 0
        %v598 = vcvt.s32.f32 %v596
        %v599 = vcvt.s32.f32 %v597
        %vm600 = vcmp.ne.s32.totalorder %v592, 15
        %vm601 = vcmp.ne.s32.totalorder %v593, 15
        %v602 = vsel %vm600, 1, 0
        %v603 = vsel %vm601, 1, 0
        %v604 = vcvt.s32.f32 %v602
        %v605 = vcvt.s32.f32 %v603
        %v606 = vld [vmem:[#allocation2] sm:$0xff]
        %v607 = vld [vmem:[#allocation2 + $0x8] sm:$0xff]
        %v608 = vld [vmem:[#allocation2 + $0x10] sm:$0xff]
        %v609 = vld [vmem:[#allocation2 + $0x20] sm:$0xff]
        %v610 = vld [vmem:[#allocation2 + $0x28] sm:$0xff]
        %v611 = vld [vmem:[#allocation2 + $0x30] sm:$0xff]
        %614 = vrot.lane.b32.xlu0 %v598, 111
        %v615 = vpop.permute.xlu0 %614
        %616 = vrot.lane.b32.xlu0 %v599, 111
        %v617 = vpop.permute.xlu0 %616
        %vm618 = vcmask 908288
        %v619 = vsel %vm618, %v615, %v617
        %v623 = vmul.f32 %v606, %v615
        %v624 = vmul.f32 %v607, %v619
        %v625 = vmul.f32 %v608, %v617
        %v626 = vmul.f32 %v609, %v615
        %v627 = vmul.f32 %v610, %v619
        %v628 = vmul.f32 %v611, %v617
        %631 = vrot.lane.b32.xlu0 %v604, 113
        %v632 = vpop.permute.xlu0 %631
        %633 = vrot.lane.b32.xlu0 %v605, 113
        %v634 = vpop.permute.xlu0 %633
        %vm635 = vcmask 924672
        %v636 = vsel %vm635, %v632, %v634
        %v640 = vmul.f32 %v606, %v632
        %v641 = vmul.f32 %v607, %v636
        %v642 = vmul.f32 %v608, %v634
        %v643 = vmul.f32 %v609, %v632
        %v644 = vmul.f32 %v610, %v636
        %v645 = vmul.f32 %v611, %v634
        %646 = vrot.lane.b32.xlu0 %v598, 127
        %v647 = vpop.permute.xlu0 %646
        %648 = vrot.lane.b32.xlu0 %v599, 127
        %v649 = vpop.permute.xlu0 %648
        %vm650 = vcmask 1039360
        %v651 = vsel %vm650, %v647, %v649
        %v655 = vmul.f32 %v606, %v647
        %v656 = vmul.f32 %v607, %v651
        %v657 = vmul.f32 %v608, %v649
        %v658 = vmul.f32 %v609, %v647
        %v659 = vmul.f32 %v610, %v651
        %v660 = vmul.f32 %v611, %v649
        %v661 = vld [vmem:[#allocation2 + $0x18] sm:$0xff]
        %v662 = vld [vmem:[#allocation2 + $0x38] sm:$0xff]
        %663 = vrot.lane.b32.xlu0 %v604, 1
        %v664 = vpop.permute.xlu0 %663
        %665 = vrot.lane.b32.xlu0 %v605, 1
        %v666 = vpop.permute.xlu0 %665
        %vm667 = vcmask 7168
        %v668 = vsel %vm667, %v664, %v666
        %v672 = vmul.f32 %v607, %v664
        %v673 = vmul.f32 %v608, %v668
        %v674 = vmul.f32 %v661, %v666
        %v675 = vmul.f32 %v610, %v664
        %v676 = vmul.f32 %v611, %v668
        %v677 = vmul.f32 %v662, %v666
        %678 = vrot.lane.b32.xlu0 %v598, 15
        %v679 = vpop.permute.xlu0 %678
        %680 = vrot.lane.b32.xlu0 %v599, 15
        %v681 = vpop.permute.xlu0 %680
        %vm682 = vcmask 121856
        %v683 = vsel %vm682, %v679, %v681
        %v687 = vmul.f32 %v607, %v679
        %v688 = vmul.f32 %v608, %v683
        %v689 = vmul.f32 %v661, %v681
        %v690 = vmul.f32 %v610, %v679
        %v691 = vmul.f32 %v611, %v683
        %v692 = vmul.f32 %v662, %v681
        %693 = vrot.lane.b32.xlu0 %v604, 17
        %v694 = vpop.permute.xlu0 %693
        %695 = vrot.lane.b32.xlu0 %v605, 17
        %v696 = vpop.permute.xlu0 %695
        %v697 = vsel %vm537, %v694, %v696
        %v701 = vmul.f32 %v607, %v694
        %v702 = vmul.f32 %v608, %v697
        %v703 = vmul.f32 %v661, %v696
        %v704 = vmul.f32 %v610, %v694
        %v705 = vmul.f32 %v611, %v697
        %v706 = vmul.f32 %v662, %v696
        %713 = vrot.lane.b32.xlu0 %v606, 127
        %v714 = vpop.permute.xlu0 %713
        %715 = vrot.lane.b32.xlu0 %v607, 127
        %v716 = vpop.permute.xlu0 %715
        %717 = vrot.lane.b32.xlu0 %v608, 127
        %v718 = vpop.permute.xlu0 %717
        %719 = vrot.lane.b32.xlu0 %v609, 127
        %v720 = vpop.permute.xlu0 %719
        %721 = vrot.lane.b32.xlu0 %v610, 127
        %v722 = vpop.permute.xlu0 %721
        %723 = vrot.lane.b32.xlu0 %v611, 127
        %v724 = vpop.permute.xlu0 %723
        %v725 = vsel %vm650, %v714, %v716
        %v726 = vsel %vm650, %v716, %v718
        %v727 = vsel %vm650, %v720, %v722
        %v728 = vsel %vm650, %v722, %v724
        %735 = vrot.lane.b32.xlu0 %v640, 126
        %v736 = vpop.permute.xlu0 %735
        %737 = vrot.lane.b32.xlu0 %v641, 126
        %v738 = vpop.permute.xlu0 %737
        %739 = vrot.lane.b32.xlu0 %v642, 126
        %v740 = vpop.permute.xlu0 %739
        %741 = vrot.lane.b32.xlu0 %v643, 126
        %v742 = vpop.permute.xlu0 %741
        %743 = vrot.lane.b32.xlu0 %v644, 126
        %v744 = vpop.permute.xlu0 %743
        %745 = vrot.lane.b32.xlu0 %v645, 126
        %v746 = vpop.permute.xlu0 %745
        %vm747 = vcmask 1031168
        %v748 = vsel %vm747, %v736, %v738
        %v749 = vsel %vm747, %v738, %v740
        %v750 = vsel %vm747, %v742, %v744
        %v751 = vsel %vm747, %v744, %v746
        %758 = vrot.lane.b32.xlu0 %v655, 112
        %v759 = vpop.permute.xlu0 %758
        %760 = vrot.lane.b32.xlu0 %v656, 112
        %v761 = vpop.permute.xlu0 %760
        %762 = vrot.lane.b32.xlu0 %v657, 112
        %v763 = vpop.permute.xlu0 %762
        %764 = vrot.lane.b32.xlu0 %v658, 112
        %v765 = vpop.permute.xlu0 %764
        %766 = vrot.lane.b32.xlu0 %v659, 112
        %v767 = vpop.permute.xlu0 %766
        %768 = vrot.lane.b32.xlu0 %v660, 112
        %v769 = vpop.permute.xlu0 %768
        %vm770 = vcmask 916480
        %v771 = vsel %vm770, %v759, %v761
        %v772 = vsel %vm770, %v761, %v763
        %v773 = vsel %vm770, %v765, %v767
        %v774 = vsel %vm770, %v767, %v769
        %775 = vrot.lane.b32.xlu0 %v607, 111
        %v776 = vpop.permute.xlu0 %775
        %777 = vrot.lane.b32.xlu0 %v608, 111
        %v778 = vpop.permute.xlu0 %777
        %779 = vrot.lane.b32.xlu0 %v610, 111
        %v780 = vpop.permute.xlu0 %779
        %781 = vrot.lane.b32.xlu0 %v611, 111
        %v782 = vpop.permute.xlu0 %781
        %v783 = vsel %vm618, %v776, %v778
        %v784 = vsel %vm618, %v780, %v782
        %791 = vrot.lane.b32.xlu0 %v672, 110
        %v792 = vpop.permute.xlu0 %791
        %793 = vrot.lane.b32.xlu0 %v673, 110
        %v794 = vpop.permute.xlu0 %793
        %795 = vrot.lane.b32.xlu0 %v674, 110
        %v796 = vpop.permute.xlu0 %795
        %797 = vrot.lane.b32.xlu0 %v675, 110
        %v798 = vpop.permute.xlu0 %797
        %799 = vrot.lane.b32.xlu0 %v676, 110
        %v800 = vpop.permute.xlu0 %799
        %801 = vrot.lane.b32.xlu0 %v677, 110
        %v802 = vpop.permute.xlu0 %801
        %vm803 = vcmask 900096
        %v804 = vsel %vm803, %v792, %v794
        %v805 = vsel %vm803, %v794, %v796
        %v806 = vsel %vm803, %v798, %v800
        %v807 = vsel %vm803, %v800, %v802
        %814 = vrot.lane.b32.xlu0 %v687, 96
        %v815 = vpop.permute.xlu0 %814
        %816 = vrot.lane.b32.xlu0 %v688, 96
        %v817 = vpop.permute.xlu0 %816
        %818 = vrot.lane.b32.xlu0 %v689, 96
        %v819 = vpop.permute.xlu0 %818
        %820 = vrot.lane.b32.xlu0 %v690, 96
        %v821 = vpop.permute.xlu0 %820
        %822 = vrot.lane.b32.xlu0 %v691, 96
        %v823 = vpop.permute.xlu0 %822
        %824 = vrot.lane.b32.xlu0 %v692, 96
        %v825 = vpop.permute.xlu0 %824
        %vm826 = vcmask 785408
        %v827 = vsel %vm826, %v815, %v817
        %v828 = vsel %vm826, %v817, %v819
        %v829 = vsel %vm826, %v821, %v823
        %v830 = vsel %vm826, %v823, %v825
        %833 = vrot.lane.b32.xlu0 %v607, 95
        %v834 = vpop.permute.xlu0 %833
        %835 = vrot.lane.b32.xlu0 %v608, 95
        %v836 = vpop.permute.xlu0 %835
        %837 = vrot.lane.b32.xlu0 %v661, 95
        %v838 = vpop.permute.xlu0 %837
        %839 = vrot.lane.b32.xlu0 %v610, 95
        %v840 = vpop.permute.xlu0 %839
        %841 = vrot.lane.b32.xlu0 %v611, 95
        %v842 = vpop.permute.xlu0 %841
        %843 = vrot.lane.b32.xlu0 %v662, 95
        %v844 = vpop.permute.xlu0 %843
        %vm845 = vcmask 777216
        %v846 = vsel %vm845, %v834, %v836
        %v847 = vsel %vm845, %v836, %v838
        %v848 = vsel %vm845, %v840, %v842
        %v849 = vsel %vm845, %v842, %v844
        %856 = vrot.lane.b32.xlu0 %v701, 94
        %v857 = vpop.permute.xlu0 %856
        %858 = vrot.lane.b32.xlu0 %v702, 94
        %v859 = vpop.permute.xlu0 %858
        %860 = vrot.lane.b32.xlu0 %v703, 94
        %v861 = vpop.permute.xlu0 %860
        %862 = vrot.lane.b32.xlu0 %v704, 94
        %v863 = vpop.permute.xlu0 %862
        %864 = vrot.lane.b32.xlu0 %v705, 94
        %v865 = vpop.permute.xlu0 %864
        %866 = vrot.lane.b32.xlu0 %v706, 94
        %v867 = vpop.permute.xlu0 %866
        %vm868 = vcmask 769024
        %v869 = vsel %vm868, %v857, %v859
        %v870 = vsel %vm868, %v859, %v861
        %v871 = vsel %vm868, %v863, %v865
        %v872 = vsel %vm868, %v865, %v867
        %v873 = vld [vmem:[#allocation6] sm:$0xff]
        %v874 = vld [vmem:[#allocation6 + $0x8] sm:$0xff]
        %v875 = vld [vmem:[#allocation8] sm:$0xff]
        %877 = vset.pattern.permute.xlu0 0
        %878 = vperm.xlu0 %877, %v875
        %v879 = vpop.permute.xlu0 %878
        %887 = vrot.lane.b32.xlu0 %v623, 17
        %v888 = vpop.permute.xlu0 %887
        %889 = vrot.lane.b32.xlu0 %v624, 17
        %v890 = vpop.permute.xlu0 %889
        %891 = vrot.lane.b32.xlu0 %v625, 17
        %v892 = vpop.permute.xlu0 %891
        %893 = vrot.lane.b32.xlu0 %v626, 17
        %v894 = vpop.permute.xlu0 %893
        %895 = vrot.lane.b32.xlu0 %v627, 17
        %v896 = vpop.permute.xlu0 %895
        %897 = vrot.lane.b32.xlu0 %v628, 17
        %v898 = vpop.permute.xlu0 %897
        %899 = vrot.lane.b32.xlu0 %v725, 17
        %v900 = vpop.permute.xlu0 %899
        %901 = vrot.lane.b32.xlu0 %v726, 17
        %v902 = vpop.permute.xlu0 %901
        %903 = vrot.lane.b32.xlu0 %v718, 17
        %v904 = vpop.permute.xlu0 %903
        %905 = vrot.lane.b32.xlu0 %v727, 17
        %v906 = vpop.permute.xlu0 %905
        %907 = vrot.lane.b32.xlu0 %v728, 17
        %v908 = vpop.permute.xlu0 %907
        %909 = vrot.lane.b32.xlu0 %v724, 17
        %v910 = vpop.permute.xlu0 %909
        %911 = vrot.lane.b32.xlu0 %v748, 17
        %v912 = vpop.permute.xlu0 %911
        %913 = vrot.lane.b32.xlu0 %v749, 17
        %v914 = vpop.permute.xlu0 %913
        %915 = vrot.lane.b32.xlu0 %v740, 17
        %v916 = vpop.permute.xlu0 %915
        %917 = vrot.lane.b32.xlu0 %v750, 17
        %v918 = vpop.permute.xlu0 %917
        %919 = vrot.lane.b32.xlu0 %v751, 17
        %v920 = vpop.permute.xlu0 %919
        %921 = vrot.lane.b32.xlu0 %v746, 17
        %v922 = vpop.permute.xlu0 %921
        %923 = vrot.lane.b32.xlu0 %v771, 17
        %v924 = vpop.permute.xlu0 %923
        %925 = vrot.lane.b32.xlu0 %v772, 17
        %v926 = vpop.permute.xlu0 %925
        %927 = vrot.lane.b32.xlu0 %v763, 17
        %v928 = vpop.permute.xlu0 %927
        %929 = vrot.lane.b32.xlu0 %v773, 17
        %v930 = vpop.permute.xlu0 %929
        %931 = vrot.lane.b32.xlu0 %v774, 17
        %v932 = vpop.permute.xlu0 %931
        %933 = vrot.lane.b32.xlu0 %v769, 17
        %v934 = vpop.permute.xlu0 %933
        %935 = vrot.lane.b32.xlu0 %v776, 17
        %v936 = vpop.permute.xlu0 %935
        %937 = vrot.lane.b32.xlu0 %v783, 17
        %v938 = vpop.permute.xlu0 %937
        %939 = vrot.lane.b32.xlu0 %v778, 17
        %v940 = vpop.permute.xlu0 %939
        %941 = vrot.lane.b32.xlu0 %v780, 17
        %v942 = vpop.permute.xlu0 %941
        %943 = vrot.lane.b32.xlu0 %v784, 17
        %v944 = vpop.permute.xlu0 %943
        %945 = vrot.lane.b32.xlu0 %v782, 17
        %v946 = vpop.permute.xlu0 %945
        %947 = vrot.lane.b32.xlu0 %v792, 17
        %v948 = vpop.permute.xlu0 %947
        %949 = vrot.lane.b32.xlu0 %v804, 17
        %v950 = vpop.permute.xlu0 %949
        %951 = vrot.lane.b32.xlu0 %v805, 17
        %v952 = vpop.permute.xlu0 %951
        %953 = vrot.lane.b32.xlu0 %v798, 17
        %v954 = vpop.permute.xlu0 %953
        %955 = vrot.lane.b32.xlu0 %v806, 17
        %v956 = vpop.permute.xlu0 %955
        %957 = vrot.lane.b32.xlu0 %v807, 17
        %v958 = vpop.permute.xlu0 %957
        %959 = vrot.lane.b32.xlu0 %v815, 17
        %v960 = vpop.permute.xlu0 %959
        %961 = vrot.lane.b32.xlu0 %v827, 17
        %v962 = vpop.permute.xlu0 %961
        %963 = vrot.lane.b32.xlu0 %v828, 17
        %v964 = vpop.permute.xlu0 %963
        %965 = vrot.lane.b32.xlu0 %v821, 17
        %v966 = vpop.permute.xlu0 %965
        %967 = vrot.lane.b32.xlu0 %v829, 17
        %v968 = vpop.permute.xlu0 %967
        %969 = vrot.lane.b32.xlu0 %v830, 17
        %v970 = vpop.permute.xlu0 %969
        %971 = vrot.lane.b32.xlu0 %v834, 17
        %v972 = vpop.permute.xlu0 %971
        %973 = vrot.lane.b32.xlu0 %v846, 17
        %v974 = vpop.permute.xlu0 %973
        %975 = vrot.lane.b32.xlu0 %v847, 17
        %v976 = vpop.permute.xlu0 %975
        %977 = vrot.lane.b32.xlu0 %v840, 17
        %v978 = vpop.permute.xlu0 %977
        %979 = vrot.lane.b32.xlu0 %v848, 17
        %v980 = vpop.permute.xlu0 %979
        %981 = vrot.lane.b32.xlu0 %v849, 17
        %v982 = vpop.permute.xlu0 %981
        %983 = vrot.lane.b32.xlu0 %v857, 17
        %v984 = vpop.permute.xlu0 %983
        %985 = vrot.lane.b32.xlu0 %v869, 17
        %v986 = vpop.permute.xlu0 %985
        %987 = vrot.lane.b32.xlu0 %v870, 17
        %v988 = vpop.permute.xlu0 %987
        %989 = vrot.lane.b32.xlu0 %v863, 17
        %v990 = vpop.permute.xlu0 %989
        %991 = vrot.lane.b32.xlu0 %v871, 17
        %v992 = vpop.permute.xlu0 %991
        %993 = vrot.lane.b32.xlu0 %v872, 17
        %v994 = vpop.permute.xlu0 %993
        %v995 = vsel %vm537, %v888, %v890
        %v996 = vsel %vm537, %v890, %v892
        %v997 = vsel %vm537, %v894, %v896
        %v998 = vsel %vm537, %v896, %v898
        %v999 = vsel %vm537, %v900, %v902
        %v1000 = vsel %vm537, %v902, %v904
        %v1001 = vsel %vm537, %v906, %v908
        %v1002 = vsel %vm537, %v908, %v910
        %v1003 = vsel %vm537, %v912, %v914
        %v1004 = vsel %vm537, %v914, %v916
        %v1005 = vsel %vm537, %v918, %v920
        %v1006 = vsel %vm537, %v920, %v922
        %v1007 = vsel %vm537, %v924, %v926
        %v1008 = vsel %vm537, %v926, %v928
        %v1009 = vsel %vm537, %v930, %v932
        %v1010 = vsel %vm537, %v932, %v934
        %v1011 = vsel %vm537, %v936, %v938
        %v1012 = vsel %vm537, %v938, %v940
        %v1013 = vsel %vm537, %v942, %v944
        %v1014 = vsel %vm537, %v944, %v946
        %v1015 = vsel %vm537, %v948, %v950
        %v1016 = vsel %vm537, %v950, %v952
        %v1017 = vsel %vm537, %v954, %v956
        %v1018 = vsel %vm537, %v956, %v958
        %v1019 = vsel %vm537, %v960, %v962
        %v1020 = vsel %vm537, %v962, %v964
        %v1021 = vsel %vm537, %v966, %v968
        %v1022 = vsel %vm537, %v968, %v970
        %v1023 = vsel %vm537, %v972, %v974
        %v1024 = vsel %vm537, %v974, %v976
        %v1025 = vsel %vm537, %v978, %v980
        %v1026 = vsel %vm537, %v980, %v982
        %v1027 = vsel %vm537, %v984, %v986
        %v1028 = vsel %vm537, %v986, %v988
        %v1029 = vsel %vm537, %v990, %v992
        %v1030 = vsel %vm537, %v992, %v994
        %vm1067 = vcmask 130048
        %v1069 = vsel %vm1067, %v874, 0
        %1071 = vmatprep.subr.mxu0 %v996
        %1072 = vmatpush1.msra.mxu0 %v995
        %1073 = vmatprep.subr.mxu0 %v998
        %1074 = vmatpush1.msra.mxu0 %v997
        %1075 = vmatprep.subr.mxu0 %v1000
        %1076 = vmatpush1.msra.mxu0 %v999
        %1077 = vmatprep.subr.mxu0 %v1002
        %1078 = vmatpush1.msra.mxu0 %v1001
        %1079 = vmatprep.subr.mxu0 %v1004
        %1080 = vmatpush1.msra.mxu0 %v1003
        %1081 = vmatprep.subr.mxu0 %v1006
        %1082 = vmatpush1.msra.mxu0 %v1005
        %1083 = vmatprep.subr.mxu0 %v1008
        %1084 = vmatpush1.msra.mxu0 %v1007
        %1085 = vmatprep.subr.mxu0 %v1010
        %1086 = vmatpush1.msra.mxu0 %v1009
        %1087 = vmatprep.subr.mxu0 %v1012
        %1088 = vmatpush1.msra.mxu0 %v1011
        %1089 = vmatprep.subr.mxu0 %v1014
        %1090 = vmatpush1.msra.mxu0 %v1013
        %1091 = vmatprep.subr.mxu0 %v1016
        %1092 = vmatpush1.msra.mxu0 %v1015
        %1093 = vmatprep.subr.mxu0 %v1018
        %1094 = vmatpush1.msra.mxu0 %v1017
        %1095 = vmatprep.subr.mxu0 %v1020
        %1096 = vmatpush1.msra.mxu0 %v1019
        %1097 = vmatprep.subr.mxu0 %v1022
        %1098 = vmatpush1.msra.mxu0 %v1021
        %1099 = vmatprep.subr.mxu0 %v1024
        %1100 = vmatpush1.msra.mxu0 %v1023
        %1101 = vmatprep.subr.mxu0 %v1026
        %1102 = vmatpush1.msra.mxu0 %v1025
        %1103 = vmatprep.subr.mxu0 %v1028
        %1104 = vmatpush1.msra.mxu0 %v1027
        %1105 = vmatprep.subr.mxu0 %v1030
        %1106 = vmatpush1.msra.mxu0 %v1029
        %1107 = vmatprep.subr.mxu0 0.0
        %1108 = vmatpush1.msra.mxu0 0.0
        %1109 = vmatprep.subr.mxu0 0.0
        %1110 = vmatpush1.msra.mxu0 0.0
        %1111 = vmatprep.subr.mxu0 0.0
        %1112 = vmatpush1.msra.mxu0 0.0
        %1113 = vmatprep.subr.mxu0 0.0
        %1114 = vmatpush1.msra.mxu0 0.0
        %1115 = vmatprep.subr.mxu0 0.0
        %1116 = vmatpush1.msra.mxu0 0.0
        %1117 = vmatprep.subr.mxu0 0.0
        %1118 = vmatpush1.msra.mxu0 0.0
        %1119 = vmatprep.subr.mxu0 0.0
        %1120 = vmatpush1.msra.mxu0 0.0
        %1121 = vmatprep.subr.mxu0 0.0
        %1122 = vmatpush1.msra.mxu0 0.0
        %1123 = vmatprep.subr.mxu0 0.0
        %1124 = vmatpush1.msra.mxu0 0.0
        %1125 = vmatprep.subr.mxu0 0.0
        %1126 = vmatpush1.msra.mxu0 0.0
        %1127 = vmatprep.subr.mxu0 0.0
        %1128 = vmatpush1.msra.mxu0 0.0
        %1129 = vmatprep.subr.mxu0 0.0
        %1130 = vmatpush1.msra.mxu0 0.0
        %1131 = vmatprep.subr.mxu0 0.0
        %1132 = vmatpush1.msra.mxu0 0.0
        %1133 = vmatprep.subr.mxu0 0.0
        %1134 = vmatpush1.msra.mxu0 0.0
        %1135 = vmatprep.mubr.f32.mxu0 %v1069
        %1136 = vmatmul.mubr.f32.gmra.mrb[0].mxu0 %v873
        %v1137 = vpop.f32.mrb[0].mxu0
        %v1138 = vadd.f32 %v879, %v1137
        %v1139 = vpop.f32.mrb[0].mxu0
        %v1140 = vadd.f32 %v879, %v1139
        %1141 = vdwg.mxu0
        %vm1142 = vcmp.ge.f32.partialorder %v1138, 0.0
        %vm1143 = vcmp.ge.f32.partialorder %v1140, 0.0
        %v1144 = vmul.f32 %v1138, 0.2
        %v1145 = vmul.f32 %v1140, 0.2
        %v1146 = vsel %vm1142, %v1138, %v1144
        %v1147 = vsel %vm1143, %v1140, %v1145
        %1148 = vst [vmem:[#allocation2 + $0x48] sm:$0xff] %v1146
        %1149 = vst [vmem:[#allocation2 + $0x50] sm:$0xff] %v1147
        %v1150 = vld [vmem:[#allocation2] sm:$0xff]
        %v1151 = vld [vmem:[#allocation2 + $0x8] sm:$0xff]
        %v1152 = vld [vmem:[#allocation2 + $0x10] sm:$0xff]
        %v1153 = vld [vmem:[#allocation2 + $0x20] sm:$0xff]
        %v1154 = vld [vmem:[#allocation2 + $0x28] sm:$0xff]
        %v1155 = vld [vmem:[#allocation2 + $0x30] sm:$0xff]
        %v1156 = vld [vmem:[#allocation2 + $0x40] sm:$0xff]
        %v1157 = vld [vmem:[#allocation2 + $0x48] sm:$0xff]
        %v1158 = vld [vmem:[#allocation2 + $0x50] sm:$0xff]
        %v1159 = vmul.f32 %v1150, %v615
        %v1160 = vmul.f32 %v1151, %v619
        %v1161 = vmul.f32 %v1152, %v617
        %v1162 = vmul.f32 %v1153, %v615
        %v1163 = vmul.f32 %v1154, %v619
        %v1164 = vmul.f32 %v1155, %v617
        %v1165 = vmul.f32 %v1156, %v615
        %v1166 = vmul.f32 %v1157, %v619
        %v1167 = vmul.f32 %v1158, %v617
        %v1168 = vmul.f32 %v1150, %v632
        %v1169 = vmul.f32 %v1151, %v636
        %v1170 = vmul.f32 %v1152, %v634
        %v1171 = vmul.f32 %v1153, %v632
        %v1172 = vmul.f32 %v1154, %v636
        %v1173 = vmul.f32 %v1155, %v634
        %v1174 = vmul.f32 %v1156, %v632
        %v1175 = vmul.f32 %v1157, %v636
        %v1176 = vmul.f32 %v1158, %v634
        %v1177 = vmul.f32 %v1150, %v647
        %v1178 = vmul.f32 %v1151, %v651
        %v1179 = vmul.f32 %v1152, %v649
        %v1180 = vmul.f32 %v1153, %v647
        %v1181 = vmul.f32 %v1154, %v651
        %v1182 = vmul.f32 %v1155, %v649
        %v1183 = vmul.f32 %v1156, %v647
        %v1184 = vmul.f32 %v1157, %v651
        %v1185 = vmul.f32 %v1158, %v649
        %v1186 = vld [vmem:[#allocation2 + $0x18] sm:$0xff]
        %v1187 = vld [vmem:[#allocation2 + $0x38] sm:$0xff]
        %v1188 = vld [vmem:[#allocation2 + $0x58] sm:$0xff]
        %v1189 = vmul.f32 %v1151, %v664
        %v1190 = vmul.f32 %v1152, %v668
        %v1191 = vmul.f32 %v1186, %v666
        %v1192 = vmul.f32 %v1154, %v664
        %v1193 = vmul.f32 %v1155, %v668
        %v1194 = vmul.f32 %v1187, %v666
        %v1195 = vmul.f32 %v1157, %v664
        %v1196 = vmul.f32 %v1158, %v668
        %v1197 = vmul.f32 %v1188, %v666
        %v1198 = vmul.f32 %v1151, %v679
        %v1199 = vmul.f32 %v1152, %v683
        %v1200 = vmul.f32 %v1186, %v681
        %v1201 = vmul.f32 %v1154, %v679
        %v1202 = vmul.f32 %v1155, %v683
        %v1203 = vmul.f32 %v1187, %v681
        %v1204 = vmul.f32 %v1157, %v679
        %v1205 = vmul.f32 %v1158, %v683
        %v1206 = vmul.f32 %v1188, %v681
        %v1207 = vmul.f32 %v1151, %v694
        %v1208 = vmul.f32 %v1152, %v697
        %v1209 = vmul.f32 %v1186, %v696
        %v1210 = vmul.f32 %v1154, %v694
        %v1211 = vmul.f32 %v1155, %v697
        %v1212 = vmul.f32 %v1187, %v696
        %v1213 = vmul.f32 %v1157, %v694
        %v1214 = vmul.f32 %v1158, %v697
        %v1215 = vmul.f32 %v1188, %v696
        %1225 = vrot.lane.b32.xlu0 %v1150, 127
        %v1226 = vpop.permute.xlu0 %1225
        %1227 = vrot.lane.b32.xlu0 %v1151, 127
        %v1228 = vpop.permute.xlu0 %1227
        %1229 = vrot.lane.b32.xlu0 %v1152, 127
        %v1230 = vpop.permute.xlu0 %1229
        %1231 = vrot.lane.b32.xlu0 %v1153, 127
        %v1232 = vpop.permute.xlu0 %1231
        %1233 = vrot.lane.b32.xlu0 %v1154, 127
        %v1234 = vpop.permute.xlu0 %1233
        %1235 = vrot.lane.b32.xlu0 %v1155, 127
        %v1236 = vpop.permute.xlu0 %1235
        %1237 = vrot.lane.b32.xlu0 %v1156, 127
        %v1238 = vpop.permute.xlu0 %1237
        %1239 = vrot.lane.b32.xlu0 %v1157, 127
        %v1240 = vpop.permute.xlu0 %1239
        %1241 = vrot.lane.b32.xlu0 %v1158, 127
        %v1242 = vpop.permute.xlu0 %1241
        %v1243 = vsel %vm650, %v1226, %v1228
        %v1244 = vsel %vm650, %v1228, %v1230
        %v1245 = vsel %vm650, %v1232, %v1234
        %v1246 = vsel %vm650, %v1234, %v1236
        %v1247 = vsel %vm650, %v1238, %v1240
        %v1248 = vsel %vm650, %v1240, %v1242
        %1258 = vrot.lane.b32.xlu0 %v1168, 126
        %v1259 = vpop.permute.xlu0 %1258
        %1260 = vrot.lane.b32.xlu0 %v1169, 126
        %v1261 = vpop.permute.xlu0 %1260
        %1262 = vrot.lane.b32.xlu0 %v1170, 126
        %v1263 = vpop.permute.xlu0 %1262
        %1264 = vrot.lane.b32.xlu0 %v1171, 126
        %v1265 = vpop.permute.xlu0 %1264
        %1266 = vrot.lane.b32.xlu0 %v1172, 126
        %v1267 = vpop.permute.xlu0 %1266
        %1268 = vrot.lane.b32.xlu0 %v1173, 126
        %v1269 = vpop.permute.xlu0 %1268
        %1270 = vrot.lane.b32.xlu0 %v1174, 126
        %v1271 = vpop.permute.xlu0 %1270
        %1272 = vrot.lane.b32.xlu0 %v1175, 126
        %v1273 = vpop.permute.xlu0 %1272
        %1274 = vrot.lane.b32.xlu0 %v1176, 126
        %v1275 = vpop.permute.xlu0 %1274
        %v1276 = vsel %vm747, %v1259, %v1261
        %v1277 = vsel %vm747, %v1261, %v1263
        %v1278 = vsel %vm747, %v1265, %v1267
        %v1279 = vsel %vm747, %v1267, %v1269
        %v1280 = vsel %vm747, %v1271, %v1273
        %v1281 = vsel %vm747, %v1273, %v1275
        %1291 = vrot.lane.b32.xlu0 %v1177, 112
        %v1292 = vpop.permute.xlu0 %1291
        %1293 = vrot.lane.b32.xlu0 %v1178, 112
        %v1294 = vpop.permute.xlu0 %1293
        %1295 = vrot.lane.b32.xlu0 %v1179, 112
        %v1296 = vpop.permute.xlu0 %1295
        %1297 = vrot.lane.b32.xlu0 %v1180, 112
        %v1298 = vpop.permute.xlu0 %1297
        %1299 = vrot.lane.b32.xlu0 %v1181, 112
        %v1300 = vpop.permute.xlu0 %1299
        %1301 = vrot.lane.b32.xlu0 %v1182, 112
        %v1302 = vpop.permute.xlu0 %1301
        %1303 = vrot.lane.b32.xlu0 %v1183, 112
        %v1304 = vpop.permute.xlu0 %1303
        %1305 = vrot.lane.b32.xlu0 %v1184, 112
        %v1306 = vpop.permute.xlu0 %1305
        %1307 = vrot.lane.b32.xlu0 %v1185, 112
        %v1308 = vpop.permute.xlu0 %1307
        %v1309 = vsel %vm770, %v1292, %v1294
        %v1310 = vsel %vm770, %v1294, %v1296
        %v1311 = vsel %vm770, %v1298, %v1300
        %v1312 = vsel %vm770, %v1300, %v1302
        %v1313 = vsel %vm770, %v1304, %v1306
        %v1314 = vsel %vm770, %v1306, %v1308
        %1315 = vrot.lane.b32.xlu0 %v1151, 111
        %v1316 = vpop.permute.xlu0 %1315
        %1317 = vrot.lane.b32.xlu0 %v1152, 111
        %v1318 = vpop.permute.xlu0 %1317
        %1319 = vrot.lane.b32.xlu0 %v1154, 111
        %v1320 = vpop.permute.xlu0 %1319
        %1321 = vrot.lane.b32.xlu0 %v1155, 111
        %v1322 = vpop.permute.xlu0 %1321
        %1323 = vrot.lane.b32.xlu0 %v1157, 111
        %v1324 = vpop.permute.xlu0 %1323
        %1325 = vrot.lane.b32.xlu0 %v1158, 111
        %v1326 = vpop.permute.xlu0 %1325
        %v1327 = vsel %vm618, %v1316, %v1318
        %v1328 = vsel %vm618, %v1320, %v1322
        %v1329 = vsel %vm618, %v1324, %v1326
        %1339 = vrot.lane.b32.xlu0 %v1189, 110
        %v1340 = vpop.permute.xlu0 %1339
        %1341 = vrot.lane.b32.xlu0 %v1190, 110
        %v1342 = vpop.permute.xlu0 %1341
        %1343 = vrot.lane.b32.xlu0 %v1191, 110
        %v1344 = vpop.permute.xlu0 %1343
        %1345 = vrot.lane.b32.xlu0 %v1192, 110
        %v1346 = vpop.permute.xlu0 %1345
        %1347 = vrot.lane.b32.xlu0 %v1193, 110
        %v1348 = vpop.permute.xlu0 %1347
        %1349 = vrot.lane.b32.xlu0 %v1194, 110
        %v1350 = vpop.permute.xlu0 %1349
        %1351 = vrot.lane.b32.xlu0 %v1195, 110
        %v1352 = vpop.permute.xlu0 %1351
        %1353 = vrot.lane.b32.xlu0 %v1196, 110
        %v1354 = vpop.permute.xlu0 %1353
        %1355 = vrot.lane.b32.xlu0 %v1197, 110
        %v1356 = vpop.permute.xlu0 %1355
        %v1357 = vsel %vm803, %v1340, %v1342
        %v1358 = vsel %vm803, %v1342, %v1344
        %v1359 = vsel %vm803, %v1346, %v1348
        %v1360 = vsel %vm803, %v1348, %v1350
        %v1361 = vsel %vm803, %v1352, %v1354
        %v1362 = vsel %vm803, %v1354, %v1356
        %1372 = vrot.lane.b32.xlu0 %v1198, 96
        %v1373 = vpop.permute.xlu0 %1372
        %1374 = vrot.lane.b32.xlu0 %v1199, 96
        %v1375 = vpop.permute.xlu0 %1374
        %1376 = vrot.lane.b32.xlu0 %v1200, 96
        %v1377 = vpop.permute.xlu0 %1376
        %1378 = vrot.lane.b32.xlu0 %v1201, 96
        %v1379 = vpop.permute.xlu0 %1378
        %1380 = vrot.lane.b32.xlu0 %v1202, 96
        %v1381 = vpop.permute.xlu0 %1380
        %1382 = vrot.lane.b32.xlu0 %v1203, 96
        %v1383 = vpop.permute.xlu0 %1382
        %1384 = vrot.lane.b32.xlu0 %v1204, 96
        %v1385 = vpop.permute.xlu0 %1384
        %1386 = vrot.lane.b32.xlu0 %v1205, 96
        %v1387 = vpop.permute.xlu0 %1386
        %1388 = vrot.lane.b32.xlu0 %v1206, 96
        %v1389 = vpop.permute.xlu0 %1388
        %v1390 = vsel %vm826, %v1373, %v1375
        %v1391 = vsel %vm826, %v1375, %v1377
        %v1392 = vsel %vm826, %v1379, %v1381
        %v1393 = vsel %vm826, %v1381, %v1383
        %v1394 = vsel %vm826, %v1385, %v1387
        %v1395 = vsel %vm826, %v1387, %v1389
        %1399 = vrot.lane.b32.xlu0 %v1151, 95
        %v1400 = vpop.permute.xlu0 %1399
        %1401 = vrot.lane.b32.xlu0 %v1152, 95
        %v1402 = vpop.permute.xlu0 %1401
        %1403 = vrot.lane.b32.xlu0 %v1186, 95
        %v1404 = vpop.permute.xlu0 %1403
        %1405 = vrot.lane.b32.xlu0 %v1154, 95
        %v1406 = vpop.permute.xlu0 %1405
        %1407 = vrot.lane.b32.xlu0 %v1155, 95
        %v1408 = vpop.permute.xlu0 %1407
        %1409 = vrot.lane.b32.xlu0 %v1187, 95
        %v1410 = vpop.permute.xlu0 %1409
        %1411 = vrot.lane.b32.xlu0 %v1157, 95
        %v1412 = vpop.permute.xlu0 %1411
        %1413 = vrot.lane.b32.xlu0 %v1158, 95
        %v1414 = vpop.permute.xlu0 %1413
        %1415 = vrot.lane.b32.xlu0 %v1188, 95
        %v1416 = vpop.permute.xlu0 %1415
        %v1417 = vsel %vm845, %v1400, %v1402
        %v1418 = vsel %vm845, %v1402, %v1404
        %v1419 = vsel %vm845, %v1406, %v1408
        %v1420 = vsel %vm845, %v1408, %v1410
        %v1421 = vsel %vm845, %v1412, %v1414
        %v1422 = vsel %vm845, %v1414, %v1416
        %1432 = vrot.lane.b32.xlu0 %v1207, 94
        %v1433 = vpop.permute.xlu0 %1432
        %1434 = vrot.lane.b32.xlu0 %v1208, 94
        %v1435 = vpop.permute.xlu0 %1434
        %1436 = vrot.lane.b32.xlu0 %v1209, 94
        %v1437 = vpop.permute.xlu0 %1436
        %1438 = vrot.lane.b32.xlu0 %v1210, 94
        %v1439 = vpop.permute.xlu0 %1438
        %1440 = vrot.lane.b32.xlu0 %v1211, 94
        %v1441 = vpop.permute.xlu0 %1440
        %1442 = vrot.lane.b32.xlu0 %v1212, 94
        %v1443 = vpop.permute.xlu0 %1442
        %1444 = vrot.lane.b32.xlu0 %v1213, 94
        %v1445 = vpop.permute.xlu0 %1444
        %1446 = vrot.lane.b32.xlu0 %v1214, 94
        %v1447 = vpop.permute.xlu0 %1446
        %1448 = vrot.lane.b32.xlu0 %v1215, 94
        %v1449 = vpop.permute.xlu0 %1448
        %v1450 = vsel %vm868, %v1433, %v1435
        %v1451 = vsel %vm868, %v1435, %v1437
        %v1452 = vsel %vm868, %v1439, %v1441
        %v1453 = vsel %vm868, %v1441, %v1443
        %v1454 = vsel %vm868, %v1445, %v1447
        %v1455 = vsel %vm868, %v1447, %v1449
        %v1456 = vld [vmem:[#allocation9] sm:$0xff]
        %v1457 = vld [vmem:[#allocation9 + $0x8] sm:$0xff]
        %v1458 = vld [vmem:[#allocation11] sm:$0xff]
        %1460 = vset.pattern.permute.xlu0 0
        %1461 = vperm.xlu0 %1460, %v1458
        %v1462 = vpop.permute.xlu0 %1461
        %1473 = vrot.lane.b32.xlu0 %v1159, 17
        %v1474 = vpop.permute.xlu0 %1473
        %1475 = vrot.lane.b32.xlu0 %v1160, 17
        %v1476 = vpop.permute.xlu0 %1475
        %1477 = vrot.lane.b32.xlu0 %v1161, 17
        %v1478 = vpop.permute.xlu0 %1477
        %1479 = vrot.lane.b32.xlu0 %v1162, 17
        %v1480 = vpop.permute.xlu0 %1479
        %1481 = vrot.lane.b32.xlu0 %v1163, 17
        %v1482 = vpop.permute.xlu0 %1481
        %1483 = vrot.lane.b32.xlu0 %v1164, 17
        %v1484 = vpop.permute.xlu0 %1483
        %1485 = vrot.lane.b32.xlu0 %v1165, 17
        %v1486 = vpop.permute.xlu0 %1485
        %1487 = vrot.lane.b32.xlu0 %v1166, 17
        %v1488 = vpop.permute.xlu0 %1487
        %1489 = vrot.lane.b32.xlu0 %v1167, 17
        %v1490 = vpop.permute.xlu0 %1489
        %1491 = vrot.lane.b32.xlu0 %v1243, 17
        %v1492 = vpop.permute.xlu0 %1491
        %1493 = vrot.lane.b32.xlu0 %v1244, 17
        %v1494 = vpop.permute.xlu0 %1493
        %1495 = vrot.lane.b32.xlu0 %v1230, 17
        %v1496 = vpop.permute.xlu0 %1495
        %1497 = vrot.lane.b32.xlu0 %v1245, 17
        %v1498 = vpop.permute.xlu0 %1497
        %1499 = vrot.lane.b32.xlu0 %v1246, 17
        %v1500 = vpop.permute.xlu0 %1499
        %1501 = vrot.lane.b32.xlu0 %v1236, 17
        %v1502 = vpop.permute.xlu0 %1501
        %1503 = vrot.lane.b32.xlu0 %v1247, 17
        %v1504 = vpop.permute.xlu0 %1503
        %1505 = vrot.lane.b32.xlu0 %v1248, 17
        %v1506 = vpop.permute.xlu0 %1505
        %1507 = vrot.lane.b32.xlu0 %v1242, 17
        %v1508 = vpop.permute.xlu0 %1507
        %1509 = vrot.lane.b32.xlu0 %v1276, 17
        %v1510 = vpop.permute.xlu0 %1509
        %1511 = vrot.lane.b32.xlu0 %v1277, 17
        %v1512 = vpop.permute.xlu0 %1511
        %1513 = vrot.lane.b32.xlu0 %v1263, 17
        %v1514 = vpop.permute.xlu0 %1513
        %1515 = vrot.lane.b32.xlu0 %v1278, 17
        %v1516 = vpop.permute.xlu0 %1515
        %1517 = vrot.lane.b32.xlu0 %v1279, 17
        %v1518 = vpop.permute.xlu0 %1517
        %1519 = vrot.lane.b32.xlu0 %v1269, 17
        %v1520 = vpop.permute.xlu0 %1519
        %1521 = vrot.lane.b32.xlu0 %v1280, 17
        %v1522 = vpop.permute.xlu0 %1521
        %1523 = vrot.lane.b32.xlu0 %v1281, 17
        %v1524 = vpop.permute.xlu0 %1523
        %1525 = vrot.lane.b32.xlu0 %v1275, 17
        %v1526 = vpop.permute.xlu0 %1525
        %1527 = vrot.lane.b32.xlu0 %v1309, 17
        %v1528 = vpop.permute.xlu0 %1527
        %1529 = vrot.lane.b32.xlu0 %v1310, 17
        %v1530 = vpop.permute.xlu0 %1529
        %1531 = vrot.lane.b32.xlu0 %v1296, 17
        %v1532 = vpop.permute.xlu0 %1531
        %1533 = vrot.lane.b32.xlu0 %v1311, 17
        %v1534 = vpop.permute.xlu0 %1533
        %1535 = vrot.lane.b32.xlu0 %v1312, 17
        %v1536 = vpop.permute.xlu0 %1535
        %1537 = vrot.lane.b32.xlu0 %v1302, 17
        %v1538 = vpop.permute.xlu0 %1537
        %1539 = vrot.lane.b32.xlu0 %v1313, 17
        %v1540 = vpop.permute.xlu0 %1539
        %1541 = vrot.lane.b32.xlu0 %v1314, 17
        %v1542 = vpop.permute.xlu0 %1541
        %1543 = vrot.lane.b32.xlu0 %v1308, 17
        %v1544 = vpop.permute.xlu0 %1543
        %1545 = vrot.lane.b32.xlu0 %v1316, 17
        %v1546 = vpop.permute.xlu0 %1545
        %1547 = vrot.lane.b32.xlu0 %v1327, 17
        %v1548 = vpop.permute.xlu0 %1547
        %1549 = vrot.lane.b32.xlu0 %v1318, 17
        %v1550 = vpop.permute.xlu0 %1549
        %1551 = vrot.lane.b32.xlu0 %v1320, 17
        %v1552 = vpop.permute.xlu0 %1551
        %1553 = vrot.lane.b32.xlu0 %v1328, 17
        %v1554 = vpop.permute.xlu0 %1553
        %1555 = vrot.lane.b32.xlu0 %v1322, 17
        %v1556 = vpop.permute.xlu0 %1555
        %1557 = vrot.lane.b32.xlu0 %v1324, 17
        %v1558 = vpop.permute.xlu0 %1557
        %1559 = vrot.lane.b32.xlu0 %v1329, 17
        %v1560 = vpop.permute.xlu0 %1559
        %1561 = vrot.lane.b32.xlu0 %v1326, 17
        %v1562 = vpop.permute.xlu0 %1561
        %1563 = vrot.lane.b32.xlu0 %v1340, 17
        %v1564 = vpop.permute.xlu0 %1563
        %1565 = vrot.lane.b32.xlu0 %v1357, 17
        %v1566 = vpop.permute.xlu0 %1565
        %1567 = vrot.lane.b32.xlu0 %v1358, 17
        %v1568 = vpop.permute.xlu0 %1567
        %1569 = vrot.lane.b32.xlu0 %v1346, 17
        %v1570 = vpop.permute.xlu0 %1569
        %1571 = vrot.lane.b32.xlu0 %v1359, 17
        %v1572 = vpop.permute.xlu0 %1571
        %1573 = vrot.lane.b32.xlu0 %v1360, 17
        %v1574 = vpop.permute.xlu0 %1573
        %1575 = vrot.lane.b32.xlu0 %v1352, 17
        %v1576 = vpop.permute.xlu0 %1575
        %1577 = vrot.lane.b32.xlu0 %v1361, 17
        %v1578 = vpop.permute.xlu0 %1577
        %1579 = vrot.lane.b32.xlu0 %v1362, 17
        %v1580 = vpop.permute.xlu0 %1579
        %1581 = vrot.lane.b32.xlu0 %v1373, 17
        %v1582 = vpop.permute.xlu0 %1581
        %1583 = vrot.lane.b32.xlu0 %v1390, 17
        %v1584 = vpop.permute.xlu0 %1583
        %1585 = vrot.lane.b32.xlu0 %v1391, 17
        %v1586 = vpop.permute.xlu0 %1585
        %1587 = vrot.lane.b32.xlu0 %v1379, 17
        %v1588 = vpop.permute.xlu0 %1587
        %1589 = vrot.lane.b32.xlu0 %v1392, 17
        %v1590 = vpop.permute.xlu0 %1589
        %1591 = vrot.lane.b32.xlu0 %v1393, 17
        %v1592 = vpop.permute.xlu0 %1591
        %1593 = vrot.lane.b32.xlu0 %v1385, 17
        %v1594 = vpop.permute.xlu0 %1593
        %1595 = vrot.lane.b32.xlu0 %v1394, 17
        %v1596 = vpop.permute.xlu0 %1595
        %1597 = vrot.lane.b32.xlu0 %v1395, 17
        %v1598 = vpop.permute.xlu0 %1597
        %1599 = vrot.lane.b32.xlu0 %v1400, 17
        %v1600 = vpop.permute.xlu0 %1599
        %1601 = vrot.lane.b32.xlu0 %v1417, 17
        %v1602 = vpop.permute.xlu0 %1601
        %1603 = vrot.lane.b32.xlu0 %v1418, 17
        %v1604 = vpop.permute.xlu0 %1603
        %1605 = vrot.lane.b32.xlu0 %v1406, 17
        %v1606 = vpop.permute.xlu0 %1605
        %1607 = vrot.lane.b32.xlu0 %v1419, 17
        %v1608 = vpop.permute.xlu0 %1607
        %1609 = vrot.lane.b32.xlu0 %v1420, 17
        %v1610 = vpop.permute.xlu0 %1609
        %1611 = vrot.lane.b32.xlu0 %v1412, 17
        %v1612 = vpop.permute.xlu0 %1611
        %1613 = vrot.lane.b32.xlu0 %v1421, 17
        %v1614 = vpop.permute.xlu0 %1613
        %1615 = vrot.lane.b32.xlu0 %v1422, 17
        %v1616 = vpop.permute.xlu0 %1615
        %1617 = vrot.lane.b32.xlu0 %v1433, 17
        %v1618 = vpop.permute.xlu0 %1617
        %1619 = vrot.lane.b32.xlu0 %v1450, 17
        %v1620 = vpop.permute.xlu0 %1619
        %1621 = vrot.lane.b32.xlu0 %v1451, 17
        %v1622 = vpop.permute.xlu0 %1621
        %1623 = vrot.lane.b32.xlu0 %v1439, 17
        %v1624 = vpop.permute.xlu0 %1623
        %1625 = vrot.lane.b32.xlu0 %v1452, 17
        %v1626 = vpop.permute.xlu0 %1625
        %1627 = vrot.lane.b32.xlu0 %v1453, 17
        %v1628 = vpop.permute.xlu0 %1627
        %1629 = vrot.lane.b32.xlu0 %v1445, 17
        %v1630 = vpop.permute.xlu0 %1629
        %1631 = vrot.lane.b32.xlu0 %v1454, 17
        %v1632 = vpop.permute.xlu0 %1631
        %1633 = vrot.lane.b32.xlu0 %v1455, 17
        %v1634 = vpop.permute.xlu0 %1633
        %v1635 = vsel %vm537, %v1474, %v1476
        %v1636 = vsel %vm537, %v1476, %v1478
        %v1637 = vsel %vm537, %v1480, %v1482
        %v1638 = vsel %vm537, %v1482, %v1484
        %v1639 = vsel %vm537, %v1486, %v1488
        %v1640 = vsel %vm537, %v1488, %v1490
        %v1641 = vsel %vm537, %v1492, %v1494
        %v1642 = vsel %vm537, %v1494, %v1496
        %v1643 = vsel %vm537, %v1498, %v1500
        %v1644 = vsel %vm537, %v1500, %v1502
        %v1645 = vsel %vm537, %v1504, %v1506
        %v1646 = vsel %vm537, %v1506, %v1508
        %v1647 = vsel %vm537, %v1510, %v1512
        %v1648 = vsel %vm537, %v1512, %v1514
        %v1649 = vsel %vm537, %v1516, %v1518
        %v1650 = vsel %vm537, %v1518, %v1520
        %v1651 = vsel %vm537, %v1522, %v1524
        %v1652 = vsel %vm537, %v1524, %v1526
        %v1653 = vsel %vm537, %v1528, %v1530
        %v1654 = vsel %vm537, %v1530, %v1532
        %v1655 = vsel %vm537, %v1534, %v1536
        %v1656 = vsel %vm537, %v1536, %v1538
        %v1657 = vsel %vm537, %v1540, %v1542
        %v1658 = vsel %vm537, %v1542, %v1544
        %v1659 = vsel %vm537, %v1546, %v1548
        %v1660 = vsel %vm537, %v1548, %v1550
        %v1661 = vsel %vm537, %v1552, %v1554
        %v1662 = vsel %vm537, %v1554, %v1556
        %v1663 = vsel %vm537, %v1558, %v1560
        %v1664 = vsel %vm537, %v1560, %v1562
        %v1665 = vsel %vm537, %v1564, %v1566
        %v1666 = vsel %vm537, %v1566, %v1568
        %v1667 = vsel %vm537, %v1570, %v1572
        %v1668 = vsel %vm537, %v1572, %v1574
        %v1669 = vsel %vm537, %v1576, %v1578
        %v1670 = vsel %vm537, %v1578, %v1580
        %v1671 = vsel %vm537, %v1582, %v1584
        %v1672 = vsel %vm537, %v1584, %v1586
        %v1673 = vsel %vm537, %v1588, %v1590
        %v1674 = vsel %vm537, %v1590, %v1592
        %v1675 = vsel %vm537, %v1594, %v1596
        %v1676 = vsel %vm537, %v1596, %v1598
        %v1677 = vsel %vm537, %v1600, %v1602
        %v1678 = vsel %vm537, %v1602, %v1604
        %v1679 = vsel %vm537, %v1606, %v1608
        %v1680 = vsel %vm537, %v1608, %v1610
        %v1681 = vsel %vm537, %v1612, %v1614
        %v1682 = vsel %vm537, %v1614, %v1616
        %v1683 = vsel %vm537, %v1618, %v1620
        %v1684 = vsel %vm537, %v1620, %v1622
        %v1685 = vsel %vm537, %v1624, %v1626
        %v1686 = vsel %vm537, %v1626, %v1628
        %v1687 = vsel %vm537, %v1630, %v1632
        %v1688 = vsel %vm537, %v1632, %v1634
        %vm1743 = vcmask 719872
        %v1745 = vsel %vm1743, %v1457, 0
        %1747 = vmatprep.subr.mxu0 %v1636
        %1748 = vmatpush1.msra.mxu0 %v1635
        %1749 = vmatprep.subr.mxu0 %v1638
        %1750 = vmatpush1.msra.mxu0 %v1637
        %1751 = vmatprep.subr.mxu0 %v1640
        %1752 = vmatpush1.msra.mxu0 %v1639
        %1753 = vmatprep.subr.mxu0 %v1642
        %1754 = vmatpush1.msra.mxu0 %v1641
        %1755 = vmatprep.subr.mxu0 %v1644
        %1756 = vmatpush1.msra.mxu0 %v1643
        %1757 = vmatprep.subr.mxu0 %v1646
        %1758 = vmatpush1.msra.mxu0 %v1645
        %1759 = vmatprep.subr.mxu0 %v1648
        %1760 = vmatpush1.msra.mxu0 %v1647
        %1761 = vmatprep.subr.mxu0 %v1650
        %1762 = vmatpush1.msra.mxu0 %v1649
        %1763 = vmatprep.subr.mxu0 %v1652
        %1764 = vmatpush1.msra.mxu0 %v1651
        %1765 = vmatprep.subr.mxu0 %v1654
        %1766 = vmatpush1.msra.mxu0 %v1653
        %1767 = vmatprep.subr.mxu0 %v1656
        %1768 = vmatpush1.msra.mxu0 %v1655
        %1769 = vmatprep.subr.mxu0 %v1658
        %1770 = vmatpush1.msra.mxu0 %v1657
        %1771 = vmatprep.subr.mxu0 %v1660
        %1772 = vmatpush1.msra.mxu0 %v1659
        %1773 = vmatprep.subr.mxu0 %v1662
        %1774 = vmatpush1.msra.mxu0 %v1661
        %1775 = vmatprep.subr.mxu0 %v1664
        %1776 = vmatpush1.msra.mxu0 %v1663
        %1777 = vmatprep.subr.mxu0 %v1666
        %1778 = vmatpush1.msra.mxu0 %v1665
        %1779 = vmatprep.subr.mxu0 %v1668
        %1780 = vmatpush1.msra.mxu0 %v1667
        %1781 = vmatprep.subr.mxu0 %v1670
        %1782 = vmatpush1.msra.mxu0 %v1669
        %1783 = vmatprep.subr.mxu0 %v1672
        %1784 = vmatpush1.msra.mxu0 %v1671
        %1785 = vmatprep.subr.mxu0 %v1674
        %1786 = vmatpush1.msra.mxu0 %v1673
        %1787 = vmatprep.subr.mxu0 %v1676
        %1788 = vmatpush1.msra.mxu0 %v1675
        %1789 = vmatprep.subr.mxu0 %v1678
        %1790 = vmatpush1.msra.mxu0 %v1677
        %1791 = vmatprep.subr.mxu0 %v1680
        %1792 = vmatpush1.msra.mxu0 %v1679
        %1793 = vmatprep.subr.mxu0 %v1682
        %1794 = vmatpush1.msra.mxu0 %v1681
        %1795 = vmatprep.subr.mxu0 %v1684
        %1796 = vmatpush1.msra.mxu0 %v1683
        %1797 = vmatprep.subr.mxu0 %v1686
        %1798 = vmatpush1.msra.mxu0 %v1685
        %1799 = vmatprep.subr.mxu0 %v1688
        %1800 = vmatpush1.msra.mxu0 %v1687
        %1801 = vmatprep.subr.mxu0 0.0
        %1802 = vmatpush1.msra.mxu0 0.0
        %1803 = vmatprep.subr.mxu0 0.0
        %1804 = vmatpush1.msra.mxu0 0.0
        %1805 = vmatprep.subr.mxu0 0.0
        %1806 = vmatpush1.msra.mxu0 0.0
        %1807 = vmatprep.subr.mxu0 0.0
        %1808 = vmatpush1.msra.mxu0 0.0
        %1809 = vmatprep.subr.mxu0 0.0
        %1810 = vmatpush1.msra.mxu0 0.0
        %1811 = vmatprep.mubr.f32.mxu0 %v1745
        %1812 = vmatmul.mubr.f32.gmra.mrb[0].mxu0 %v1456
        %v1813 = vpop.f32.mrb[0].mxu0
        %v1814 = vadd.f32 %v1462, %v1813
        %v1815 = vpop.f32.mrb[0].mxu0
        %v1816 = vadd.f32 %v1462, %v1815
        %1817 = vdwg.mxu0
        %vm1818 = vcmp.ge.f32.partialorder %v1814, 0.0
        %vm1819 = vcmp.ge.f32.partialorder %v1816, 0.0
        %v1820 = vmul.f32 %v1814, 0.2
        %v1821 = vmul.f32 %v1816, 0.2
        %v1822 = vsel %vm1818, %v1814, %v1820
        %v1823 = vsel %vm1819, %v1816, %v1821
        %1824 = vst [vmem:[#allocation2 + $0x68] sm:$0xff] %v1822
        %1825 = vst [vmem:[#allocation2 + $0x70] sm:$0xff] %v1823
        %v1826 = vld [vmem:[#allocation2] sm:$0xff]
        %v1827 = vld [vmem:[#allocation2 + $0x8] sm:$0xff]
        %v1828 = vld [vmem:[#allocation2 + $0x10] sm:$0xff]
        %v1829 = vld [vmem:[#allocation2 + $0x20] sm:$0xff]
        %v1830 = vld [vmem:[#allocation2 + $0x28] sm:$0xff]
        %v1831 = vld [vmem:[#allocation2 + $0x30] sm:$0xff]
        %v1832 = vld [vmem:[#allocation2 + $0x40] sm:$0xff]
        %v1833 = vld [vmem:[#allocation2 + $0x48] sm:$0xff]
        %v1834 = vld [vmem:[#allocation2 + $0x50] sm:$0xff]
        %v1835 = vld [vmem:[#allocation2 + $0x60] sm:$0xff]
        %v1836 = vld [vmem:[#allocation2 + $0x68] sm:$0xff]
        %v1837 = vld [vmem:[#allocation2 + $0x70] sm:$0xff]
        %v1838 = vmul.f32 %v1826, %v615
        %v1839 = vmul.f32 %v1827, %v619
        %v1840 = vmul.f32 %v1828, %v617
        %v1841 = vmul.f32 %v1829, %v615
        %v1842 = vmul.f32 %v1830, %v619
        %v1843 = vmul.f32 %v1831, %v617
        %v1844 = vmul.f32 %v1832, %v615
        %v1845 = vmul.f32 %v1833, %v619
        %v1846 = vmul.f32 %v1834, %v617
        %v1847 = vmul.f32 %v1835, %v615
        %v1848 = vmul.f32 %v1836, %v619
        %v1849 = vmul.f32 %v1837, %v617
        %v1850 = vmul.f32 %v1826, %v632
        %v1851 = vmul.f32 %v1827, %v636
        %v1852 = vmul.f32 %v1828, %v634
        %v1853 = vmul.f32 %v1829, %v632
        %v1854 = vmul.f32 %v1830, %v636
        %v1855 = vmul.f32 %v1831, %v634
        %v1856 = vmul.f32 %v1832, %v632
        %v1857 = vmul.f32 %v1833, %v636
        %v1858 = vmul.f32 %v1834, %v634
        %v1859 = vmul.f32 %v1835, %v632
        %v1860 = vmul.f32 %v1836, %v636
        %v1861 = vmul.f32 %v1837, %v634
        %v1862 = vmul.f32 %v1826, %v647
        %v1863 = vmul.f32 %v1827, %v651
        %v1864 = vmul.f32 %v1828, %v649
        %v1865 = vmul.f32 %v1829, %v647
        %v1866 = vmul.f32 %v1830, %v651
        %v1867 = vmul.f32 %v1831, %v649
        %v1868 = vmul.f32 %v1832, %v647
        %v1869 = vmul.f32 %v1833, %v651
        %v1870 = vmul.f32 %v1834, %v649
        %v1871 = vmul.f32 %v1835, %v647
        %v1872 = vmul.f32 %v1836, %v651
        %v1873 = vmul.f32 %v1837, %v649
        %v1874 = vld [vmem:[#allocation2 + $0x18] sm:$0xff]
        %v1875 = vld [vmem:[#allocation2 + $0x38] sm:$0xff]
        %v1876 = vld [vmem:[#allocation2 + $0x58] sm:$0xff]
        %v1877 = vld [vmem:[#allocation2 + $0x78] sm:$0xff]
        %v1878 = vmul.f32 %v1827, %v664
        %v1879 = vmul.f32 %v1828, %v668
        %v1880 = vmul.f32 %v1874, %v666
        %v1881 = vmul.f32 %v1830, %v664
        %v1882 = vmul.f32 %v1831, %v668
        %v1883 = vmul.f32 %v1875, %v666
        %v1884 = vmul.f32 %v1833, %v664
        %v1885 = vmul.f32 %v1834, %v668
        %v1886 = vmul.f32 %v1876, %v666
        %v1887 = vmul.f32 %v1836, %v664
        %v1888 = vmul.f32 %v1837, %v668
        %v1889 = vmul.f32 %v1877, %v666
        %v1890 = vmul.f32 %v1827, %v679
        %v1891 = vmul.f32 %v1828, %v683
        %v1892 = vmul.f32 %v1874, %v681
        %v1893 = vmul.f32 %v1830, %v679
        %v1894 = vmul.f32 %v1831, %v683
        %v1895 = vmul.f32 %v1875, %v681
        %v1896 = vmul.f32 %v1833, %v679
        %v1897 = vmul.f32 %v1834, %v683
        %v1898 = vmul.f32 %v1876, %v681
        %v1899 = vmul.f32 %v1836, %v679
        %v1900 = vmul.f32 %v1837, %v683
        %v1901 = vmul.f32 %v1877, %v681
        %v1902 = vmul.f32 %v1827, %v694
        %v1903 = vmul.f32 %v1828, %v697
        %v1904 = vmul.f32 %v1874, %v696
        %v1905 = vmul.f32 %v1830, %v694
        %v1906 = vmul.f32 %v1831, %v697
        %v1907 = vmul.f32 %v1875, %v696
        %v1908 = vmul.f32 %v1833, %v694
        %v1909 = vmul.f32 %v1834, %v697
        %v1910 = vmul.f32 %v1876, %v696
        %v1911 = vmul.f32 %v1836, %v694
        %v1912 = vmul.f32 %v1837, %v697
        %v1913 = vmul.f32 %v1877, %v696
        %1926 = vrot.lane.b32.xlu0 %v1826, 127
        %v1927 = vpop.permute.xlu0 %1926
        %1928 = vrot.lane.b32.xlu0 %v1827, 127
        %v1929 = vpop.permute.xlu0 %1928
        %1930 = vrot.lane.b32.xlu0 %v1828, 127
        %v1931 = vpop.permute.xlu0 %1930
        %1932 = vrot.lane.b32.xlu0 %v1829, 127
        %v1933 = vpop.permute.xlu0 %1932
        %1934 = vrot.lane.b32.xlu0 %v1830, 127
        %v1935 = vpop.permute.xlu0 %1934
        %1936 = vrot.lane.b32.xlu0 %v1831, 127
        %v1937 = vpop.permute.xlu0 %1936
        %1938 = vrot.lane.b32.xlu0 %v1832, 127
        %v1939 = vpop.permute.xlu0 %1938
        %1940 = vrot.lane.b32.xlu0 %v1833, 127
        %v1941 = vpop.permute.xlu0 %1940
        %1942 = vrot.lane.b32.xlu0 %v1834, 127
        %v1943 = vpop.permute.xlu0 %1942
        %1944 = vrot.lane.b32.xlu0 %v1835, 127
        %v1945 = vpop.permute.xlu0 %1944
        %1946 = vrot.lane.b32.xlu0 %v1836, 127
        %v1947 = vpop.permute.xlu0 %1946
        %1948 = vrot.lane.b32.xlu0 %v1837, 127
        %v1949 = vpop.permute.xlu0 %1948
        %v1950 = vsel %vm650, %v1927, %v1929
        %v1951 = vsel %vm650, %v1929, %v1931
        %v1952 = vsel %vm650, %v1933, %v1935
        %v1953 = vsel %vm650, %v1935, %v1937
        %v1954 = vsel %vm650, %v1939, %v1941
        %v1955 = vsel %vm650, %v1941, %v1943
        %v1956 = vsel %vm650, %v1945, %v1947
        %v1957 = vsel %vm650, %v1947, %v1949
        %1970 = vrot.lane.b32.xlu0 %v1850, 126
        %v1971 = vpop.permute.xlu0 %1970
        %1972 = vrot.lane.b32.xlu0 %v1851, 126
        %v1973 = vpop.permute.xlu0 %1972
        %1974 = vrot.lane.b32.xlu0 %v1852, 126
        %v1975 = vpop.permute.xlu0 %1974
        %1976 = vrot.lane.b32.xlu0 %v1853, 126
        %v1977 = vpop.permute.xlu0 %1976
        %1978 = vrot.lane.b32.xlu0 %v1854, 126
        %v1979 = vpop.permute.xlu0 %1978
        %1980 = vrot.lane.b32.xlu0 %v1855, 126
        %v1981 = vpop.permute.xlu0 %1980
        %1982 = vrot.lane.b32.xlu0 %v1856, 126
        %v1983 = vpop.permute.xlu0 %1982
        %1984 = vrot.lane.b32.xlu0 %v1857, 126
        %v1985 = vpop.permute.xlu0 %1984
        %1986 = vrot.lane.b32.xlu0 %v1858, 126
        %v1987 = vpop.permute.xlu0 %1986
        %1988 = vrot.lane.b32.xlu0 %v1859, 126
        %v1989 = vpop.permute.xlu0 %1988
        %1990 = vrot.lane.b32.xlu0 %v1860, 126
        %v1991 = vpop.permute.xlu0 %1990
        %1992 = vrot.lane.b32.xlu0 %v1861, 126
        %v1993 = vpop.permute.xlu0 %1992
        %v1994 = vsel %vm747, %v1971, %v1973
        %v1995 = vsel %vm747, %v1973, %v1975
        %v1996 = vsel %vm747, %v1977, %v1979
        %v1997 = vsel %vm747, %v1979, %v1981
        %v1998 = vsel %vm747, %v1983, %v1985
        %v1999 = vsel %vm747, %v1985, %v1987
        %v2000 = vsel %vm747, %v1989, %v1991
        %v2001 = vsel %vm747, %v1991, %v1993
        %2014 = vrot.lane.b32.xlu0 %v1862, 112
        %v2015 = vpop.permute.xlu0 %2014
        %2016 = vrot.lane.b32.xlu0 %v1863, 112
        %v2017 = vpop.permute.xlu0 %2016
        %2018 = vrot.lane.b32.xlu0 %v1864, 112
        %v2019 = vpop.permute.xlu0 %2018
        %2020 = vrot.lane.b32.xlu0 %v1865, 112
        %v2021 = vpop.permute.xlu0 %2020
        %2022 = vrot.lane.b32.xlu0 %v1866, 112
        %v2023 = vpop.permute.xlu0 %2022
        %2024 = vrot.lane.b32.xlu0 %v1867, 112
        %v2025 = vpop.permute.xlu0 %2024
        %2026 = vrot.lane.b32.xlu0 %v1868, 112
        %v2027 = vpop.permute.xlu0 %2026
        %2028 = vrot.lane.b32.xlu0 %v1869, 112
        %v2029 = vpop.permute.xlu0 %2028
        %2030 = vrot.lane.b32.xlu0 %v1870, 112
        %v2031 = vpop.permute.xlu0 %2030
        %2032 = vrot.lane.b32.xlu0 %v1871, 112
        %v2033 = vpop.permute.xlu0 %2032
        %2034 = vrot.lane.b32.xlu0 %v1872, 112
        %v2035 = vpop.permute.xlu0 %2034
        %2036 = vrot.lane.b32.xlu0 %v1873, 112
        %v2037 = vpop.permute.xlu0 %2036
        %v2038 = vsel %vm770, %v2015, %v2017
        %v2039 = vsel %vm770, %v2017, %v2019
        %v2040 = vsel %vm770, %v2021, %v2023
        %v2041 = vsel %vm770, %v2023, %v2025
        %v2042 = vsel %vm770, %v2027, %v2029
        %v2043 = vsel %vm770, %v2029, %v2031
        %v2044 = vsel %vm770, %v2033, %v2035
        %v2045 = vsel %vm770, %v2035, %v2037
        %2046 = vrot.lane.b32.xlu0 %v1827, 111
        %v2047 = vpop.permute.xlu0 %2046
        %2048 = vrot.lane.b32.xlu0 %v1828, 111
        %v2049 = vpop.permute.xlu0 %2048
        %2050 = vrot.lane.b32.xlu0 %v1830, 111
        %v2051 = vpop.permute.xlu0 %2050
        %2052 = vrot.lane.b32.xlu0 %v1831, 111
        %v2053 = vpop.permute.xlu0 %2052
        %2054 = vrot.lane.b32.xlu0 %v1833, 111
        %v2055 = vpop.permute.xlu0 %2054
        %2056 = vrot.lane.b32.xlu0 %v1834, 111
        %v2057 = vpop.permute.xlu0 %2056
        %2058 = vrot.lane.b32.xlu0 %v1836, 111
        %v2059 = vpop.permute.xlu0 %2058
        %2060 = vrot.lane.b32.xlu0 %v1837, 111
        %v2061 = vpop.permute.xlu0 %2060
        %v2062 = vsel %vm618, %v2047, %v2049
        %v2063 = vsel %vm618, %v2051, %v2053
        %v2064 = vsel %vm618, %v2055, %v2057
        %v2065 = vsel %vm618, %v2059, %v2061
        %2078 = vrot.lane.b32.xlu0 %v1878, 110
        %v2079 = vpop.permute.xlu0 %2078
        %2080 = vrot.lane.b32.xlu0 %v1879, 110
        %v2081 = vpop.permute.xlu0 %2080
        %2082 = vrot.lane.b32.xlu0 %v1880, 110
        %v2083 = vpop.permute.xlu0 %2082
        %2084 = vrot.lane.b32.xlu0 %v1881, 110
        %v2085 = vpop.permute.xlu0 %2084
        %2086 = vrot.lane.b32.xlu0 %v1882, 110
        %v2087 = vpop.permute.xlu0 %2086
        %2088 = vrot.lane.b32.xlu0 %v1883, 110
        %v2089 = vpop.permute.xlu0 %2088
        %2090 = vrot.lane.b32.xlu0 %v1884, 110
        %v2091 = vpop.permute.xlu0 %2090
        %2092 = vrot.lane.b32.xlu0 %v1885, 110
        %v2093 = vpop.permute.xlu0 %2092
        %2094 = vrot.lane.b32.xlu0 %v1886, 110
        %v2095 = vpop.permute.xlu0 %2094
        %2096 = vrot.lane.b32.xlu0 %v1887, 110
        %v2097 = vpop.permute.xlu0 %2096
        %2098 = vrot.lane.b32.xlu0 %v1888, 110
        %v2099 = vpop.permute.xlu0 %2098
        %2100 = vrot.lane.b32.xlu0 %v1889, 110
        %v2101 = vpop.permute.xlu0 %2100
        %v2102 = vsel %vm803, %v2079, %v2081
        %v2103 = vsel %vm803, %v2081, %v2083
        %v2104 = vsel %vm803, %v2085, %v2087
        %v2105 = vsel %vm803, %v2087, %v2089
        %v2106 = vsel %vm803, %v2091, %v2093
        %v2107 = vsel %vm803, %v2093, %v2095
        %v2108 = vsel %vm803, %v2097, %v2099
        %v2109 = vsel %vm803, %v2099, %v2101
        %2122 = vrot.lane.b32.xlu0 %v1890, 96
        %v2123 = vpop.permute.xlu0 %2122
        %2124 = vrot.lane.b32.xlu0 %v1891, 96
        %v2125 = vpop.permute.xlu0 %2124
        %2126 = vrot.lane.b32.xlu0 %v1892, 96
        %v2127 = vpop.permute.xlu0 %2126
        %2128 = vrot.lane.b32.xlu0 %v1893, 96
        %v2129 = vpop.permute.xlu0 %2128
        %2130 = vrot.lane.b32.xlu0 %v1894, 96
        %v2131 = vpop.permute.xlu0 %2130
        %2132 = vrot.lane.b32.xlu0 %v1895, 96
        %v2133 = vpop.permute.xlu0 %2132
        %2134 = vrot.lane.b32.xlu0 %v1896, 96
        %v2135 = vpop.permute.xlu0 %2134
        %2136 = vrot.lane.b32.xlu0 %v1897, 96
        %v2137 = vpop.permute.xlu0 %2136
        %2138 = vrot.lane.b32.xlu0 %v1898, 96
        %v2139 = vpop.permute.xlu0 %2138
        %2140 = vrot.lane.b32.xlu0 %v1899, 96
        %v2141 = vpop.permute.xlu0 %2140
        %2142 = vrot.lane.b32.xlu0 %v1900, 96
        %v2143 = vpop.permute.xlu0 %2142
        %2144 = vrot.lane.b32.xlu0 %v1901, 96
        %v2145 = vpop.permute.xlu0 %2144
        %v2146 = vsel %vm826, %v2123, %v2125
        %v2147 = vsel %vm826, %v2125, %v2127
        %v2148 = vsel %vm826, %v2129, %v2131
        %v2149 = vsel %vm826, %v2131, %v2133
        %v2150 = vsel %vm826, %v2135, %v2137
        %v2151 = vsel %vm826, %v2137, %v2139
        %v2152 = vsel %vm826, %v2141, %v2143
        %v2153 = vsel %vm826, %v2143, %v2145
        %2158 = vrot.lane.b32.xlu0 %v1827, 95
        %v2159 = vpop.permute.xlu0 %2158
        %2160 = vrot.lane.b32.xlu0 %v1828, 95
        %v2161 = vpop.permute.xlu0 %2160
        %2162 = vrot.lane.b32.xlu0 %v1874, 95
        %v2163 = vpop.permute.xlu0 %2162
        %2164 = vrot.lane.b32.xlu0 %v1830, 95
        %v2165 = vpop.permute.xlu0 %2164
        %2166 = vrot.lane.b32.xlu0 %v1831, 95
        %v2167 = vpop.permute.xlu0 %2166
        %2168 = vrot.lane.b32.xlu0 %v1875, 95
        %v2169 = vpop.permute.xlu0 %2168
        %2170 = vrot.lane.b32.xlu0 %v1833, 95
        %v2171 = vpop.permute.xlu0 %2170
        %2172 = vrot.lane.b32.xlu0 %v1834, 95
        %v2173 = vpop.permute.xlu0 %2172
        %2174 = vrot.lane.b32.xlu0 %v1876, 95
        %v2175 = vpop.permute.xlu0 %2174
        %2176 = vrot.lane.b32.xlu0 %v1836, 95
        %v2177 = vpop.permute.xlu0 %2176
        %2178 = vrot.lane.b32.xlu0 %v1837, 95
        %v2179 = vpop.permute.xlu0 %2178
        %2180 = vrot.lane.b32.xlu0 %v1877, 95
        %v2181 = vpop.permute.xlu0 %2180
        %v2182 = vsel %vm845, %v2159, %v2161
        %v2183 = vsel %vm845, %v2161, %v2163
        %v2184 = vsel %vm845, %v2165, %v2167
        %v2185 = vsel %vm845, %v2167, %v2169
        %v2186 = vsel %vm845, %v2171, %v2173
        %v2187 = vsel %vm845, %v2173, %v2175
        %v2188 = vsel %vm845, %v2177, %v2179
        %v2189 = vsel %vm845, %v2179, %v2181
        %2202 = vrot.lane.b32.xlu0 %v1902, 94
        %v2203 = vpop.permute.xlu0 %2202
        %2204 = vrot.lane.b32.xlu0 %v1903, 94
        %v2205 = vpop.permute.xlu0 %2204
        %2206 = vrot.lane.b32.xlu0 %v1904, 94
        %v2207 = vpop.permute.xlu0 %2206
        %2208 = vrot.lane.b32.xlu0 %v1905, 94
        %v2209 = vpop.permute.xlu0 %2208
        %2210 = vrot.lane.b32.xlu0 %v1906, 94
        %v2211 = vpop.permute.xlu0 %2210
        %2212 = vrot.lane.b32.xlu0 %v1907, 94
        %v2213 = vpop.permute.xlu0 %2212
        %2214 = vrot.lane.b32.xlu0 %v1908, 94
        %v2215 = vpop.permute.xlu0 %2214
        %2216 = vrot.lane.b32.xlu0 %v1909, 94
        %v2217 = vpop.permute.xlu0 %2216
        %2218 = vrot.lane.b32.xlu0 %v1910, 94
        %v2219 = vpop.permute.xlu0 %2218
        %2220 = vrot.lane.b32.xlu0 %v1911, 94
        %v2221 = vpop.permute.xlu0 %2220
        %2222 = vrot.lane.b32.xlu0 %v1912, 94
        %v2223 = vpop.permute.xlu0 %2222
        %2224 = vrot.lane.b32.xlu0 %v1913, 94
        %v2225 = vpop.permute.xlu0 %2224
        %v2226 = vsel %vm868, %v2203, %v2205
        %v2227 = vsel %vm868, %v2205, %v2207
        %v2228 = vsel %vm868, %v2209, %v2211
        %v2229 = vsel %vm868, %v2211, %v2213
        %v2230 = vsel %vm868, %v2215, %v2217
        %v2231 = vsel %vm868, %v2217, %v2219
        %v2232 = vsel %vm868, %v2221, %v2223
        %v2233 = vsel %vm868, %v2223, %v2225
        %v2234 = vld [vmem:[#allocation12] sm:$0xff]
        %v2235 = vld [vmem:[#allocation12 + $0x8] sm:$0xff]
        %v2236 = vld [vmem:[#allocation12 + $0x10] sm:$0xff]
        %v2237 = vld [vmem:[#allocation14] sm:$0xff]
        %2239 = vset.pattern.permute.xlu0 0
        %2240 = vperm.xlu0 %2239, %v2237
        %v2241 = vpop.permute.xlu0 %2240
        %2255 = vrot.lane.b32.xlu0 %v1838, 17
        %v2256 = vpop.permute.xlu0 %2255
        %2257 = vrot.lane.b32.xlu0 %v1839, 17
        %v2258 = vpop.permute.xlu0 %2257
        %2259 = vrot.lane.b32.xlu0 %v1840, 17
        %v2260 = vpop.permute.xlu0 %2259
        %2261 = vrot.lane.b32.xlu0 %v1841, 17
        %v2262 = vpop.permute.xlu0 %2261
        %2263 = vrot.lane.b32.xlu0 %v1842, 17
        %v2264 = vpop.permute.xlu0 %2263
        %2265 = vrot.lane.b32.xlu0 %v1843, 17
        %v2266 = vpop.permute.xlu0 %2265
        %2267 = vrot.lane.b32.xlu0 %v1844, 17
        %v2268 = vpop.permute.xlu0 %2267
        %2269 = vrot.lane.b32.xlu0 %v1845, 17
        %v2270 = vpop.permute.xlu0 %2269
        %2271 = vrot.lane.b32.xlu0 %v1846, 17
        %v2272 = vpop.permute.xlu0 %2271
        %2273 = vrot.lane.b32.xlu0 %v1847, 17
        %v2274 = vpop.permute.xlu0 %2273
        %2275 = vrot.lane.b32.xlu0 %v1848, 17
        %v2276 = vpop.permute.xlu0 %2275
        %2277 = vrot.lane.b32.xlu0 %v1849, 17
        %v2278 = vpop.permute.xlu0 %2277
        %2279 = vrot.lane.b32.xlu0 %v1950, 17
        %v2280 = vpop.permute.xlu0 %2279
        %2281 = vrot.lane.b32.xlu0 %v1951, 17
        %v2282 = vpop.permute.xlu0 %2281
        %2283 = vrot.lane.b32.xlu0 %v1931, 17
        %v2284 = vpop.permute.xlu0 %2283
        %2285 = vrot.lane.b32.xlu0 %v1952, 17
        %v2286 = vpop.permute.xlu0 %2285
        %2287 = vrot.lane.b32.xlu0 %v1953, 17
        %v2288 = vpop.permute.xlu0 %2287
        %2289 = vrot.lane.b32.xlu0 %v1937, 17
        %v2290 = vpop.permute.xlu0 %2289
        %2291 = vrot.lane.b32.xlu0 %v1954, 17
        %v2292 = vpop.permute.xlu0 %2291
        %2293 = vrot.lane.b32.xlu0 %v1955, 17
        %v2294 = vpop.permute.xlu0 %2293
        %2295 = vrot.lane.b32.xlu0 %v1943, 17
        %v2296 = vpop.permute.xlu0 %2295
        %2297 = vrot.lane.b32.xlu0 %v1956, 17
        %v2298 = vpop.permute.xlu0 %2297
        %2299 = vrot.lane.b32.xlu0 %v1957, 17
        %v2300 = vpop.permute.xlu0 %2299
        %2301 = vrot.lane.b32.xlu0 %v1949, 17
        %v2302 = vpop.permute.xlu0 %2301
        %2303 = vrot.lane.b32.xlu0 %v1994, 17
        %v2304 = vpop.permute.xlu0 %2303
        %2305 = vrot.lane.b32.xlu0 %v1995, 17
        %v2306 = vpop.permute.xlu0 %2305
        %2307 = vrot.lane.b32.xlu0 %v1975, 17
        %v2308 = vpop.permute.xlu0 %2307
        %2309 = vrot.lane.b32.xlu0 %v1996, 17
        %v2310 = vpop.permute.xlu0 %2309
        %2311 = vrot.lane.b32.xlu0 %v1997, 17
        %v2312 = vpop.permute.xlu0 %2311
        %2313 = vrot.lane.b32.xlu0 %v1981, 17
        %v2314 = vpop.permute.xlu0 %2313
        %2315 = vrot.lane.b32.xlu0 %v1998, 17
        %v2316 = vpop.permute.xlu0 %2315
        %2317 = vrot.lane.b32.xlu0 %v1999, 17
        %v2318 = vpop.permute.xlu0 %2317
        %2319 = vrot.lane.b32.xlu0 %v1987, 17
        %v2320 = vpop.permute.xlu0 %2319
        %2321 = vrot.lane.b32.xlu0 %v2000, 17
        %v2322 = vpop.permute.xlu0 %2321
        %2323 = vrot.lane.b32.xlu0 %v2001, 17
        %v2324 = vpop.permute.xlu0 %2323
        %2325 = vrot.lane.b32.xlu0 %v1993, 17
        %v2326 = vpop.permute.xlu0 %2325
        %2327 = vrot.lane.b32.xlu0 %v2038, 17
        %v2328 = vpop.permute.xlu0 %2327
        %2329 = vrot.lane.b32.xlu0 %v2039, 17
        %v2330 = vpop.permute.xlu0 %2329
        %2331 = vrot.lane.b32.xlu0 %v2019, 17
        %v2332 = vpop.permute.xlu0 %2331
        %2333 = vrot.lane.b32.xlu0 %v2040, 17
        %v2334 = vpop.permute.xlu0 %2333
        %2335 = vrot.lane.b32.xlu0 %v2041, 17
        %v2336 = vpop.permute.xlu0 %2335
        %2337 = vrot.lane.b32.xlu0 %v2025, 17
        %v2338 = vpop.permute.xlu0 %2337
        %2339 = vrot.lane.b32.xlu0 %v2042, 17
        %v2340 = vpop.permute.xlu0 %2339
        %2341 = vrot.lane.b32.xlu0 %v2043, 17
        %v2342 = vpop.permute.xlu0 %2341
        %2343 = vrot.lane.b32.xlu0 %v2031, 17
        %v2344 = vpop.permute.xlu0 %2343
        %2345 = vrot.lane.b32.xlu0 %v2044, 17
        %v2346 = vpop.permute.xlu0 %2345
        %2347 = vrot.lane.b32.xlu0 %v2045, 17
        %v2348 = vpop.permute.xlu0 %2347
        %2349 = vrot.lane.b32.xlu0 %v2037, 17
        %v2350 = vpop.permute.xlu0 %2349
        %2351 = vrot.lane.b32.xlu0 %v2047, 17
        %v2352 = vpop.permute.xlu0 %2351
        %2353 = vrot.lane.b32.xlu0 %v2062, 17
        %v2354 = vpop.permute.xlu0 %2353
        %2355 = vrot.lane.b32.xlu0 %v2049, 17
        %v2356 = vpop.permute.xlu0 %2355
        %2357 = vrot.lane.b32.xlu0 %v2051, 17
        %v2358 = vpop.permute.xlu0 %2357
        %2359 = vrot.lane.b32.xlu0 %v2063, 17
        %v2360 = vpop.permute.xlu0 %2359
        %2361 = vrot.lane.b32.xlu0 %v2053, 17
        %v2362 = vpop.permute.xlu0 %2361
        %2363 = vrot.lane.b32.xlu0 %v2055, 17
        %v2364 = vpop.permute.xlu0 %2363
        %2365 = vrot.lane.b32.xlu0 %v2064, 17
        %v2366 = vpop.permute.xlu0 %2365
        %2367 = vrot.lane.b32.xlu0 %v2057, 17
        %v2368 = vpop.permute.xlu0 %2367
        %2369 = vrot.lane.b32.xlu0 %v2059, 17
        %v2370 = vpop.permute.xlu0 %2369
        %2371 = vrot.lane.b32.xlu0 %v2065, 17
        %v2372 = vpop.permute.xlu0 %2371
        %2373 = vrot.lane.b32.xlu0 %v2061, 17
        %v2374 = vpop.permute.xlu0 %2373
        %2375 = vrot.lane.b32.xlu0 %v2079, 17
        %v2376 = vpop.permute.xlu0 %2375
        %2377 = vrot.lane.b32.xlu0 %v2102, 17
        %v2378 = vpop.permute.xlu0 %2377
        %2379 = vrot.lane.b32.xlu0 %v2103, 17
        %v2380 = vpop.permute.xlu0 %2379
        %2381 = vrot.lane.b32.xlu0 %v2085, 17
        %v2382 = vpop.permute.xlu0 %2381
        %2383 = vrot.lane.b32.xlu0 %v2104, 17
        %v2384 = vpop.permute.xlu0 %2383
        %2385 = vrot.lane.b32.xlu0 %v2105, 17
        %v2386 = vpop.permute.xlu0 %2385
        %2387 = vrot.lane.b32.xlu0 %v2091, 17
        %v2388 = vpop.permute.xlu0 %2387
        %2389 = vrot.lane.b32.xlu0 %v2106, 17
        %v2390 = vpop.permute.xlu0 %2389
        %2391 = vrot.lane.b32.xlu0 %v2107, 17
        %v2392 = vpop.permute.xlu0 %2391
        %2393 = vrot.lane.b32.xlu0 %v2097, 17
        %v2394 = vpop.permute.xlu0 %2393
        %2395 = vrot.lane.b32.xlu0 %v2108, 17
        %v2396 = vpop.permute.xlu0 %2395
        %2397 = vrot.lane.b32.xlu0 %v2109, 17
        %v2398 = vpop.permute.xlu0 %2397
        %2399 = vrot.lane.b32.xlu0 %v2123, 17
        %v2400 = vpop.permute.xlu0 %2399
        %2401 = vrot.lane.b32.xlu0 %v2146, 17
        %v2402 = vpop.permute.xlu0 %2401
        %2403 = vrot.lane.b32.xlu0 %v2147, 17
        %v2404 = vpop.permute.xlu0 %2403
        %2405 = vrot.lane.b32.xlu0 %v2129, 17
        %v2406 = vpop.permute.xlu0 %2405
        %2407 = vrot.lane.b32.xlu0 %v2148, 17
        %v2408 = vpop.permute.xlu0 %2407
        %2409 = vrot.lane.b32.xlu0 %v2149, 17
        %v2410 = vpop.permute.xlu0 %2409
        %2411 = vrot.lane.b32.xlu0 %v2135, 17
        %v2412 = vpop.permute.xlu0 %2411
        %2413 = vrot.lane.b32.xlu0 %v2150, 17
        %v2414 = vpop.permute.xlu0 %2413
        %2415 = vrot.lane.b32.xlu0 %v2151, 17
        %v2416 = vpop.permute.xlu0 %2415
        %2417 = vrot.lane.b32.xlu0 %v2141, 17
        %v2418 = vpop.permute.xlu0 %2417
        %2419 = vrot.lane.b32.xlu0 %v2152, 17
        %v2420 = vpop.permute.xlu0 %2419
        %2421 = vrot.lane.b32.xlu0 %v2153, 17
        %v2422 = vpop.permute.xlu0 %2421
        %2423 = vrot.lane.b32.xlu0 %v2159, 17
        %v2424 = vpop.permute.xlu0 %2423
        %2425 = vrot.lane.b32.xlu0 %v2182, 17
        %v2426 = vpop.permute.xlu0 %2425
        %2427 = vrot.lane.b32.xlu0 %v2183, 17
        %v2428 = vpop.permute.xlu0 %2427
        %2429 = vrot.lane.b32.xlu0 %v2165, 17
        %v2430 = vpop.permute.xlu0 %2429
        %2431 = vrot.lane.b32.xlu0 %v2184, 17
        %v2432 = vpop.permute.xlu0 %2431
        %2433 = vrot.lane.b32.xlu0 %v2185, 17
        %v2434 = vpop.permute.xlu0 %2433
        %2435 = vrot.lane.b32.xlu0 %v2171, 17
        %v2436 = vpop.permute.xlu0 %2435
        %2437 = vrot.lane.b32.xlu0 %v2186, 17
        %v2438 = vpop.permute.xlu0 %2437
        %2439 = vrot.lane.b32.xlu0 %v2187, 17
        %v2440 = vpop.permute.xlu0 %2439
        %2441 = vrot.lane.b32.xlu0 %v2177, 17
        %v2442 = vpop.permute.xlu0 %2441
        %2443 = vrot.lane.b32.xlu0 %v2188, 17
        %v2444 = vpop.permute.xlu0 %2443
        %2445 = vrot.lane.b32.xlu0 %v2189, 17
        %v2446 = vpop.permute.xlu0 %2445
        %2447 = vrot.lane.b32.xlu0 %v2203, 17
        %v2448 = vpop.permute.xlu0 %2447
        %2449 = vrot.lane.b32.xlu0 %v2226, 17
        %v2450 = vpop.permute.xlu0 %2449
        %2451 = vrot.lane.b32.xlu0 %v2227, 17
        %v2452 = vpop.permute.xlu0 %2451
        %2453 = vrot.lane.b32.xlu0 %v2209, 17
        %v2454 = vpop.permute.xlu0 %2453
        %2455 = vrot.lane.b32.xlu0 %v2228, 17
        %v2456 = vpop.permute.xlu0 %2455
        %2457 = vrot.lane.b32.xlu0 %v2229, 17
        %v2458 = vpop.permute.xlu0 %2457
        %2459 = vrot.lane.b32.xlu0 %v2215, 17
        %v2460 = vpop.permute.xlu0 %2459
        %2461 = vrot.lane.b32.xlu0 %v2230, 17
        %v2462 = vpop.permute.xlu0 %2461
        %2463 = vrot.lane.b32.xlu0 %v2231, 17
        %v2464 = vpop.permute.xlu0 %2463
        %2465 = vrot.lane.b32.xlu0 %v2221, 17
        %v2466 = vpop.permute.xlu0 %2465
        %2467 = vrot.lane.b32.xlu0 %v2232, 17
        %v2468 = vpop.permute.xlu0 %2467
        %2469 = vrot.lane.b32.xlu0 %v2233, 17
        %v2470 = vpop.permute.xlu0 %2469
        %v2471 = vsel %vm537, %v2256, %v2258
        %v2472 = vsel %vm537, %v2258, %v2260
        %v2473 = vsel %vm537, %v2262, %v2264
        %v2474 = vsel %vm537, %v2264, %v2266
        %v2475 = vsel %vm537, %v2268, %v2270
        %v2476 = vsel %vm537, %v2270, %v2272
        %v2477 = vsel %vm537, %v2274, %v2276
        %v2478 = vsel %vm537, %v2276, %v2278
        %v2479 = vsel %vm537, %v2280, %v2282
        %v2480 = vsel %vm537, %v2282, %v2284
        %v2481 = vsel %vm537, %v2286, %v2288
        %v2482 = vsel %vm537, %v2288, %v2290
        %v2483 = vsel %vm537, %v2292, %v2294
        %v2484 = vsel %vm537, %v2294, %v2296
        %v2485 = vsel %vm537, %v2298, %v2300
        %v2486 = vsel %vm537, %v2300, %v2302
        %v2487 = vsel %vm537, %v2304, %v2306
        %v2488 = vsel %vm537, %v2306, %v2308
        %v2489 = vsel %vm537, %v2310, %v2312
        %v2490 = vsel %vm537, %v2312, %v2314
        %v2491 = vsel %vm537, %v2316, %v2318
        %v2492 = vsel %vm537, %v2318, %v2320
        %v2493 = vsel %vm537, %v2322, %v2324
        %v2494 = vsel %vm537, %v2324, %v2326
        %v2495 = vsel %vm537, %v2328, %v2330
        %v2496 = vsel %vm537, %v2330, %v2332
        %v2497 = vsel %vm537, %v2334, %v2336
        %v2498 = vsel %vm537, %v2336, %v2338
        %v2499 = vsel %vm537, %v2340, %v2342
        %v2500 = vsel %vm537, %v2342, %v2344
        %v2501 = vsel %vm537, %v2346, %v2348
        %v2502 = vsel %vm537, %v2348, %v2350
        %v2503 = vsel %vm537, %v2352, %v2354
        %v2504 = vsel %vm537, %v2354, %v2356
        %v2505 = vsel %vm537, %v2358, %v2360
        %v2506 = vsel %vm537, %v2360, %v2362
        %v2507 = vsel %vm537, %v2364, %v2366
        %v2508 = vsel %vm537, %v2366, %v2368
        %v2509 = vsel %vm537, %v2370, %v2372
        %v2510 = vsel %vm537, %v2372, %v2374
        %v2511 = vsel %vm537, %v2376, %v2378
        %v2512 = vsel %vm537, %v2378, %v2380
        %v2513 = vsel %vm537, %v2382, %v2384
        %v2514 = vsel %vm537, %v2384, %v2386
        %v2515 = vsel %vm537, %v2388, %v2390
        %v2516 = vsel %vm537, %v2390, %v2392
        %v2517 = vsel %vm537, %v2394, %v2396
        %v2518 = vsel %vm537, %v2396, %v2398
        %v2519 = vsel %vm537, %v2400, %v2402
        %v2520 = vsel %vm537, %v2402, %v2404
        %v2521 = vsel %vm537, %v2406, %v2408
        %v2522 = vsel %vm537, %v2408, %v2410
        %v2523 = vsel %vm537, %v2412, %v2414
        %v2524 = vsel %vm537, %v2414, %v2416
        %v2525 = vsel %vm537, %v2418, %v2420
        %v2526 = vsel %vm537, %v2420, %v2422
        %v2527 = vsel %vm537, %v2424, %v2426
        %v2528 = vsel %vm537, %v2426, %v2428
        %v2529 = vsel %vm537, %v2430, %v2432
        %v2530 = vsel %vm537, %v2432, %v2434
        %v2531 = vsel %vm537, %v2436, %v2438
        %v2532 = vsel %vm537, %v2438, %v2440
        %v2533 = vsel %vm537, %v2442, %v2444
        %v2534 = vsel %vm537, %v2444, %v2446
        %v2535 = vsel %vm537, %v2448, %v2450
        %v2536 = vsel %vm537, %v2450, %v2452
        %v2537 = vsel %vm537, %v2454, %v2456
        %v2538 = vsel %vm537, %v2456, %v2458
        %v2539 = vsel %vm537, %v2460, %v2462
        %v2540 = vsel %vm537, %v2462, %v2464
        %v2541 = vsel %vm537, %v2466, %v2468
        %v2542 = vsel %vm537, %v2468, %v2470
        %vm2615 = vcmask 261120
        %v2617 = vsel %vm2615, %v2236, 0
        %2619 = vmatprep.subr.mxu0 %v2472
        %2620 = vmatpush1.msra.mxu0 %v2471
        %2621 = vmatprep.subr.mxu0 %v2474
        %2622 = vmatpush1.msra.mxu0 %v2473
        %2623 = vmatprep.subr.mxu0 %v2476
        %2624 = vmatpush1.msra.mxu0 %v2475
        %2625 = vmatprep.subr.mxu0 %v2478
        %2626 = vmatpush1.msra.mxu0 %v2477
        %2627 = vmatprep.subr.mxu0 %v2480
        %2628 = vmatpush1.msra.mxu0 %v2479
        %2629 = vmatprep.subr.mxu0 %v2482
        %2630 = vmatpush1.msra.mxu0 %v2481
        %2631 = vmatprep.subr.mxu0 %v2484
        %2632 = vmatpush1.msra.mxu0 %v2483
        %2633 = vmatprep.subr.mxu0 %v2486
        %2634 = vmatpush1.msra.mxu0 %v2485
        %2635 = vmatprep.subr.mxu0 %v2488
        %2636 = vmatpush1.msra.mxu0 %v2487
        %2637 = vmatprep.subr.mxu0 %v2490
        %2638 = vmatpush1.msra.mxu0 %v2489
        %2639 = vmatprep.subr.mxu0 %v2492
        %2640 = vmatpush1.msra.mxu0 %v2491
        %2641 = vmatprep.subr.mxu0 %v2494
        %2642 = vmatpush1.msra.mxu0 %v2493
        %2643 = vmatprep.subr.mxu0 %v2496
        %2644 = vmatpush1.msra.mxu0 %v2495
        %2645 = vmatprep.subr.mxu0 %v2498
        %2646 = vmatpush1.msra.mxu0 %v2497
        %2647 = vmatprep.subr.mxu0 %v2500
        %2648 = vmatpush1.msra.mxu0 %v2499
        %2649 = vmatprep.subr.mxu0 %v2502
        %2650 = vmatpush1.msra.mxu0 %v2501
        %2651 = vmatprep.subr.mxu0 %v2504
        %2652 = vmatpush1.msra.mxu0 %v2503
        %2653 = vmatprep.subr.mxu0 %v2506
        %2654 = vmatpush1.msra.mxu0 %v2505
        %2655 = vmatprep.subr.mxu0 %v2508
        %2656 = vmatpush1.msra.mxu0 %v2507
        %2657 = vmatprep.subr.mxu0 %v2510
        %2658 = vmatpush1.msra.mxu0 %v2509
        %2659 = vmatprep.subr.mxu0 %v2512
        %2660 = vmatpush1.msra.mxu0 %v2511
        %2661 = vmatprep.subr.mxu0 %v2514
        %2662 = vmatpush1.msra.mxu0 %v2513
        %2663 = vmatprep.subr.mxu0 %v2516
        %2664 = vmatpush1.msra.mxu0 %v2515
        %2665 = vmatprep.subr.mxu0 %v2518
        %2666 = vmatpush1.msra.mxu0 %v2517
        %2667 = vmatprep.subr.mxu0 %v2520
        %2668 = vmatpush1.msra.mxu0 %v2519
        %2669 = vmatprep.subr.mxu0 %v2522
        %2670 = vmatpush1.msra.mxu0 %v2521
        %2671 = vmatprep.subr.mxu0 %v2524
        %2672 = vmatpush1.msra.mxu0 %v2523
        %2673 = vmatprep.subr.mxu0 %v2526
        %2674 = vmatpush1.msra.mxu0 %v2525
        %2675 = vmatprep.subr.mxu0 %v2528
        %2676 = vmatpush1.msra.mxu0 %v2527
        %2677 = vmatprep.subr.mxu0 %v2530
        %2678 = vmatpush1.msra.mxu0 %v2529
        %2679 = vmatprep.subr.mxu0 %v2532
        %2680 = vmatpush1.msra.mxu0 %v2531
        %2681 = vmatprep.subr.mxu0 %v2534
        %2682 = vmatpush1.msra.mxu0 %v2533
        %2683 = vmatprep.mubr.f32.mxu0 %v2235
        %2684 = vmatmul.mubr.f32.gmra.mrb[0].mxu0 %v2234
        %v2685 = vpop.f32.mrb[0].mxu0
        %v2686 = vadd.f32 %v2241, %v2685
        %v2687 = vpop.f32.mrb[0].mxu0
        %v2688 = vadd.f32 %v2241, %v2687
        %2689 = vdwg.mxu0
        %2690 = vmatprep.subr.mxu0 %v2536
        %2691 = vmatpush1.msra.mxu0 %v2535
        %2692 = vmatprep.subr.mxu0 %v2538
        %2693 = vmatpush1.msra.mxu0 %v2537
        %2694 = vmatprep.subr.mxu0 %v2540
        %2695 = vmatpush1.msra.mxu0 %v2539
        %2696 = vmatprep.subr.mxu0 %v2542
        %2697 = vmatpush1.msra.mxu0 %v2541
        %2698 = vmatprep.subr.mxu0 0.0
        %2699 = vmatpush1.msra.mxu0 0.0
        %2700 = vmatprep.subr.mxu0 0.0
        %2701 = vmatpush1.msra.mxu0 0.0
        %2702 = vmatprep.subr.mxu0 0.0
        %2703 = vmatpush1.msra.mxu0 0.0
        %2704 = vmatprep.subr.mxu0 0.0
        %2705 = vmatpush1.msra.mxu0 0.0
        %2706 = vmatprep.subr.mxu0 0.0
        %2707 = vmatpush1.msra.mxu0 0.0
        %2708 = vmatprep.subr.mxu0 0.0
        %2709 = vmatpush1.msra.mxu0 0.0
        %2710 = vmatprep.subr.mxu0 0.0
        %2711 = vmatpush1.msra.mxu0 0.0
        %2712 = vmatprep.subr.mxu0 0.0
        %2713 = vmatpush1.msra.mxu0 0.0
        %2714 = vmatprep.subr.mxu0 0.0
        %2715 = vmatpush1.msra.mxu0 0.0
        %2716 = vmatprep.subr.mxu0 0.0
        %2717 = vmatpush1.msra.mxu0 0.0
        %2718 = vmatprep.subr.mxu0 0.0
        %2719 = vmatpush1.msra.mxu0 0.0
        %2720 = vmatprep.subr.mxu0 0.0
        %2721 = vmatpush1.msra.mxu0 0.0
        %2722 = vmatprep.subr.mxu0 0.0
        %2723 = vmatpush1.msra.mxu0 0.0
        %2724 = vmatprep.subr.mxu0 0.0
        %2725 = vmatpush1.msra.mxu0 0.0
        %2726 = vmatprep.subr.mxu0 0.0
        %2727 = vmatpush1.msra.mxu0 0.0
        %2728 = vmatprep.subr.mxu0 0.0
        %2729 = vmatpush1.msra.mxu0 0.0
        %2730 = vmatprep.subr.mxu0 0.0
        %2731 = vmatpush1.msra.mxu0 0.0
        %2732 = vmatprep.subr.mxu0 0.0
        %2733 = vmatpush1.msra.mxu0 0.0
        %2734 = vmatprep.subr.mxu0 0.0
        %2735 = vmatpush1.msra.mxu0 0.0
        %2736 = vmatprep.subr.mxu0 0.0
        %2737 = vmatpush1.msra.mxu0 0.0
        %2738 = vmatprep.subr.mxu0 0.0
        %2739 = vmatpush1.msra.mxu0 0.0
        %2740 = vmatprep.subr.mxu0 0.0
        %2741 = vmatpush1.msra.mxu0 0.0
        %2742 = vmatprep.subr.mxu0 0.0
        %2743 = vmatpush1.msra.mxu0 0.0
        %2744 = vmatprep.subr.mxu0 0.0
        %2745 = vmatpush1.msra.mxu0 0.0
        %2746 = vmatprep.subr.mxu0 0.0
        %2747 = vmatpush1.msra.mxu0 0.0
        %2748 = vmatprep.subr.mxu0 0.0
        %2749 = vmatpush1.msra.mxu0 0.0
        %2750 = vmatprep.subr.mxu0 0.0
        %2751 = vmatpush1.msra.mxu0 0.0
        %2752 = vmatprep.subr.mxu0 0.0
        %2753 = vmatpush1.msra.mxu0 0.0
        %2754 = vmatprep.mubr.f32.mxu0 0.0
        %2755 = vmatmul.mubr.f32.gmra.mrb[0].mxu0 %v2617
        %v2756 = vpop.f32.mrb[0].mxu0
        %v2757 = vadd.f32 %v2686, %v2756
        %v2758 = vpop.f32.mrb[0].mxu0
        %v2759 = vadd.f32 %v2688, %v2758
        %2760 = vdwg.mxu0
        %vm2761 = vcmp.ge.f32.partialorder %v2757, 0.0
        %vm2762 = vcmp.ge.f32.partialorder %v2759, 0.0
        %v2763 = vmul.f32 %v2757, 0.2
        %v2764 = vmul.f32 %v2759, 0.2
        %v2765 = vsel %vm2761, %v2757, %v2763
        %v2766 = vsel %vm2762, %v2759, %v2764
        %2767 = vst [vmem:[#allocation2 + $0x88] sm:$0xff] %v2765
        %2768 = vst [vmem:[#allocation2 + $0x90] sm:$0xff] %v2766
        %v2769 = vld [vmem:[#allocation2] sm:$0xff]
        %v2770 = vld [vmem:[#allocation2 + $0x8] sm:$0xff]
        %v2771 = vld [vmem:[#allocation2 + $0x10] sm:$0xff]
        %v2772 = vld [vmem:[#allocation2 + $0x20] sm:$0xff]
        %v2773 = vld [vmem:[#allocation2 + $0x28] sm:$0xff]
        %v2774 = vld [vmem:[#allocation2 + $0x30] sm:$0xff]
        %v2775 = vld [vmem:[#allocation2 + $0x40] sm:$0xff]
        %v2776 = vld [vmem:[#allocation2 + $0x48] sm:$0xff]
        %v2777 = vld [vmem:[#allocation2 + $0x50] sm:$0xff]
        %v2778 = vld [vmem:[#allocation2 + $0x60] sm:$0xff]
        %v2779 = vld [vmem:[#allocation2 + $0x68] sm:$0xff]
        %v2780 = vld [vmem:[#allocation2 + $0x70] sm:$0xff]
        %v2781 = vld [vmem:[#allocation2 + $0x80] sm:$0xff]
        %v2782 = vld [vmem:[#allocation2 + $0x88] sm:$0xff]
        %v2783 = vld [vmem:[#allocation2 + $0x90] sm:$0xff]
        %v2784 = vmul.f32 %v2769, %v615
        %v2785 = vmul.f32 %v2770, %v619
        %v2786 = vmul.f32 %v2771, %v617
        %v2787 = vmul.f32 %v2772, %v615
        %v2788 = vmul.f32 %v2773, %v619
        %v2789 = vmul.f32 %v2774, %v617
        %v2790 = vmul.f32 %v2775, %v615
        %v2791 = vmul.f32 %v2776, %v619
        %v2792 = vmul.f32 %v2777, %v617
        %v2793 = vmul.f32 %v2778, %v615
        %v2794 = vmul.f32 %v2779, %v619
        %v2795 = vmul.f32 %v2780, %v617
        %v2796 = vmul.f32 %v2781, %v615
        %v2797 = vmul.f32 %v2782, %v619
        %v2798 = vmul.f32 %v2783, %v617
        %v2799 = vmul.f32 %v2769, %v632
        %v2800 = vmul.f32 %v2770, %v636
        %v2801 = vmul.f32 %v2771, %v634
        %v2802 = vmul.f32 %v2772, %v632
        %v2803 = vmul.f32 %v2773, %v636
        %v2804 = vmul.f32 %v2774, %v634
        %v2805 = vmul.f32 %v2775, %v632
        %v2806 = vmul.f32 %v2776, %v636
        %v2807 = vmul.f32 %v2777, %v634
        %v2808 = vmul.f32 %v2778, %v632
        %v2809 = vmul.f32 %v2779, %v636
        %v2810 = vmul.f32 %v2780, %v634
        %v2811 = vmul.f32 %v2781, %v632
        %v2812 = vmul.f32 %v2782, %v636
        %v2813 = vmul.f32 %v2783, %v634
        %v2814 = vmul.f32 %v2769, %v647
        %v2815 = vmul.f32 %v2770, %v651
        %v2816 = vmul.f32 %v2771, %v649
        %v2817 = vmul.f32 %v2772, %v647
        %v2818 = vmul.f32 %v2773, %v651
        %v2819 = vmul.f32 %v2774, %v649
        %v2820 = vmul.f32 %v2775, %v647
        %v2821 = vmul.f32 %v2776, %v651
        %v2822 = vmul.f32 %v2777, %v649
        %v2823 = vmul.f32 %v2778, %v647
        %v2824 = vmul.f32 %v2779, %v651
        %v2825 = vmul.f32 %v2780, %v649
        %v2826 = vmul.f32 %v2781, %v647
        %v2827 = vmul.f32 %v2782, %v651
        %v2828 = vmul.f32 %v2783, %v649
        %v2829 = vld [vmem:[#allocation2 + $0x18] sm:$0xff]
        %v2830 = vld [vmem:[#allocation2 + $0x38] sm:$0xff]
        %v2831 = vld [vmem:[#allocation2 + $0x58] sm:$0xff]
        %v2832 = vld [vmem:[#allocation2 + $0x78] sm:$0xff]
        %v2833 = vld [vmem:[#allocation2 + $0x98] sm:$0xff]
        %v2834 = vmul.f32 %v2770, %v664
        %v2835 = vmul.f32 %v2771, %v668
        %v2836 = vmul.f32 %v2829, %v666
        %v2837 = vmul.f32 %v2773, %v664
        %v2838 = vmul.f32 %v2774, %v668
        %v2839 = vmul.f32 %v2830, %v666
        %v2840 = vmul.f32 %v2776, %v664
        %v2841 = vmul.f32 %v2777, %v668
        %v2842 = vmul.f32 %v2831, %v666
        %v2843 = vmul.f32 %v2779, %v664
        %v2844 = vmul.f32 %v2780, %v668
        %v2845 = vmul.f32 %v2832, %v666
        %v2846 = vmul.f32 %v2782, %v664
        %v2847 = vmul.f32 %v2783, %v668
        %v2848 = vmul.f32 %v2833, %v666
        %v2849 = vmul.f32 %v2770, %v679
        %v2850 = vmul.f32 %v2771, %v683
        %v2851 = vmul.f32 %v2829, %v681
        %v2852 = vmul.f32 %v2773, %v679
        %v2853 = vmul.f32 %v2774, %v683
        %v2854 = vmul.f32 %v2830, %v681
        %v2855 = vmul.f32 %v2776, %v679
        %v2856 = vmul.f32 %v2777, %v683
        %v2857 = vmul.f32 %v2831, %v681
        %v2858 = vmul.f32 %v2779, %v679
        %v2859 = vmul.f32 %v2780, %v683
        %v2860 = vmul.f32 %v2832, %v681
        %v2861 = vmul.f32 %v2782, %v679
        %v2862 = vmul.f32 %v2783, %v683
        %v2863 = vmul.f32 %v2833, %v681
        %v2864 = vmul.f32 %v2770, %v694
        %v2865 = vmul.f32 %v2771, %v697
        %v2866 = vmul.f32 %v2829, %v696
        %v2867 = vmul.f32 %v2773, %v694
        %v2868 = vmul.f32 %v2774, %v697
        %v2869 = vmul.f32 %v2830, %v696
        %v2870 = vmul.f32 %v2776, %v694
        %v2871 = vmul.f32 %v2777, %v697
        %v2872 = vmul.f32 %v2831, %v696
        %v2873 = vmul.f32 %v2779, %v694
        %v2874 = vmul.f32 %v2780, %v697
        %v2875 = vmul.f32 %v2832, %v696
        %v2876 = vmul.f32 %v2782, %v694
        %v2877 = vmul.f32 %v2783, %v697
        %v2878 = vmul.f32 %v2833, %v696
        %2894 = vrot.lane.b32.xlu0 %v2769, 127
        %v2895 = vpop.permute.xlu0 %2894
        %2896 = vrot.lane.b32.xlu0 %v2770, 127
        %v2897 = vpop.permute.xlu0 %2896
        %2898 = vrot.lane.b32.xlu0 %v2771, 127
        %v2899 = vpop.permute.xlu0 %2898
        %2900 = vrot.lane.b32.xlu0 %v2772, 127
        %v2901 = vpop.permute.xlu0 %2900
        %2902 = vrot.lane.b32.xlu0 %v2773, 127
        %v2903 = vpop.permute.xlu0 %2902
        %2904 = vrot.lane.b32.xlu0 %v2774, 127
        %v2905 = vpop.permute.xlu0 %2904
        %2906 = vrot.lane.b32.xlu0 %v2775, 127
        %v2907 = vpop.permute.xlu0 %2906
        %2908 = vrot.lane.b32.xlu0 %v2776, 127
        %v2909 = vpop.permute.xlu0 %2908
        %2910 = vrot.lane.b32.xlu0 %v2777, 127
        %v2911 = vpop.permute.xlu0 %2910
        %2912 = vrot.lane.b32.xlu0 %v2778, 127
        %v2913 = vpop.permute.xlu0 %2912
        %2914 = vrot.lane.b32.xlu0 %v2779, 127
        %v2915 = vpop.permute.xlu0 %2914
        %2916 = vrot.lane.b32.xlu0 %v2780, 127
        %v2917 = vpop.permute.xlu0 %2916
        %2918 = vrot.lane.b32.xlu0 %v2781, 127
        %v2919 = vpop.permute.xlu0 %2918
        %2920 = vrot.lane.b32.xlu0 %v2782, 127
        %v2921 = vpop.permute.xlu0 %2920
        %2922 = vrot.lane.b32.xlu0 %v2783, 127
        %v2923 = vpop.permute.xlu0 %2922
        %v2924 = vsel %vm650, %v2895, %v2897
        %v2925 = vsel %vm650, %v2897, %v2899
        %v2926 = vsel %vm650, %v2901, %v2903
        %v2927 = vsel %vm650, %v2903, %v2905
        %v2928 = vsel %vm650, %v2907, %v2909
        %v2929 = vsel %vm650, %v2909, %v2911
        %v2930 = vsel %vm650, %v2913, %v2915
        %v2931 = vsel %vm650, %v2915, %v2917
        %v2932 = vsel %vm650, %v2919, %v2921
        %v2933 = vsel %vm650, %v2921, %v2923
        %2949 = vrot.lane.b32.xlu0 %v2799, 126
        %v2950 = vpop.permute.xlu0 %2949
        %2951 = vrot.lane.b32.xlu0 %v2800, 126
        %v2952 = vpop.permute.xlu0 %2951
        %2953 = vrot.lane.b32.xlu0 %v2801, 126
        %v2954 = vpop.permute.xlu0 %2953
        %2955 = vrot.lane.b32.xlu0 %v2802, 126
        %v2956 = vpop.permute.xlu0 %2955
        %2957 = vrot.lane.b32.xlu0 %v2803, 126
        %v2958 = vpop.permute.xlu0 %2957
        %2959 = vrot.lane.b32.xlu0 %v2804, 126
        %v2960 = vpop.permute.xlu0 %2959
        %2961 = vrot.lane.b32.xlu0 %v2805, 126
        %v2962 = vpop.permute.xlu0 %2961
        %2963 = vrot.lane.b32.xlu0 %v2806, 126
        %v2964 = vpop.permute.xlu0 %2963
        %2965 = vrot.lane.b32.xlu0 %v2807, 126
        %v2966 = vpop.permute.xlu0 %2965
        %2967 = vrot.lane.b32.xlu0 %v2808, 126
        %v2968 = vpop.permute.xlu0 %2967
        %2969 = vrot.lane.b32.xlu0 %v2809, 126
        %v2970 = vpop.permute.xlu0 %2969
        %2971 = vrot.lane.b32.xlu0 %v2810, 126
        %v2972 = vpop.permute.xlu0 %2971
        %2973 = vrot.lane.b32.xlu0 %v2811, 126
        %v2974 = vpop.permute.xlu0 %2973
        %2975 = vrot.lane.b32.xlu0 %v2812, 126
        %v2976 = vpop.permute.xlu0 %2975
        %2977 = vrot.lane.b32.xlu0 %v2813, 126
        %v2978 = vpop.permute.xlu0 %2977
        %v2979 = vsel %vm747, %v2950, %v2952
        %v2980 = vsel %vm747, %v2952, %v2954
        %v2981 = vsel %vm747, %v2956, %v2958
        %v2982 = vsel %vm747, %v2958, %v2960
        %v2983 = vsel %vm747, %v2962, %v2964
        %v2984 = vsel %vm747, %v2964, %v2966
        %v2985 = vsel %vm747, %v2968, %v2970
        %v2986 = vsel %vm747, %v2970, %v2972
        %v2987 = vsel %vm747, %v2974, %v2976
        %v2988 = vsel %vm747, %v2976, %v2978
        %3004 = vrot.lane.b32.xlu0 %v2814, 112
        %v3005 = vpop.permute.xlu0 %3004
        %3006 = vrot.lane.b32.xlu0 %v2815, 112
        %v3007 = vpop.permute.xlu0 %3006
        %3008 = vrot.lane.b32.xlu0 %v2816, 112
        %v3009 = vpop.permute.xlu0 %3008
        %3010 = vrot.lane.b32.xlu0 %v2817, 112
        %v3011 = vpop.permute.xlu0 %3010
        %3012 = vrot.lane.b32.xlu0 %v2818, 112
        %v3013 = vpop.permute.xlu0 %3012
        %3014 = vrot.lane.b32.xlu0 %v2819, 112
        %v3015 = vpop.permute.xlu0 %3014
        %3016 = vrot.lane.b32.xlu0 %v2820, 112
        %v3017 = vpop.permute.xlu0 %3016
        %3018 = vrot.lane.b32.xlu0 %v2821, 112
        %v3019 = vpop.permute.xlu0 %3018
        %3020 = vrot.lane.b32.xlu0 %v2822, 112
        %v3021 = vpop.permute.xlu0 %3020
        %3022 = vrot.lane.b32.xlu0 %v2823, 112
        %v3023 = vpop.permute.xlu0 %3022
        %3024 = vrot.lane.b32.xlu0 %v2824, 112
        %v3025 = vpop.permute.xlu0 %3024
        %3026 = vrot.lane.b32.xlu0 %v2825, 112
        %v3027 = vpop.permute.xlu0 %3026
        %3028 = vrot.lane.b32.xlu0 %v2826, 112
        %v3029 = vpop.permute.xlu0 %3028
        %3030 = vrot.lane.b32.xlu0 %v2827, 112
        %v3031 = vpop.permute.xlu0 %3030
        %3032 = vrot.lane.b32.xlu0 %v2828, 112
        %v3033 = vpop.permute.xlu0 %3032
        %v3034 = vsel %vm770, %v3005, %v3007
        %v3035 = vsel %vm770, %v3007, %v3009
        %v3036 = vsel %vm770, %v3011, %v3013
        %v3037 = vsel %vm770, %v3013, %v3015
        %v3038 = vsel %vm770, %v3017, %v3019
        %v3039 = vsel %vm770, %v3019, %v3021
        %v3040 = vsel %vm770, %v3023, %v3025
        %v3041 = vsel %vm770, %v3025, %v3027
        %v3042 = vsel %vm770, %v3029, %v3031
        %v3043 = vsel %vm770, %v3031, %v3033
        %3044 = vrot.lane.b32.xlu0 %v2770, 111
        %v3045 = vpop.permute.xlu0 %3044
        %3046 = vrot.lane.b32.xlu0 %v2771, 111
        %v3047 = vpop.permute.xlu0 %3046
        %3048 = vrot.lane.b32.xlu0 %v2773, 111
        %v3049 = vpop.permute.xlu0 %3048
        %3050 = vrot.lane.b32.xlu0 %v2774, 111
        %v3051 = vpop.permute.xlu0 %3050
        %3052 = vrot.lane.b32.xlu0 %v2776, 111
        %v3053 = vpop.permute.xlu0 %3052
        %3054 = vrot.lane.b32.xlu0 %v2777, 111
        %v3055 = vpop.permute.xlu0 %3054
        %3056 = vrot.lane.b32.xlu0 %v2779, 111
        %v3057 = vpop.permute.xlu0 %3056
        %3058 = vrot.lane.b32.xlu0 %v2780, 111
        %v3059 = vpop.permute.xlu0 %3058
        %3060 = vrot.lane.b32.xlu0 %v2782, 111
        %v3061 = vpop.permute.xlu0 %3060
        %3062 = vrot.lane.b32.xlu0 %v2783, 111
        %v3063 = vpop.permute.xlu0 %3062
        %v3064 = vsel %vm618, %v3045, %v3047
        %v3065 = vsel %vm618, %v3049, %v3051
        %v3066 = vsel %vm618, %v3053, %v3055
        %v3067 = vsel %vm618, %v3057, %v3059
        %v3068 = vsel %vm618, %v3061, %v3063
        %3084 = vrot.lane.b32.xlu0 %v2834, 110
        %v3085 = vpop.permute.xlu0 %3084
        %3086 = vrot.lane.b32.xlu0 %v2835, 110
        %v3087 = vpop.permute.xlu0 %3086
        %3088 = vrot.lane.b32.xlu0 %v2836, 110
        %v3089 = vpop.permute.xlu0 %3088
        %3090 = vrot.lane.b32.xlu0 %v2837, 110
        %v3091 = vpop.permute.xlu0 %3090
        %3092 = vrot.lane.b32.xlu0 %v2838, 110
        %v3093 = vpop.permute.xlu0 %3092
        %3094 = vrot.lane.b32.xlu0 %v2839, 110
        %v3095 = vpop.permute.xlu0 %3094
        %3096 = vrot.lane.b32.xlu0 %v2840, 110
        %v3097 = vpop.permute.xlu0 %3096
        %3098 = vrot.lane.b32.xlu0 %v2841, 110
        %v3099 = vpop.permute.xlu0 %3098
        %3100 = vrot.lane.b32.xlu0 %v2842, 110
        %v3101 = vpop.permute.xlu0 %3100
        %3102 = vrot.lane.b32.xlu0 %v2843, 110
        %v3103 = vpop.permute.xlu0 %3102
        %3104 = vrot.lane.b32.xlu0 %v2844, 110
        %v3105 = vpop.permute.xlu0 %3104
        %3106 = vrot.lane.b32.xlu0 %v2845, 110
        %v3107 = vpop.permute.xlu0 %3106
        %3108 = vrot.lane.b32.xlu0 %v2846, 110
        %v3109 = vpop.permute.xlu0 %3108
        %3110 = vrot.lane.b32.xlu0 %v2847, 110
        %v3111 = vpop.permute.xlu0 %3110
        %3112 = vrot.lane.b32.xlu0 %v2848, 110
        %v3113 = vpop.permute.xlu0 %3112
        %v3114 = vsel %vm803, %v3085, %v3087
        %v3115 = vsel %vm803, %v3087, %v3089
        %v3116 = vsel %vm803, %v3091, %v3093
        %v3117 = vsel %vm803, %v3093, %v3095
        %v3118 = vsel %vm803, %v3097, %v3099
        %v3119 = vsel %vm803, %v3099, %v3101
        %v3120 = vsel %vm803, %v3103, %v3105
        %v3121 = vsel %vm803, %v3105, %v3107
        %v3122 = vsel %vm803, %v3109, %v3111
        %v3123 = vsel %vm803, %v3111, %v3113
        %3139 = vrot.lane.b32.xlu0 %v2849, 96
        %v3140 = vpop.permute.xlu0 %3139
        %3141 = vrot.lane.b32.xlu0 %v2850, 96
        %v3142 = vpop.permute.xlu0 %3141
        %3143 = vrot.lane.b32.xlu0 %v2851, 96
        %v3144 = vpop.permute.xlu0 %3143
        %3145 = vrot.lane.b32.xlu0 %v2852, 96
        %v3146 = vpop.permute.xlu0 %3145
        %3147 = vrot.lane.b32.xlu0 %v2853, 96
        %v3148 = vpop.permute.xlu0 %3147
        %3149 = vrot.lane.b32.xlu0 %v2854, 96
        %v3150 = vpop.permute.xlu0 %3149
        %3151 = vrot.lane.b32.xlu0 %v2855, 96
        %v3152 = vpop.permute.xlu0 %3151
        %3153 = vrot.lane.b32.xlu0 %v2856, 96
        %v3154 = vpop.permute.xlu0 %3153
        %3155 = vrot.lane.b32.xlu0 %v2857, 96
        %v3156 = vpop.permute.xlu0 %3155
        %3157 = vrot.lane.b32.xlu0 %v2858, 96
        %v3158 = vpop.permute.xlu0 %3157
        %3159 = vrot.lane.b32.xlu0 %v2859, 96
        %v3160 = vpop.permute.xlu0 %3159
        %3161 = vrot.lane.b32.xlu0 %v2860, 96
        %v3162 = vpop.permute.xlu0 %3161
        %3163 = vrot.lane.b32.xlu0 %v2861, 96
        %v3164 = vpop.permute.xlu0 %3163
        %3165 = vrot.lane.b32.xlu0 %v2862, 96
        %v3166 = vpop.permute.xlu0 %3165
        %3167 = vrot.lane.b32.xlu0 %v2863, 96
        %v3168 = vpop.permute.xlu0 %3167
        %v3169 = vsel %vm826, %v3140, %v3142
        %v3170 = vsel %vm826, %v3142, %v3144
        %v3171 = vsel %vm826, %v3146, %v3148
        %v3172 = vsel %vm826, %v3148, %v3150
        %v3173 = vsel %vm826, %v3152, %v3154
        %v3174 = vsel %vm826, %v3154, %v3156
        %v3175 = vsel %vm826, %v3158, %v3160
        %v3176 = vsel %vm826, %v3160, %v3162
        %v3177 = vsel %vm826, %v3164, %v3166
        %v3178 = vsel %vm826, %v3166, %v3168
        %3184 = vrot.lane.b32.xlu0 %v2770, 95
        %v3185 = vpop.permute.xlu0 %3184
        %3186 = vrot.lane.b32.xlu0 %v2771, 95
        %v3187 = vpop.permute.xlu0 %3186
        %3188 = vrot.lane.b32.xlu0 %v2829, 95
        %v3189 = vpop.permute.xlu0 %3188
        %3190 = vrot.lane.b32.xlu0 %v2773, 95
        %v3191 = vpop.permute.xlu0 %3190
        %3192 = vrot.lane.b32.xlu0 %v2774, 95
        %v3193 = vpop.permute.xlu0 %3192
        %3194 = vrot.lane.b32.xlu0 %v2830, 95
        %v3195 = vpop.permute.xlu0 %3194
        %3196 = vrot.lane.b32.xlu0 %v2776, 95
        %v3197 = vpop.permute.xlu0 %3196
        %3198 = vrot.lane.b32.xlu0 %v2777, 95
        %v3199 = vpop.permute.xlu0 %3198
        %3200 = vrot.lane.b32.xlu0 %v2831, 95
        %v3201 = vpop.permute.xlu0 %3200
        %3202 = vrot.lane.b32.xlu0 %v2779, 95
        %v3203 = vpop.permute.xlu0 %3202
        %3204 = vrot.lane.b32.xlu0 %v2780, 95
        %v3205 = vpop.permute.xlu0 %3204
        %3206 = vrot.lane.b32.xlu0 %v2832, 95
        %v3207 = vpop.permute.xlu0 %3206
        %3208 = vrot.lane.b32.xlu0 %v2782, 95
        %v3209 = vpop.permute.xlu0 %3208
        %3210 = vrot.lane.b32.xlu0 %v2783, 95
        %v3211 = vpop.permute.xlu0 %3210
        %3212 = vrot.lane.b32.xlu0 %v2833, 95
        %v3213 = vpop.permute.xlu0 %3212
        %v3214 = vsel %vm845, %v3185, %v3187
        %v3215 = vsel %vm845, %v3187, %v3189
        %v3216 = vsel %vm845, %v3191, %v3193
        %v3217 = vsel %vm845, %v3193, %v3195
        %v3218 = vsel %vm845, %v3197, %v3199
        %v3219 = vsel %vm845, %v3199, %v3201
        %v3220 = vsel %vm845, %v3203, %v3205
        %v3221 = vsel %vm845, %v3205, %v3207
        %v3222 = vsel %vm845, %v3209, %v3211
        %v3223 = vsel %vm845, %v3211, %v3213
        %3239 = vrot.lane.b32.xlu0 %v2864, 94
        %v3240 = vpop.permute.xlu0 %3239
        %3241 = vrot.lane.b32.xlu0 %v2865, 94
        %v3242 = vpop.permute.xlu0 %3241
        %3243 = vrot.lane.b32.xlu0 %v2866, 94
        %v3244 = vpop.permute.xlu0 %3243
        %3245 = vrot.lane.b32.xlu0 %v2867, 94
        %v3246 = vpop.permute.xlu0 %3245
        %3247 = vrot.lane.b32.xlu0 %v2868, 94
        %v3248 = vpop.permute.xlu0 %3247
        %3249 = vrot.lane.b32.xlu0 %v2869, 94
        %v3250 = vpop.permute.xlu0 %3249
        %3251 = vrot.lane.b32.xlu0 %v2870, 94
        %v3252 = vpop.permute.xlu0 %3251
        %3253 = vrot.lane.b32.xlu0 %v2871, 94
        %v3254 = vpop.permute.xlu0 %3253
        %3255 = vrot.lane.b32.xlu0 %v2872, 94
        %v3256 = vpop.permute.xlu0 %3255
        %3257 = vrot.lane.b32.xlu0 %v2873, 94
        %v3258 = vpop.permute.xlu0 %3257
        %3259 = vrot.lane.b32.xlu0 %v2874, 94
        %v3260 = vpop.permute.xlu0 %3259
        %3261 = vrot.lane.b32.xlu0 %v2875, 94
        %v3262 = vpop.permute.xlu0 %3261
        %3263 = vrot.lane.b32.xlu0 %v2876, 94
        %v3264 = vpop.permute.xlu0 %3263
        %3265 = vrot.lane.b32.xlu0 %v2877, 94
        %v3266 = vpop.permute.xlu0 %3265
        %3267 = vrot.lane.b32.xlu0 %v2878, 94
        %v3268 = vpop.permute.xlu0 %3267
        %v3269 = vsel %vm868, %v3240, %v3242
        %v3270 = vsel %vm868, %v3242, %v3244
        %v3271 = vsel %vm868, %v3246, %v3248
        %v3272 = vsel %vm868, %v3248, %v3250
        %v3273 = vsel %vm868, %v3252, %v3254
        %v3274 = vsel %vm868, %v3254, %v3256
        %v3275 = vsel %vm868, %v3258, %v3260
        %v3276 = vsel %vm868, %v3260, %v3262
        %v3277 = vsel %vm868, %v3264, %v3266
        %v3278 = vsel %vm868, %v3266, %v3268
        %v3279 = vld [vmem:[#allocation15] sm:$0xff]
        %v3280 = vld [vmem:[#allocation15 + $0x8] sm:$0xff]
        %v3281 = vld [vmem:[#allocation15 + $0x10] sm:$0xff]
        %v3282 = vld [vmem:[#allocation17] sm:$0xff]
        %3284 = vset.pattern.permute.xlu0 0
        %3285 = vperm.xlu0 %3284, %v3282
        %v3286 = vpop.permute.xlu0 %3285
        %3303 = vrot.lane.b32.xlu0 %v2784, 17
        %v3304 = vpop.permute.xlu0 %3303
        %3305 = vrot.lane.b32.xlu0 %v2785, 17
        %v3306 = vpop.permute.xlu0 %3305
        %3307 = vrot.lane.b32.xlu0 %v2786, 17
        %v3308 = vpop.permute.xlu0 %3307
        %3309 = vrot.lane.b32.xlu0 %v2787, 17
        %v3310 = vpop.permute.xlu0 %3309
        %3311 = vrot.lane.b32.xlu0 %v2788, 17
        %v3312 = vpop.permute.xlu0 %3311
        %3313 = vrot.lane.b32.xlu0 %v2789, 17
        %v3314 = vpop.permute.xlu0 %3313
        %3315 = vrot.lane.b32.xlu0 %v2790, 17
        %v3316 = vpop.permute.xlu0 %3315
        %3317 = vrot.lane.b32.xlu0 %v2791, 17
        %v3318 = vpop.permute.xlu0 %3317
        %3319 = vrot.lane.b32.xlu0 %v2792, 17
        %v3320 = vpop.permute.xlu0 %3319
        %3321 = vrot.lane.b32.xlu0 %v2793, 17
        %v3322 = vpop.permute.xlu0 %3321
        %3323 = vrot.lane.b32.xlu0 %v2794, 17
        %v3324 = vpop.permute.xlu0 %3323
        %3325 = vrot.lane.b32.xlu0 %v2795, 17
        %v3326 = vpop.permute.xlu0 %3325
        %3327 = vrot.lane.b32.xlu0 %v2796, 17
        %v3328 = vpop.permute.xlu0 %3327
        %3329 = vrot.lane.b32.xlu0 %v2797, 17
        %v3330 = vpop.permute.xlu0 %3329
        %3331 = vrot.lane.b32.xlu0 %v2798, 17
        %v3332 = vpop.permute.xlu0 %3331
        %3333 = vrot.lane.b32.xlu0 %v2924, 17
        %v3334 = vpop.permute.xlu0 %3333
        %3335 = vrot.lane.b32.xlu0 %v2925, 17
        %v3336 = vpop.permute.xlu0 %3335
        %3337 = vrot.lane.b32.xlu0 %v2899, 17
        %v3338 = vpop.permute.xlu0 %3337
        %3339 = vrot.lane.b32.xlu0 %v2926, 17
        %v3340 = vpop.permute.xlu0 %3339
        %3341 = vrot.lane.b32.xlu0 %v2927, 17
        %v3342 = vpop.permute.xlu0 %3341
        %3343 = vrot.lane.b32.xlu0 %v2905, 17
        %v3344 = vpop.permute.xlu0 %3343
        %3345 = vrot.lane.b32.xlu0 %v2928, 17
        %v3346 = vpop.permute.xlu0 %3345
        %3347 = vrot.lane.b32.xlu0 %v2929, 17
        %v3348 = vpop.permute.xlu0 %3347
        %3349 = vrot.lane.b32.xlu0 %v2911, 17
        %v3350 = vpop.permute.xlu0 %3349
        %3351 = vrot.lane.b32.xlu0 %v2930, 17
        %v3352 = vpop.permute.xlu0 %3351
        %3353 = vrot.lane.b32.xlu0 %v2931, 17
        %v3354 = vpop.permute.xlu0 %3353
        %3355 = vrot.lane.b32.xlu0 %v2917, 17
        %v3356 = vpop.permute.xlu0 %3355
        %3357 = vrot.lane.b32.xlu0 %v2932, 17
        %v3358 = vpop.permute.xlu0 %3357
        %3359 = vrot.lane.b32.xlu0 %v2933, 17
        %v3360 = vpop.permute.xlu0 %3359
        %3361 = vrot.lane.b32.xlu0 %v2923, 17
        %v3362 = vpop.permute.xlu0 %3361
        %3363 = vrot.lane.b32.xlu0 %v2979, 17
        %v3364 = vpop.permute.xlu0 %3363
        %3365 = vrot.lane.b32.xlu0 %v2980, 17
        %v3366 = vpop.permute.xlu0 %3365
        %3367 = vrot.lane.b32.xlu0 %v2954, 17
        %v3368 = vpop.permute.xlu0 %3367
        %3369 = vrot.lane.b32.xlu0 %v2981, 17
        %v3370 = vpop.permute.xlu0 %3369
        %3371 = vrot.lane.b32.xlu0 %v2982, 17
        %v3372 = vpop.permute.xlu0 %3371
        %3373 = vrot.lane.b32.xlu0 %v2960, 17
        %v3374 = vpop.permute.xlu0 %3373
        %3375 = vrot.lane.b32.xlu0 %v2983, 17
        %v3376 = vpop.permute.xlu0 %3375
        %3377 = vrot.lane.b32.xlu0 %v2984, 17
        %v3378 = vpop.permute.xlu0 %3377
        %3379 = vrot.lane.b32.xlu0 %v2966, 17
        %v3380 = vpop.permute.xlu0 %3379
        %3381 = vrot.lane.b32.xlu0 %v2985, 17
        %v3382 = vpop.permute.xlu0 %3381
        %3383 = vrot.lane.b32.xlu0 %v2986, 17
        %v3384 = vpop.permute.xlu0 %3383
        %3385 = vrot.lane.b32.xlu0 %v2972, 17
        %v3386 = vpop.permute.xlu0 %3385
        %3387 = vrot.lane.b32.xlu0 %v2987, 17
        %v3388 = vpop.permute.xlu0 %3387
        %3389 = vrot.lane.b32.xlu0 %v2988, 17
        %v3390 = vpop.permute.xlu0 %3389
        %3391 = vrot.lane.b32.xlu0 %v2978, 17
        %v3392 = vpop.permute.xlu0 %3391
        %3393 = vrot.lane.b32.xlu0 %v3034, 17
        %v3394 = vpop.permute.xlu0 %3393
        %3395 = vrot.lane.b32.xlu0 %v3035, 17
        %v3396 = vpop.permute.xlu0 %3395
        %3397 = vrot.lane.b32.xlu0 %v3009, 17
        %v3398 = vpop.permute.xlu0 %3397
        %3399 = vrot.lane.b32.xlu0 %v3036, 17
        %v3400 = vpop.permute.xlu0 %3399
        %3401 = vrot.lane.b32.xlu0 %v3037, 17
        %v3402 = vpop.permute.xlu0 %3401
        %3403 = vrot.lane.b32.xlu0 %v3015, 17
        %v3404 = vpop.permute.xlu0 %3403
        %3405 = vrot.lane.b32.xlu0 %v3038, 17
        %v3406 = vpop.permute.xlu0 %3405
        %3407 = vrot.lane.b32.xlu0 %v3039, 17
        %v3408 = vpop.permute.xlu0 %3407
        %3409 = vrot.lane.b32.xlu0 %v3021, 17
        %v3410 = vpop.permute.xlu0 %3409
        %3411 = vrot.lane.b32.xlu0 %v3040, 17
        %v3412 = vpop.permute.xlu0 %3411
        %3413 = vrot.lane.b32.xlu0 %v3041, 17
        %v3414 = vpop.permute.xlu0 %3413
        %3415 = vrot.lane.b32.xlu0 %v3027, 17
        %v3416 = vpop.permute.xlu0 %3415
        %3417 = vrot.lane.b32.xlu0 %v3042, 17
        %v3418 = vpop.permute.xlu0 %3417
        %3419 = vrot.lane.b32.xlu0 %v3043, 17
        %v3420 = vpop.permute.xlu0 %3419
        %3421 = vrot.lane.b32.xlu0 %v3033, 17
        %v3422 = vpop.permute.xlu0 %3421
        %3423 = vrot.lane.b32.xlu0 %v3045, 17
        %v3424 = vpop.permute.xlu0 %3423
        %3425 = vrot.lane.b32.xlu0 %v3064, 17
        %v3426 = vpop.permute.xlu0 %3425
        %3427 = vrot.lane.b32.xlu0 %v3047, 17
        %v3428 = vpop.permute.xlu0 %3427
        %3429 = vrot.lane.b32.xlu0 %v3049, 17
        %v3430 = vpop.permute.xlu0 %3429
        %3431 = vrot.lane.b32.xlu0 %v3065, 17
        %v3432 = vpop.permute.xlu0 %3431
        %3433 = vrot.lane.b32.xlu0 %v3051, 17
        %v3434 = vpop.permute.xlu0 %3433
        %3435 = vrot.lane.b32.xlu0 %v3053, 17
        %v3436 = vpop.permute.xlu0 %3435
        %3437 = vrot.lane.b32.xlu0 %v3066, 17
        %v3438 = vpop.permute.xlu0 %3437
        %3439 = vrot.lane.b32.xlu0 %v3055, 17
        %v3440 = vpop.permute.xlu0 %3439
        %3441 = vrot.lane.b32.xlu0 %v3057, 17
        %v3442 = vpop.permute.xlu0 %3441
        %3443 = vrot.lane.b32.xlu0 %v3067, 17
        %v3444 = vpop.permute.xlu0 %3443
        %3445 = vrot.lane.b32.xlu0 %v3059, 17
        %v3446 = vpop.permute.xlu0 %3445
        %3447 = vrot.lane.b32.xlu0 %v3061, 17
        %v3448 = vpop.permute.xlu0 %3447
        %3449 = vrot.lane.b32.xlu0 %v3068, 17
        %v3450 = vpop.permute.xlu0 %3449
        %3451 = vrot.lane.b32.xlu0 %v3063, 17
        %v3452 = vpop.permute.xlu0 %3451
        %3453 = vrot.lane.b32.xlu0 %v3085, 17
        %v3454 = vpop.permute.xlu0 %3453
        %3455 = vrot.lane.b32.xlu0 %v3114, 17
        %v3456 = vpop.permute.xlu0 %3455
        %3457 = vrot.lane.b32.xlu0 %v3115, 17
        %v3458 = vpop.permute.xlu0 %3457
        %3459 = vrot.lane.b32.xlu0 %v3091, 17
        %v3460 = vpop.permute.xlu0 %3459
        %3461 = vrot.lane.b32.xlu0 %v3116, 17
        %v3462 = vpop.permute.xlu0 %3461
        %3463 = vrot.lane.b32.xlu0 %v3117, 17
        %v3464 = vpop.permute.xlu0 %3463
        %3465 = vrot.lane.b32.xlu0 %v3097, 17
        %v3466 = vpop.permute.xlu0 %3465
        %3467 = vrot.lane.b32.xlu0 %v3118, 17
        %v3468 = vpop.permute.xlu0 %3467
        %3469 = vrot.lane.b32.xlu0 %v3119, 17
        %v3470 = vpop.permute.xlu0 %3469
        %3471 = vrot.lane.b32.xlu0 %v3103, 17
        %v3472 = vpop.permute.xlu0 %3471
        %3473 = vrot.lane.b32.xlu0 %v3120, 17
        %v3474 = vpop.permute.xlu0 %3473
        %3475 = vrot.lane.b32.xlu0 %v3121, 17
        %v3476 = vpop.permute.xlu0 %3475
        %3477 = vrot.lane.b32.xlu0 %v3109, 17
        %v3478 = vpop.permute.xlu0 %3477
        %3479 = vrot.lane.b32.xlu0 %v3122, 17
        %v3480 = vpop.permute.xlu0 %3479
        %3481 = vrot.lane.b32.xlu0 %v3123, 17
        %v3482 = vpop.permute.xlu0 %3481
        %3483 = vrot.lane.b32.xlu0 %v3140, 17
        %v3484 = vpop.permute.xlu0 %3483
        %3485 = vrot.lane.b32.xlu0 %v3169, 17
        %v3486 = vpop.permute.xlu0 %3485
        %3487 = vrot.lane.b32.xlu0 %v3170, 17
        %v3488 = vpop.permute.xlu0 %3487
        %3489 = vrot.lane.b32.xlu0 %v3146, 17
        %v3490 = vpop.permute.xlu0 %3489
        %3491 = vrot.lane.b32.xlu0 %v3171, 17
        %v3492 = vpop.permute.xlu0 %3491
        %3493 = vrot.lane.b32.xlu0 %v3172, 17
        %v3494 = vpop.permute.xlu0 %3493
        %3495 = vrot.lane.b32.xlu0 %v3152, 17
        %v3496 = vpop.permute.xlu0 %3495
        %3497 = vrot.lane.b32.xlu0 %v3173, 17
        %v3498 = vpop.permute.xlu0 %3497
        %3499 = vrot.lane.b32.xlu0 %v3174, 17
        %v3500 = vpop.permute.xlu0 %3499
        %3501 = vrot.lane.b32.xlu0 %v3158, 17
        %v3502 = vpop.permute.xlu0 %3501
        %3503 = vrot.lane.b32.xlu0 %v3175, 17
        %v3504 = vpop.permute.xlu0 %3503
        %3505 = vrot.lane.b32.xlu0 %v3176, 17
        %v3506 = vpop.permute.xlu0 %3505
        %3507 = vrot.lane.b32.xlu0 %v3164, 17
        %v3508 = vpop.permute.xlu0 %3507
        %3509 = vrot.lane.b32.xlu0 %v3177, 17
        %v3510 = vpop.permute.xlu0 %3509
        %3511 = vrot.lane.b32.xlu0 %v3178, 17
        %v3512 = vpop.permute.xlu0 %3511
        %3513 = vrot.lane.b32.xlu0 %v3185, 17
        %v3514 = vpop.permute.xlu0 %3513
        %3515 = vrot.lane.b32.xlu0 %v3214, 17
        %v3516 = vpop.permute.xlu0 %3515
        %3517 = vrot.lane.b32.xlu0 %v3215, 17
        %v3518 = vpop.permute.xlu0 %3517
        %3519 = vrot.lane.b32.xlu0 %v3191, 17
        %v3520 = vpop.permute.xlu0 %3519
        %3521 = vrot.lane.b32.xlu0 %v3216, 17
        %v3522 = vpop.permute.xlu0 %3521
        %3523 = vrot.lane.b32.xlu0 %v3217, 17
        %v3524 = vpop.permute.xlu0 %3523
        %3525 = vrot.lane.b32.xlu0 %v3197, 17
        %v3526 = vpop.permute.xlu0 %3525
        %3527 = vrot.lane.b32.xlu0 %v3218, 17
        %v3528 = vpop.permute.xlu0 %3527
        %3529 = vrot.lane.b32.xlu0 %v3219, 17
        %v3530 = vpop.permute.xlu0 %3529
        %3531 = vrot.lane.b32.xlu0 %v3203, 17
        %v3532 = vpop.permute.xlu0 %3531
        %3533 = vrot.lane.b32.xlu0 %v3220, 17
        %v3534 = vpop.permute.xlu0 %3533
        %3535 = vrot.lane.b32.xlu0 %v3221, 17
        %v3536 = vpop.permute.xlu0 %3535
        %3537 = vrot.lane.b32.xlu0 %v3209, 17
        %v3538 = vpop.permute.xlu0 %3537
        %3539 = vrot.lane.b32.xlu0 %v3222, 17
        %v3540 = vpop.permute.xlu0 %3539
        %3541 = vrot.lane.b32.xlu0 %v3223, 17
        %v3542 = vpop.permute.xlu0 %3541
        %3543 = vrot.lane.b32.xlu0 %v3240, 17
        %v3544 = vpop.permute.xlu0 %3543
        %3545 = vrot.lane.b32.xlu0 %v3269, 17
        %v3546 = vpop.permute.xlu0 %3545
        %3547 = vrot.lane.b32.xlu0 %v3270, 17
        %v3548 = vpop.permute.xlu0 %3547
        %3549 = vrot.lane.b32.xlu0 %v3246, 17
        %v3550 = vpop.permute.xlu0 %3549
        %3551 = vrot.lane.b32.xlu0 %v3271, 17
        %v3552 = vpop.permute.xlu0 %3551
        %3553 = vrot.lane.b32.xlu0 %v3272, 17
        %v3554 = vpop.permute.xlu0 %3553
        %3555 = vrot.lane.b32.xlu0 %v3252, 17
        %v3556 = vpop.permute.xlu0 %3555
        %3557 = vrot.lane.b32.xlu0 %v3273, 17
        %v3558 = vpop.permute.xlu0 %3557
        %3559 = vrot.lane.b32.xlu0 %v3274, 17
        %v3560 = vpop.permute.xlu0 %3559
        %3561 = vrot.lane.b32.xlu0 %v3258, 17
        %v3562 = vpop.permute.xlu0 %3561
        %3563 = vrot.lane.b32.xlu0 %v3275, 17
        %v3564 = vpop.permute.xlu0 %3563
        %3565 = vrot.lane.b32.xlu0 %v3276, 17
        %v3566 = vpop.permute.xlu0 %3565
        %3567 = vrot.lane.b32.xlu0 %v3264, 17
        %v3568 = vpop.permute.xlu0 %3567
        %3569 = vrot.lane.b32.xlu0 %v3277, 17
        %v3570 = vpop.permute.xlu0 %3569
        %3571 = vrot.lane.b32.xlu0 %v3278, 17
        %v3572 = vpop.permute.xlu0 %3571
        %v3573 = vsel %vm537, %v3304, %v3306
        %v3574 = vsel %vm537, %v3306, %v3308
        %v3575 = vsel %vm537, %v3310, %v3312
        %v3576 = vsel %vm537, %v3312, %v3314
        %v3577 = vsel %vm537, %v3316, %v3318
        %v3578 = vsel %vm537, %v3318, %v3320
        %v3579 = vsel %vm537, %v3322, %v3324
        %v3580 = vsel %vm537, %v3324, %v3326
        %v3581 = vsel %vm537, %v3328, %v3330
        %v3582 = vsel %vm537, %v3330, %v3332
        %v3583 = vsel %vm537, %v3334, %v3336
        %v3584 = vsel %vm537, %v3336, %v3338
        %v3585 = vsel %vm537, %v3340, %v3342
        %v3586 = vsel %vm537, %v3342, %v3344
        %v3587 = vsel %vm537, %v3346, %v3348
        %v3588 = vsel %vm537, %v3348, %v3350
        %v3589 = vsel %vm537, %v3352, %v3354
        %v3590 = vsel %vm537, %v3354, %v3356
        %v3591 = vsel %vm537, %v3358, %v3360
        %v3592 = vsel %vm537, %v3360, %v3362
        %v3593 = vsel %vm537, %v3364, %v3366
        %v3594 = vsel %vm537, %v3366, %v3368
        %v3595 = vsel %vm537, %v3370, %v3372
        %v3596 = vsel %vm537, %v3372, %v3374
        %v3597 = vsel %vm537, %v3376, %v3378
        %v3598 = vsel %vm537, %v3378, %v3380
        %v3599 = vsel %vm537, %v3382, %v3384
        %v3600 = vsel %vm537, %v3384, %v3386
        %v3601 = vsel %vm537, %v3388, %v3390
        %v3602 = vsel %vm537, %v3390, %v3392
        %v3603 = vsel %vm537, %v3394, %v3396
        %v3604 = vsel %vm537, %v3396, %v3398
        %v3605 = vsel %vm537, %v3400, %v3402
        %v3606 = vsel %vm537, %v3402, %v3404
        %v3607 = vsel %vm537, %v3406, %v3408
        %v3608 = vsel %vm537, %v3408, %v3410
        %v3609 = vsel %vm537, %v3412, %v3414
        %v3610 = vsel %vm537, %v3414, %v3416
        %v3611 = vsel %vm537, %v3418, %v3420
        %v3612 = vsel %vm537, %v3420, %v3422
        %v3613 = vsel %vm537, %v3424, %v3426
        %v3614 = vsel %vm537, %v3426, %v3428
        %v3615 = vsel %vm537, %v3430, %v3432
        %v3616 = vsel %vm537, %v3432, %v3434
        %v3617 = vsel %vm537, %v3436, %v3438
        %v3618 = vsel %vm537, %v3438, %v3440
        %v3619 = vsel %vm537, %v3442, %v3444
        %v3620 = vsel %vm537, %v3444, %v3446
        %v3621 = vsel %vm537, %v3448, %v3450
        %v3622 = vsel %vm537, %v3450, %v3452
        %v3623 = vsel %vm537, %v3454, %v3456
        %v3624 = vsel %vm537, %v3456, %v3458
        %v3625 = vsel %vm537, %v3460, %v3462
        %v3626 = vsel %vm537, %v3462, %v3464
        %v3627 = vsel %vm537, %v3466, %v3468
        %v3628 = vsel %vm537, %v3468, %v3470
        %v3629 = vsel %vm537, %v3472, %v3474
        %v3630 = vsel %vm537, %v3474, %v3476
        %v3631 = vsel %vm537, %v3478, %v3480
        %v3632 = vsel %vm537, %v3480, %v3482
        %v3633 = vsel %vm537, %v3484, %v3486
        %v3634 = vsel %vm537, %v3486, %v3488
        %v3635 = vsel %vm537, %v3490, %v3492
        %v3636 = vsel %vm537, %v3492, %v3494
        %v3637 = vsel %vm537, %v3496, %v3498
        %v3638 = vsel %vm537, %v3498, %v3500
        %v3639 = vsel %vm537, %v3502, %v3504
        %v3640 = vsel %vm537, %v3504, %v3506
        %v3641 = vsel %vm537, %v3508, %v3510
        %v3642 = vsel %vm537, %v3510, %v3512
        %v3643 = vsel %vm537, %v3514, %v3516
        %v3644 = vsel %vm537, %v3516, %v3518
        %v3645 = vsel %vm537, %v3520, %v3522
        %v3646 = vsel %vm537, %v3522, %v3524
        %v3647 = vsel %vm537, %v3526, %v3528
        %v3648 = vsel %vm537, %v3528, %v3530
        %v3649 = vsel %vm537, %v3532, %v3534
        %v3650 = vsel %vm537, %v3534, %v3536
        %v3651 = vsel %vm537, %v3538, %v3540
        %v3652 = vsel %vm537, %v3540, %v3542
        %v3653 = vsel %vm537, %v3544, %v3546
        %v3654 = vsel %vm537, %v3546, %v3548
        %v3655 = vsel %vm537, %v3550, %v3552
        %v3656 = vsel %vm537, %v3552, %v3554
        %v3657 = vsel %vm537, %v3556, %v3558
        %v3658 = vsel %vm537, %v3558, %v3560
        %v3659 = vsel %vm537, %v3562, %v3564
        %v3660 = vsel %vm537, %v3564, %v3566
        %v3661 = vsel %vm537, %v3568, %v3570
        %v3662 = vsel %vm537, %v3570, %v3572
        %vm3753 = vcmask 850944
        %v3755 = vsel %vm3753, %v3281, 0
        %3757 = vmatprep.subr.mxu0 %v3574
        %3758 = vmatpush1.msra.mxu0 %v3573
        %3759 = vmatprep.subr.mxu0 %v3576
        %3760 = vmatpush1.msra.mxu0 %v3575
        %3761 = vmatprep.subr.mxu0 %v3578
        %3762 = vmatpush1.msra.mxu0 %v3577
        %3763 = vmatprep.subr.mxu0 %v3580
        %3764 = vmatpush1.msra.mxu0 %v3579
        %3765 = vmatprep.subr.mxu0 %v3582
        %3766 = vmatpush1.msra.mxu0 %v3581
        %3767 = vmatprep.subr.mxu0 %v3584
        %3768 = vmatpush1.msra.mxu0 %v3583
        %3769 = vmatprep.subr.mxu0 %v3586
        %3770 = vmatpush1.msra.mxu0 %v3585
        %3771 = vmatprep.subr.mxu0 %v3588
        %3772 = vmatpush1.msra.mxu0 %v3587
        %3773 = vmatprep.subr.mxu0 %v3590
        %3774 = vmatpush1.msra.mxu0 %v3589
        %3775 = vmatprep.subr.mxu0 %v3592
        %3776 = vmatpush1.msra.mxu0 %v3591
        %3777 = vmatprep.subr.mxu0 %v3594
        %3778 = vmatpush1.msra.mxu0 %v3593
        %3779 = vmatprep.subr.mxu0 %v3596
        %3780 = vmatpush1.msra.mxu0 %v3595
        %3781 = vmatprep.subr.mxu0 %v3598
        %3782 = vmatpush1.msra.mxu0 %v3597
        %3783 = vmatprep.subr.mxu0 %v3600
        %3784 = vmatpush1.msra.mxu0 %v3599
        %3785 = vmatprep.subr.mxu0 %v3602
        %3786 = vmatpush1.msra.mxu0 %v3601
        %3787 = vmatprep.subr.mxu0 %v3604
        %3788 = vmatpush1.msra.mxu0 %v3603
        %3789 = vmatprep.subr.mxu0 %v3606
        %3790 = vmatpush1.msra.mxu0 %v3605
        %3791 = vmatprep.subr.mxu0 %v3608
        %3792 = vmatpush1.msra.mxu0 %v3607
        %3793 = vmatprep.subr.mxu0 %v3610
        %3794 = vmatpush1.msra.mxu0 %v3609
        %3795 = vmatprep.subr.mxu0 %v3612
        %3796 = vmatpush1.msra.mxu0 %v3611
        %3797 = vmatprep.subr.mxu0 %v3614
        %3798 = vmatpush1.msra.mxu0 %v3613
        %3799 = vmatprep.subr.mxu0 %v3616
        %3800 = vmatpush1.msra.mxu0 %v3615
        %3801 = vmatprep.subr.mxu0 %v3618
        %3802 = vmatpush1.msra.mxu0 %v3617
        %3803 = vmatprep.subr.mxu0 %v3620
        %3804 = vmatpush1.msra.mxu0 %v3619
        %3805 = vmatprep.subr.mxu0 %v3622
        %3806 = vmatpush1.msra.mxu0 %v3621
        %3807 = vmatprep.subr.mxu0 %v3624
        %3808 = vmatpush1.msra.mxu0 %v3623
        %3809 = vmatprep.subr.mxu0 %v3626
        %3810 = vmatpush1.msra.mxu0 %v3625
        %3811 = vmatprep.subr.mxu0 %v3628
        %3812 = vmatpush1.msra.mxu0 %v3627
        %3813 = vmatprep.subr.mxu0 %v3630
        %3814 = vmatpush1.msra.mxu0 %v3629
        %3815 = vmatprep.subr.mxu0 %v3632
        %3816 = vmatpush1.msra.mxu0 %v3631
        %3817 = vmatprep.subr.mxu0 %v3634
        %3818 = vmatpush1.msra.mxu0 %v3633
        %3819 = vmatprep.subr.mxu0 %v3636
        %3820 = vmatpush1.msra.mxu0 %v3635
        %3821 = vmatprep.mubr.f32.mxu0 %v3280
        %3822 = vmatmul.mubr.f32.gmra.mrb[0].mxu0 %v3279
        %v3823 = vpop.f32.mrb[0].mxu0
        %v3824 = vadd.f32 %v3286, %v3823
        %v3825 = vpop.f32.mrb[0].mxu0
        %v3826 = vadd.f32 %v3286, %v3825
        %3827 = vdwg.mxu0
        %3828 = vmatprep.subr.mxu0 %v3638
        %3829 = vmatpush1.msra.mxu0 %v3637
        %3830 = vmatprep.subr.mxu0 %v3640
        %3831 = vmatpush1.msra.mxu0 %v3639
        %3832 = vmatprep.subr.mxu0 %v3642
        %3833 = vmatpush1.msra.mxu0 %v3641
        %3834 = vmatprep.subr.mxu0 %v3644
        %3835 = vmatpush1.msra.mxu0 %v3643
        %3836 = vmatprep.subr.mxu0 %v3646
        %3837 = vmatpush1.msra.mxu0 %v3645
        %3838 = vmatprep.subr.mxu0 %v3648
        %3839 = vmatpush1.msra.mxu0 %v3647
        %3840 = vmatprep.subr.mxu0 %v3650
        %3841 = vmatpush1.msra.mxu0 %v3649
        %3842 = vmatprep.subr.mxu0 %v3652
        %3843 = vmatpush1.msra.mxu0 %v3651
        %3844 = vmatprep.subr.mxu0 %v3654
        %3845 = vmatpush1.msra.mxu0 %v3653
        %3846 = vmatprep.subr.mxu0 %v3656
        %3847 = vmatpush1.msra.mxu0 %v3655
        %3848 = vmatprep.subr.mxu0 %v3658
        %3849 = vmatpush1.msra.mxu0 %v3657
        %3850 = vmatprep.subr.mxu0 %v3660
        %3851 = vmatpush1.msra.mxu0 %v3659
        %3852 = vmatprep.subr.mxu0 %v3662
        %3853 = vmatpush1.msra.mxu0 %v3661
        %3854 = vmatprep.subr.mxu0 0.0
        %3855 = vmatpush1.msra.mxu0 0.0
        %3856 = vmatprep.subr.mxu0 0.0
        %3857 = vmatpush1.msra.mxu0 0.0
        %3858 = vmatprep.subr.mxu0 0.0
        %3859 = vmatpush1.msra.mxu0 0.0
        %3860 = vmatprep.subr.mxu0 0.0
        %3861 = vmatpush1.msra.mxu0 0.0
        %3862 = vmatprep.subr.mxu0 0.0
        %3863 = vmatpush1.msra.mxu0 0.0
        %3864 = vmatprep.subr.mxu0 0.0
        %3865 = vmatpush1.msra.mxu0 0.0
        %3866 = vmatprep.subr.mxu0 0.0
        %3867 = vmatpush1.msra.mxu0 0.0
        %3868 = vmatprep.subr.mxu0 0.0
        %3869 = vmatpush1.msra.mxu0 0.0
        %3870 = vmatprep.subr.mxu0 0.0
        %3871 = vmatpush1.msra.mxu0 0.0
        %3872 = vmatprep.subr.mxu0 0.0
        %3873 = vmatpush1.msra.mxu0 0.0
        %3874 = vmatprep.subr.mxu0 0.0
        %3875 = vmatpush1.msra.mxu0 0.0
        %3876 = vmatprep.subr.mxu0 0.0
        %3877 = vmatpush1.msra.mxu0 0.0
        %3878 = vmatprep.subr.mxu0 0.0
        %3879 = vmatpush1.msra.mxu0 0.0
        %3880 = vmatprep.subr.mxu0 0.0
        %3881 = vmatpush1.msra.mxu0 0.0
        %3882 = vmatprep.subr.mxu0 0.0
        %3883 = vmatpush1.msra.mxu0 0.0
        %3884 = vmatprep.subr.mxu0 0.0
        %3885 = vmatpush1.msra.mxu0 0.0
        %3886 = vmatprep.subr.mxu0 0.0
        %3887 = vmatpush1.msra.mxu0 0.0
        %3888 = vmatprep.subr.mxu0 0.0
        %3889 = vmatpush1.msra.mxu0 0.0
        %3890 = vmatprep.subr.mxu0 0.0
        %3891 = vmatpush1.msra.mxu0 0.0
        %3892 = vmatprep.mubr.f32.mxu0 0.0
        %3893 = vmatmul.mubr.f32.gmra.mrb[0].mxu0 %v3755
        %v3894 = vpop.f32.mrb[0].mxu0
        %v3895 = vadd.f32 %v3824, %v3894
        %v3896 = vpop.f32.mrb[0].mxu0
        %v3897 = vadd.f32 %v3826, %v3896
        %3898 = vdwg.mxu0
        %vm3899 = vcmp.ge.f32.partialorder %v3895, 0.0
        %vm3900 = vcmp.ge.f32.partialorder %v3897, 0.0
        %v3901 = vmul.f32 %v3895, 0.2
        %v3902 = vmul.f32 %v3897, 0.2
        %v3903 = vsel %vm3899, %v3895, %v3901
        %v3904 = vsel %vm3900, %v3897, %v3902
        %3905 = vst [vmem:[#allocation2 + $0xa8] sm:$0xff] %v3903
        %3906 = vst [vmem:[#allocation2 + $0xb0] sm:$0xff] %v3904
        %v3907 = vld [vmem:[#allocation2] sm:$0xff]
        %v3908 = vld [vmem:[#allocation2 + $0x8] sm:$0xff]
        %v3909 = vld [vmem:[#allocation2 + $0x10] sm:$0xff]
        %v3910 = vld [vmem:[#allocation2 + $0x20] sm:$0xff]
        %v3911 = vld [vmem:[#allocation2 + $0x28] sm:$0xff]
        %v3912 = vld [vmem:[#allocation2 + $0x30] sm:$0xff]
        %v3913 = vld [vmem:[#allocation2 + $0x40] sm:$0xff]
        %v3914 = vld [vmem:[#allocation2 + $0x48] sm:$0xff]
        %v3915 = vld [vmem:[#allocation2 + $0x50] sm:$0xff]
        %v3916 = vld [vmem:[#allocation2 + $0x60] sm:$0xff]
        %v3917 = vld [vmem:[#allocation2 + $0x68] sm:$0xff]
        %v3918 = vld [vmem:[#allocation2 + $0x70] sm:$0xff]
        %v3919 = vld [vmem:[#allocation2 + $0x80] sm:$0xff]
        %v3920 = vld [vmem:[#allocation2 + $0x88] sm:$0xff]
        %v3921 = vld [vmem:[#allocation2 + $0x90] sm:$0xff]
        %v3922 = vld [vmem:[#allocation2 + $0xa0] sm:$0xff]
        %v3923 = vld [vmem:[#allocation2 + $0xa8] sm:$0xff]
        %v3924 = vld [vmem:[#allocation2 + $0xb0] sm:$0xff]
        %v3925 = vmul.f32 %v3907, %v615
        %v3926 = vmul.f32 %v3908, %v619
        %v3927 = vmul.f32 %v3909, %v617
        %v3928 = vmul.f32 %v3910, %v615
        %v3929 = vmul.f32 %v3911, %v619
        %v3930 = vmul.f32 %v3912, %v617
        %v3931 = vmul.f32 %v3913, %v615
        %v3932 = vmul.f32 %v3914, %v619
        %v3933 = vmul.f32 %v3915, %v617
        %v3934 = vmul.f32 %v3916, %v615
        %v3935 = vmul.f32 %v3917, %v619
        %v3936 = vmul.f32 %v3918, %v617
        %v3937 = vmul.f32 %v3919, %v615
        %v3938 = vmul.f32 %v3920, %v619
        %v3939 = vmul.f32 %v3921, %v617
        %v3940 = vmul.f32 %v3922, %v615
        %v3941 = vmul.f32 %v3923, %v619
        %v3942 = vmul.f32 %v3924, %v617
        %v3943 = vmul.f32 %v3907, %v632
        %v3944 = vmul.f32 %v3908, %v636
        %v3945 = vmul.f32 %v3909, %v634
        %v3946 = vmul.f32 %v3910, %v632
        %v3947 = vmul.f32 %v3911, %v636
        %v3948 = vmul.f32 %v3912, %v634
        %v3949 = vmul.f32 %v3913, %v632
        %v3950 = vmul.f32 %v3914, %v636
        %v3951 = vmul.f32 %v3915, %v634
        %v3952 = vmul.f32 %v3916, %v632
        %v3953 = vmul.f32 %v3917, %v636
        %v3954 = vmul.f32 %v3918, %v634
        %v3955 = vmul.f32 %v3919, %v632
        %v3956 = vmul.f32 %v3920, %v636
        %v3957 = vmul.f32 %v3921, %v634
        %v3958 = vmul.f32 %v3922, %v632
        %v3959 = vmul.f32 %v3923, %v636
        %v3960 = vmul.f32 %v3924, %v634
        %v3961 = vmul.f32 %v3907, %v647
        %v3962 = vmul.f32 %v3908, %v651
        %v3963 = vmul.f32 %v3909, %v649
        %v3964 = vmul.f32 %v3910, %v647
        %v3965 = vmul.f32 %v3911, %v651
        %v3966 = vmul.f32 %v3912, %v649
        %v3967 = vmul.f32 %v3913, %v647
        %v3968 = vmul.f32 %v3914, %v651
        %v3969 = vmul.f32 %v3915, %v649
        %v3970 = vmul.f32 %v3916, %v647
        %v3971 = vmul.f32 %v3917, %v651
        %v3972 = vmul.f32 %v3918, %v649
        %v3973 = vmul.f32 %v3919, %v647
        %v3974 = vmul.f32 %v3920, %v651
        %v3975 = vmul.f32 %v3921, %v649
        %v3976 = vmul.f32 %v3922, %v647
        %v3977 = vmul.f32 %v3923, %v651
        %v3978 = vmul.f32 %v3924, %v649
        %v3979 = vld [vmem:[#allocation2 + $0x18] sm:$0xff]
        %v3980 = vld [vmem:[#allocation2 + $0x38] sm:$0xff]
        %v3981 = vld [vmem:[#allocation2 + $0x58] sm:$0xff]
        %v3982 = vld [vmem:[#allocation2 + $0x78] sm:$0xff]
        %v3983 = vld [vmem:[#allocation2 + $0x98] sm:$0xff]
        %v3984 = vld [vmem:[#allocation2 + $0xb8] sm:$0xff]
        %v3985 = vmul.f32 %v3908, %v664
        %v3986 = vmul.f32 %v3909, %v668
        %v3987 = vmul.f32 %v3979, %v666
        %v3988 = vmul.f32 %v3911, %v664
        %v3989 = vmul.f32 %v3912, %v668
        %v3990 = vmul.f32 %v3980, %v666
        %v3991 = vmul.f32 %v3914, %v664
        %v3992 = vmul.f32 %v3915, %v668
        %v3993 = vmul.f32 %v3981, %v666
        %v3994 = vmul.f32 %v3917, %v664
        %v3995 = vmul.f32 %v3918, %v668
        %v3996 = vmul.f32 %v3982, %v666
        %v3997 = vmul.f32 %v3920, %v664
        %v3998 = vmul.f32 %v3921, %v668
        %v3999 = vmul.f32 %v3983, %v666
        %v4000 = vmul.f32 %v3923, %v664
        %v4001 = vmul.f32 %v3924, %v668
        %v4002 = vmul.f32 %v3984, %v666
        %v4003 = vmul.f32 %v3908, %v679
        %v4004 = vmul.f32 %v3909, %v683
        %v4005 = vmul.f32 %v3979, %v681
        %v4006 = vmul.f32 %v3911, %v679
        %v4007 = vmul.f32 %v3912, %v683
        %v4008 = vmul.f32 %v3980, %v681
        %v4009 = vmul.f32 %v3914, %v679
        %v4010 = vmul.f32 %v3915, %v683
        %v4011 = vmul.f32 %v3981, %v681
        %v4012 = vmul.f32 %v3917, %v679
        %v4013 = vmul.f32 %v3918, %v683
        %v4014 = vmul.f32 %v3982, %v681
        %v4015 = vmul.f32 %v3920, %v679
        %v4016 = vmul.f32 %v3921, %v683
        %v4017 = vmul.f32 %v3983, %v681
        %v4018 = vmul.f32 %v3923, %v679
        %v4019 = vmul.f32 %v3924, %v683
        %v4020 = vmul.f32 %v3984, %v681
        %v4021 = vmul.f32 %v3908, %v694
        %v4022 = vmul.f32 %v3909, %v697
        %v4023 = vmul.f32 %v3979, %v696
        %v4024 = vmul.f32 %v3911, %v694
        %v4025 = vmul.f32 %v3912, %v697
        %v4026 = vmul.f32 %v3980, %v696
        %v4027 = vmul.f32 %v3914, %v694
        %v4028 = vmul.f32 %v3915, %v697
        %v4029 = vmul.f32 %v3981, %v696
        %v4030 = vmul.f32 %v3917, %v694
        %v4031 = vmul.f32 %v3918, %v697
        %v4032 = vmul.f32 %v3982, %v696
        %v4033 = vmul.f32 %v3920, %v694
        %v4034 = vmul.f32 %v3921, %v697
        %v4035 = vmul.f32 %v3983, %v696
        %v4036 = vmul.f32 %v3923, %v694
        %v4037 = vmul.f32 %v3924, %v697
        %v4038 = vmul.f32 %v3984, %v696
        %4057 = vrot.lane.b32.xlu0 %v3907, 127
        %v4058 = vpop.permute.xlu0 %4057
        %4059 = vrot.lane.b32.xlu0 %v3908, 127
        %v4060 = vpop.permute.xlu0 %4059
        %4061 = vrot.lane.b32.xlu0 %v3909, 127
        %v4062 = vpop.permute.xlu0 %4061
        %4063 = vrot.lane.b32.xlu0 %v3910, 127
        %v4064 = vpop.permute.xlu0 %4063
        %4065 = vrot.lane.b32.xlu0 %v3911, 127
        %v4066 = vpop.permute.xlu0 %4065
        %4067 = vrot.lane.b32.xlu0 %v3912, 127
        %v4068 = vpop.permute.xlu0 %4067
        %4069 = vrot.lane.b32.xlu0 %v3913, 127
        %v4070 = vpop.permute.xlu0 %4069
        %4071 = vrot.lane.b32.xlu0 %v3914, 127
        %v4072 = vpop.permute.xlu0 %4071
        %4073 = vrot.lane.b32.xlu0 %v3915, 127
        %v4074 = vpop.permute.xlu0 %4073
        %4075 = vrot.lane.b32.xlu0 %v3916, 127
        %v4076 = vpop.permute.xlu0 %4075
        %4077 = vrot.lane.b32.xlu0 %v3917, 127
        %v4078 = vpop.permute.xlu0 %4077
        %4079 = vrot.lane.b32.xlu0 %v3918, 127
        %v4080 = vpop.permute.xlu0 %4079
        %4081 = vrot.lane.b32.xlu0 %v3919, 127
        %v4082 = vpop.permute.xlu0 %4081
        %4083 = vrot.lane.b32.xlu0 %v3920, 127
        %v4084 = vpop.permute.xlu0 %4083
        %4085 = vrot.lane.b32.xlu0 %v3921, 127
        %v4086 = vpop.permute.xlu0 %4085
        %4087 = vrot.lane.b32.xlu0 %v3922, 127
        %v4088 = vpop.permute.xlu0 %4087
        %4089 = vrot.lane.b32.xlu0 %v3923, 127
        %v4090 = vpop.permute.xlu0 %4089
        %4091 = vrot.lane.b32.xlu0 %v3924, 127
        %v4092 = vpop.permute.xlu0 %4091
        %v4093 = vsel %vm650, %v4058, %v4060
        %v4094 = vsel %vm650, %v4060, %v4062
        %v4095 = vsel %vm650, %v4064, %v4066
        %v4096 = vsel %vm650, %v4066, %v4068
        %v4097 = vsel %vm650, %v4070, %v4072
        %v4098 = vsel %vm650, %v4072, %v4074
        %v4099 = vsel %vm650, %v4076, %v4078
        %v4100 = vsel %vm650, %v4078, %v4080
        %v4101 = vsel %vm650, %v4082, %v4084
        %v4102 = vsel %vm650, %v4084, %v4086
        %v4103 = vsel %vm650, %v4088, %v4090
        %v4104 = vsel %vm650, %v4090, %v4092
        %4123 = vrot.lane.b32.xlu0 %v3943, 126
        %v4124 = vpop.permute.xlu0 %4123
        %4125 = vrot.lane.b32.xlu0 %v3944, 126
        %v4126 = vpop.permute.xlu0 %4125
        %4127 = vrot.lane.b32.xlu0 %v3945, 126
        %v4128 = vpop.permute.xlu0 %4127
        %4129 = vrot.lane.b32.xlu0 %v3946, 126
        %v4130 = vpop.permute.xlu0 %4129
        %4131 = vrot.lane.b32.xlu0 %v3947, 126
        %v4132 = vpop.permute.xlu0 %4131
        %4133 = vrot.lane.b32.xlu0 %v3948, 126
        %v4134 = vpop.permute.xlu0 %4133
        %4135 = vrot.lane.b32.xlu0 %v3949, 126
        %v4136 = vpop.permute.xlu0 %4135
        %4137 = vrot.lane.b32.xlu0 %v3950, 126
        %v4138 = vpop.permute.xlu0 %4137
        %4139 = vrot.lane.b32.xlu0 %v3951, 126
        %v4140 = vpop.permute.xlu0 %4139
        %4141 = vrot.lane.b32.xlu0 %v3952, 126
        %v4142 = vpop.permute.xlu0 %4141
        %4143 = vrot.lane.b32.xlu0 %v3953, 126
        %v4144 = vpop.permute.xlu0 %4143
        %4145 = vrot.lane.b32.xlu0 %v3954, 126
        %v4146 = vpop.permute.xlu0 %4145
        %4147 = vrot.lane.b32.xlu0 %v3955, 126
        %v4148 = vpop.permute.xlu0 %4147
        %4149 = vrot.lane.b32.xlu0 %v3956, 126
        %v4150 = vpop.permute.xlu0 %4149
        %4151 = vrot.lane.b32.xlu0 %v3957, 126
        %v4152 = vpop.permute.xlu0 %4151
        %4153 = vrot.lane.b32.xlu0 %v3958, 126
        %v4154 = vpop.permute.xlu0 %4153
        %4155 = vrot.lane.b32.xlu0 %v3959, 126
        %v4156 = vpop.permute.xlu0 %4155
        %4157 = vrot.lane.b32.xlu0 %v3960, 126
        %v4158 = vpop.permute.xlu0 %4157
        %v4159 = vsel %vm747, %v4124, %v4126
        %v4160 = vsel %vm747, %v4126, %v4128
        %v4161 = vsel %vm747, %v4130, %v4132
        %v4162 = vsel %vm747, %v4132, %v4134
        %v4163 = vsel %vm747, %v4136, %v4138
        %v4164 = vsel %vm747, %v4138, %v4140
        %v4165 = vsel %vm747, %v4142, %v4144
        %v4166 = vsel %vm747, %v4144, %v4146
        %v4167 = vsel %vm747, %v4148, %v4150
        %v4168 = vsel %vm747, %v4150, %v4152
        %v4169 = vsel %vm747, %v4154, %v4156
        %v4170 = vsel %vm747, %v4156, %v4158
        %4189 = vrot.lane.b32.xlu0 %v3961, 112
        %v4190 = vpop.permute.xlu0 %4189
        %4191 = vrot.lane.b32.xlu0 %v3962, 112
        %v4192 = vpop.permute.xlu0 %4191
        %4193 = vrot.lane.b32.xlu0 %v3963, 112
        %v4194 = vpop.permute.xlu0 %4193
        %4195 = vrot.lane.b32.xlu0 %v3964, 112
        %v4196 = vpop.permute.xlu0 %4195
        %4197 = vrot.lane.b32.xlu0 %v3965, 112
        %v4198 = vpop.permute.xlu0 %4197
        %4199 = vrot.lane.b32.xlu0 %v3966, 112
        %v4200 = vpop.permute.xlu0 %4199
        %4201 = vrot.lane.b32.xlu0 %v3967, 112
        %v4202 = vpop.permute.xlu0 %4201
        %4203 = vrot.lane.b32.xlu0 %v3968, 112
        %v4204 = vpop.permute.xlu0 %4203
        %4205 = vrot.lane.b32.xlu0 %v3969, 112
        %v4206 = vpop.permute.xlu0 %4205
        %4207 = vrot.lane.b32.xlu0 %v3970, 112
        %v4208 = vpop.permute.xlu0 %4207
        %4209 = vrot.lane.b32.xlu0 %v3971, 112
        %v4210 = vpop.permute.xlu0 %4209
        %4211 = vrot.lane.b32.xlu0 %v3972, 112
        %v4212 = vpop.permute.xlu0 %4211
        %4213 = vrot.lane.b32.xlu0 %v3973, 112
        %v4214 = vpop.permute.xlu0 %4213
        %4215 = vrot.lane.b32.xlu0 %v3974, 112
        %v4216 = vpop.permute.xlu0 %4215
        %4217 = vrot.lane.b32.xlu0 %v3975, 112
        %v4218 = vpop.permute.xlu0 %4217
        %4219 = vrot.lane.b32.xlu0 %v3976, 112
        %v4220 = vpop.permute.xlu0 %4219
        %4221 = vrot.lane.b32.xlu0 %v3977, 112
        %v4222 = vpop.permute.xlu0 %4221
        %4223 = vrot.lane.b32.xlu0 %v3978, 112
        %v4224 = vpop.permute.xlu0 %4223
        %v4225 = vsel %vm770, %v4190, %v4192
        %v4226 = vsel %vm770, %v4192, %v4194
        %v4227 = vsel %vm770, %v4196, %v4198
        %v4228 = vsel %vm770, %v4198, %v4200
        %v4229 = vsel %vm770, %v4202, %v4204
        %v4230 = vsel %vm770, %v4204, %v4206
        %v4231 = vsel %vm770, %v4208, %v4210
        %v4232 = vsel %vm770, %v4210, %v4212
        %v4233 = vsel %vm770, %v4214, %v4216
        %v4234 = vsel %vm770, %v4216, %v4218
        %v4235 = vsel %vm770, %v4220, %v4222
        %v4236 = vsel %vm770, %v4222, %v4224
        %4237 = vrot.lane.b32.xlu0 %v3908, 111
        %v4238 = vpop.permute.xlu0 %4237
        %4239 = vrot.lane.b32.xlu0 %v3909, 111
        %v4240 = vpop.permute.xlu0 %4239
        %4241 = vrot.lane.b32.xlu0 %v3911, 111
        %v4242 = vpop.permute.xlu0 %4241
        %4243 = vrot.lane.b32.xlu0 %v3912, 111
        %v4244 = vpop.permute.xlu0 %4243
        %4245 = vrot.lane.b32.xlu0 %v3914, 111
        %v4246 = vpop.permute.xlu0 %4245
        %4247 = vrot.lane.b32.xlu0 %v3915, 111
        %v4248 = vpop.permute.xlu0 %4247
        %4249 = vrot.lane.b32.xlu0 %v3917, 111
        %v4250 = vpop.permute.xlu0 %4249
        %4251 = vrot.lane.b32.xlu0 %v3918, 111
        %v4252 = vpop.permute.xlu0 %4251
        %4253 = vrot.lane.b32.xlu0 %v3920, 111
        %v4254 = vpop.permute.xlu0 %4253
        %4255 = vrot.lane.b32.xlu0 %v3921, 111
        %v4256 = vpop.permute.xlu0 %4255
        %4257 = vrot.lane.b32.xlu0 %v3923, 111
        %v4258 = vpop.permute.xlu0 %4257
        %4259 = vrot.lane.b32.xlu0 %v3924, 111
        %v4260 = vpop.permute.xlu0 %4259
        %v4261 = vsel %vm618, %v4238, %v4240
        %v4262 = vsel %vm618, %v4242, %v4244
        %v4263 = vsel %vm618, %v4246, %v4248
        %v4264 = vsel %vm618, %v4250, %v4252
        %v4265 = vsel %vm618, %v4254, %v4256
        %v4266 = vsel %vm618, %v4258, %v4260
        %4285 = vrot.lane.b32.xlu0 %v3985, 110
        %v4286 = vpop.permute.xlu0 %4285
        %4287 = vrot.lane.b32.xlu0 %v3986, 110
        %v4288 = vpop.permute.xlu0 %4287
        %4289 = vrot.lane.b32.xlu0 %v3987, 110
        %v4290 = vpop.permute.xlu0 %4289
        %4291 = vrot.lane.b32.xlu0 %v3988, 110
        %v4292 = vpop.permute.xlu0 %4291
        %4293 = vrot.lane.b32.xlu0 %v3989, 110
        %v4294 = vpop.permute.xlu0 %4293
        %4295 = vrot.lane.b32.xlu0 %v3990, 110
        %v4296 = vpop.permute.xlu0 %4295
        %4297 = vrot.lane.b32.xlu0 %v3991, 110
        %v4298 = vpop.permute.xlu0 %4297
        %4299 = vrot.lane.b32.xlu0 %v3992, 110
        %v4300 = vpop.permute.xlu0 %4299
        %4301 = vrot.lane.b32.xlu0 %v3993, 110
        %v4302 = vpop.permute.xlu0 %4301
        %4303 = vrot.lane.b32.xlu0 %v3994, 110
        %v4304 = vpop.permute.xlu0 %4303
        %4305 = vrot.lane.b32.xlu0 %v3995, 110
        %v4306 = vpop.permute.xlu0 %4305
        %4307 = vrot.lane.b32.xlu0 %v3996, 110
        %v4308 = vpop.permute.xlu0 %4307
        %4309 = vrot.lane.b32.xlu0 %v3997, 110
        %v4310 = vpop.permute.xlu0 %4309
        %4311 = vrot.lane.b32.xlu0 %v3998, 110
        %v4312 = vpop.permute.xlu0 %4311
        %4313 = vrot.lane.b32.xlu0 %v3999, 110
        %v4314 = vpop.permute.xlu0 %4313
        %4315 = vrot.lane.b32.xlu0 %v4000, 110
        %v4316 = vpop.permute.xlu0 %4315
        %4317 = vrot.lane.b32.xlu0 %v4001, 110
        %v4318 = vpop.permute.xlu0 %4317
        %4319 = vrot.lane.b32.xlu0 %v4002, 110
        %v4320 = vpop.permute.xlu0 %4319
        %v4321 = vsel %vm803, %v4286, %v4288
        %v4322 = vsel %vm803, %v4288, %v4290
        %v4323 = vsel %vm803, %v4292, %v4294
        %v4324 = vsel %vm803, %v4294, %v4296
        %v4325 = vsel %vm803, %v4298, %v4300
        %v4326 = vsel %vm803, %v4300, %v4302
        %v4327 = vsel %vm803, %v4304, %v4306
        %v4328 = vsel %vm803, %v4306, %v4308
        %v4329 = vsel %vm803, %v4310, %v4312
        %v4330 = vsel %vm803, %v4312, %v4314
        %v4331 = vsel %vm803, %v4316, %v4318
        %v4332 = vsel %vm803, %v4318, %v4320
        %4351 = vrot.lane.b32.xlu0 %v4003, 96
        %v4352 = vpop.permute.xlu0 %4351
        %4353 = vrot.lane.b32.xlu0 %v4004, 96
        %v4354 = vpop.permute.xlu0 %4353
        %4355 = vrot.lane.b32.xlu0 %v4005, 96
        %v4356 = vpop.permute.xlu0 %4355
        %4357 = vrot.lane.b32.xlu0 %v4006, 96
        %v4358 = vpop.permute.xlu0 %4357
        %4359 = vrot.lane.b32.xlu0 %v4007, 96
        %v4360 = vpop.permute.xlu0 %4359
        %4361 = vrot.lane.b32.xlu0 %v4008, 96
        %v4362 = vpop.permute.xlu0 %4361
        %4363 = vrot.lane.b32.xlu0 %v4009, 96
        %v4364 = vpop.permute.xlu0 %4363
        %4365 = vrot.lane.b32.xlu0 %v4010, 96
        %v4366 = vpop.permute.xlu0 %4365
        %4367 = vrot.lane.b32.xlu0 %v4011, 96
        %v4368 = vpop.permute.xlu0 %4367
        %4369 = vrot.lane.b32.xlu0 %v4012, 96
        %v4370 = vpop.permute.xlu0 %4369
        %4371 = vrot.lane.b32.xlu0 %v4013, 96
        %v4372 = vpop.permute.xlu0 %4371
        %4373 = vrot.lane.b32.xlu0 %v4014, 96
        %v4374 = vpop.permute.xlu0 %4373
        %4375 = vrot.lane.b32.xlu0 %v4015, 96
        %v4376 = vpop.permute.xlu0 %4375
        %4377 = vrot.lane.b32.xlu0 %v4016, 96
        %v4378 = vpop.permute.xlu0 %4377
        %4379 = vrot.lane.b32.xlu0 %v4017, 96
        %v4380 = vpop.permute.xlu0 %4379
        %4381 = vrot.lane.b32.xlu0 %v4018, 96
        %v4382 = vpop.permute.xlu0 %4381
        %4383 = vrot.lane.b32.xlu0 %v4019, 96
        %v4384 = vpop.permute.xlu0 %4383
        %4385 = vrot.lane.b32.xlu0 %v4020, 96
        %v4386 = vpop.permute.xlu0 %4385
        %v4387 = vsel %vm826, %v4352, %v4354
        %v4388 = vsel %vm826, %v4354, %v4356
        %v4389 = vsel %vm826, %v4358, %v4360
        %v4390 = vsel %vm826, %v4360, %v4362
        %v4391 = vsel %vm826, %v4364, %v4366
        %v4392 = vsel %vm826, %v4366, %v4368
        %v4393 = vsel %vm826, %v4370, %v4372
        %v4394 = vsel %vm826, %v4372, %v4374
        %v4395 = vsel %vm826, %v4376, %v4378
        %v4396 = vsel %vm826, %v4378, %v4380
        %v4397 = vsel %vm826, %v4382, %v4384
        %v4398 = vsel %vm826, %v4384, %v4386
        %4405 = vrot.lane.b32.xlu0 %v3908, 95
        %v4406 = vpop.permute.xlu0 %4405
        %4407 = vrot.lane.b32.xlu0 %v3909, 95
        %v4408 = vpop.permute.xlu0 %4407
        %4409 = vrot.lane.b32.xlu0 %v3979, 95
        %v4410 = vpop.permute.xlu0 %4409
        %4411 = vrot.lane.b32.xlu0 %v3911, 95
        %v4412 = vpop.permute.xlu0 %4411
        %4413 = vrot.lane.b32.xlu0 %v3912, 95
        %v4414 = vpop.permute.xlu0 %4413
        %4415 = vrot.lane.b32.xlu0 %v3980, 95
        %v4416 = vpop.permute.xlu0 %4415
        %4417 = vrot.lane.b32.xlu0 %v3914, 95
        %v4418 = vpop.permute.xlu0 %4417
        %4419 = vrot.lane.b32.xlu0 %v3915, 95
        %v4420 = vpop.permute.xlu0 %4419
        %4421 = vrot.lane.b32.xlu0 %v3981, 95
        %v4422 = vpop.permute.xlu0 %4421
        %4423 = vrot.lane.b32.xlu0 %v3917, 95
        %v4424 = vpop.permute.xlu0 %4423
        %4425 = vrot.lane.b32.xlu0 %v3918, 95
        %v4426 = vpop.permute.xlu0 %4425
        %4427 = vrot.lane.b32.xlu0 %v3982, 95
        %v4428 = vpop.permute.xlu0 %4427
        %4429 = vrot.lane.b32.xlu0 %v3920, 95
        %v4430 = vpop.permute.xlu0 %4429
        %4431 = vrot.lane.b32.xlu0 %v3921, 95
        %v4432 = vpop.permute.xlu0 %4431
        %4433 = vrot.lane.b32.xlu0 %v3983, 95
        %v4434 = vpop.permute.xlu0 %4433
        %4435 = vrot.lane.b32.xlu0 %v3923, 95
        %v4436 = vpop.permute.xlu0 %4435
        %4437 = vrot.lane.b32.xlu0 %v3924, 95
        %v4438 = vpop.permute.xlu0 %4437
        %4439 = vrot.lane.b32.xlu0 %v3984, 95
        %v4440 = vpop.permute.xlu0 %4439
        %v4441 = vsel %vm845, %v4406, %v4408
        %v4442 = vsel %vm845, %v4408, %v4410
        %v4443 = vsel %vm845, %v4412, %v4414
        %v4444 = vsel %vm845, %v4414, %v4416
        %v4445 = vsel %vm845, %v4418, %v4420
        %v4446 = vsel %vm845, %v4420, %v4422
        %v4447 = vsel %vm845, %v4424, %v4426
        %v4448 = vsel %vm845, %v4426, %v4428
        %v4449 = vsel %vm845, %v4430, %v4432
        %v4450 = vsel %vm845, %v4432, %v4434
        %v4451 = vsel %vm845, %v4436, %v4438
        %v4452 = vsel %vm845, %v4438, %v4440
        %4471 = vrot.lane.b32.xlu0 %v4021, 94
        %v4472 = vpop.permute.xlu0 %4471
        %4473 = vrot.lane.b32.xlu0 %v4022, 94
        %v4474 = vpop.permute.xlu0 %4473
        %4475 = vrot.lane.b32.xlu0 %v4023, 94
        %v4476 = vpop.permute.xlu0 %4475
        %4477 = vrot.lane.b32.xlu0 %v4024, 94
        %v4478 = vpop.permute.xlu0 %4477
        %4479 = vrot.lane.b32.xlu0 %v4025, 94
        %v4480 = vpop.permute.xlu0 %4479
        %4481 = vrot.lane.b32.xlu0 %v4026, 94
        %v4482 = vpop.permute.xlu0 %4481
        %4483 = vrot.lane.b32.xlu0 %v4027, 94
        %v4484 = vpop.permute.xlu0 %4483
        %4485 = vrot.lane.b32.xlu0 %v4028, 94
        %v4486 = vpop.permute.xlu0 %4485
        %4487 = vrot.lane.b32.xlu0 %v4029, 94
        %v4488 = vpop.permute.xlu0 %4487
        %4489 = vrot.lane.b32.xlu0 %v4030, 94
        %v4490 = vpop.permute.xlu0 %4489
        %4491 = vrot.lane.b32.xlu0 %v4031, 94
        %v4492 = vpop.permute.xlu0 %4491
        %4493 = vrot.lane.b32.xlu0 %v4032, 94
        %v4494 = vpop.permute.xlu0 %4493
        %4495 = vrot.lane.b32.xlu0 %v4033, 94
        %v4496 = vpop.permute.xlu0 %4495
        %4497 = vrot.lane.b32.xlu0 %v4034, 94
        %v4498 = vpop.permute.xlu0 %4497
        %4499 = vrot.lane.b32.xlu0 %v4035, 94
        %v4500 = vpop.permute.xlu0 %4499
        %4501 = vrot.lane.b32.xlu0 %v4036, 94
        %v4502 = vpop.permute.xlu0 %4501
        %4503 = vrot.lane.b32.xlu0 %v4037, 94
        %v4504 = vpop.permute.xlu0 %4503
        %4505 = vrot.lane.b32.xlu0 %v4038, 94
        %v4506 = vpop.permute.xlu0 %4505
        %v4507 = vsel %vm868, %v4472, %v4474
        %v4508 = vsel %vm868, %v4474, %v4476
        %v4509 = vsel %vm868, %v4478, %v4480
        %v4510 = vsel %vm868, %v4480, %v4482
        %v4511 = vsel %vm868, %v4484, %v4486
        %v4512 = vsel %vm868, %v4486, %v4488
        %v4513 = vsel %vm868, %v4490, %v4492
        %v4514 = vsel %vm868, %v4492, %v4494
        %v4515 = vsel %vm868, %v4496, %v4498
        %v4516 = vsel %vm868, %v4498, %v4500
        %v4517 = vsel %vm868, %v4502, %v4504
        %v4518 = vsel %vm868, %v4504, %v4506
        %v4519 = vld [vmem:[#allocation18] sm:$0xff]
        %v4520 = vld [vmem:[#allocation18 + $0x8] sm:$0xff]
        %v4521 = vld [vmem:[#allocation18 + $0x10] sm:$0xff]
        %v4522 = vld [vmem:[#allocation18 + $0x18] sm:$0xff]
        %v4523 = vld [vmem:[#allocation18 + $0x20] sm:$0xff]
        %v4524 = vld [vmem:[#allocation18 + $0x28] sm:$0xff]
        %v4525 = vld [vmem:[#allocation18 + $0x30] sm:$0xff]
        %v4526 = vld [vmem:[#allocation18 + $0x38] sm:$0xff]
        %v4527 = vld [vmem:[#allocation20] sm:$0xff]
        %v4528 = vld [vmem:[#allocation20 + $0x8] sm:$0xff]
        %4530 = vset.pattern.permute.xlu0 0
        %4531 = vperm.xlu0 %4530, %v4527
        %v4532 = vpop.permute.xlu0 %4531
        %4535 = vset.pattern.permute.xlu0 0
        %4536 = vperm.xlu0 %4535, %v4528
        %v4537 = vpop.permute.xlu0 %4536
        %4557 = vrot.lane.b32.xlu0 %v3925, 17
        %v4558 = vpop.permute.xlu0 %4557
        %4559 = vrot.lane.b32.xlu0 %v3926, 17
        %v4560 = vpop.permute.xlu0 %4559
        %4561 = vrot.lane.b32.xlu0 %v3927, 17
        %v4562 = vpop.permute.xlu0 %4561
        %4563 = vrot.lane.b32.xlu0 %v3928, 17
        %v4564 = vpop.permute.xlu0 %4563
        %4565 = vrot.lane.b32.xlu0 %v3929, 17
        %v4566 = vpop.permute.xlu0 %4565
        %4567 = vrot.lane.b32.xlu0 %v3930, 17
        %v4568 = vpop.permute.xlu0 %4567
        %4569 = vrot.lane.b32.xlu0 %v3931, 17
        %v4570 = vpop.permute.xlu0 %4569
        %4571 = vrot.lane.b32.xlu0 %v3932, 17
        %v4572 = vpop.permute.xlu0 %4571
        %4573 = vrot.lane.b32.xlu0 %v3933, 17
        %v4574 = vpop.permute.xlu0 %4573
        %4575 = vrot.lane.b32.xlu0 %v3934, 17
        %v4576 = vpop.permute.xlu0 %4575
        %4577 = vrot.lane.b32.xlu0 %v3935, 17
        %v4578 = vpop.permute.xlu0 %4577
        %4579 = vrot.lane.b32.xlu0 %v3936, 17
        %v4580 = vpop.permute.xlu0 %4579
        %4581 = vrot.lane.b32.xlu0 %v3937, 17
        %v4582 = vpop.permute.xlu0 %4581
        %4583 = vrot.lane.b32.xlu0 %v3938, 17
        %v4584 = vpop.permute.xlu0 %4583
        %4585 = vrot.lane.b32.xlu0 %v3939, 17
        %v4586 = vpop.permute.xlu0 %4585
        %4587 = vrot.lane.b32.xlu0 %v3940, 17
        %v4588 = vpop.permute.xlu0 %4587
        %4589 = vrot.lane.b32.xlu0 %v3941, 17
        %v4590 = vpop.permute.xlu0 %4589
        %4591 = vrot.lane.b32.xlu0 %v3942, 17
        %v4592 = vpop.permute.xlu0 %4591
        %4593 = vrot.lane.b32.xlu0 %v4093, 17
        %v4594 = vpop.permute.xlu0 %4593
        %4595 = vrot.lane.b32.xlu0 %v4094, 17
        %v4596 = vpop.permute.xlu0 %4595
        %4597 = vrot.lane.b32.xlu0 %v4062, 17
        %v4598 = vpop.permute.xlu0 %4597
        %4599 = vrot.lane.b32.xlu0 %v4095, 17
        %v4600 = vpop.permute.xlu0 %4599
        %4601 = vrot.lane.b32.xlu0 %v4096, 17
        %v4602 = vpop.permute.xlu0 %4601
        %4603 = vrot.lane.b32.xlu0 %v4068, 17
        %v4604 = vpop.permute.xlu0 %4603
        %4605 = vrot.lane.b32.xlu0 %v4097, 17
        %v4606 = vpop.permute.xlu0 %4605
        %4607 = vrot.lane.b32.xlu0 %v4098, 17
        %v4608 = vpop.permute.xlu0 %4607
        %4609 = vrot.lane.b32.xlu0 %v4074, 17
        %v4610 = vpop.permute.xlu0 %4609
        %4611 = vrot.lane.b32.xlu0 %v4099, 17
        %v4612 = vpop.permute.xlu0 %4611
        %4613 = vrot.lane.b32.xlu0 %v4100, 17
        %v4614 = vpop.permute.xlu0 %4613
        %4615 = vrot.lane.b32.xlu0 %v4080, 17
        %v4616 = vpop.permute.xlu0 %4615
        %4617 = vrot.lane.b32.xlu0 %v4101, 17
        %v4618 = vpop.permute.xlu0 %4617
        %4619 = vrot.lane.b32.xlu0 %v4102, 17
        %v4620 = vpop.permute.xlu0 %4619
        %4621 = vrot.lane.b32.xlu0 %v4086, 17
        %v4622 = vpop.permute.xlu0 %4621
        %4623 = vrot.lane.b32.xlu0 %v4103, 17
        %v4624 = vpop.permute.xlu0 %4623
        %4625 = vrot.lane.b32.xlu0 %v4104, 17
        %v4626 = vpop.permute.xlu0 %4625
        %4627 = vrot.lane.b32.xlu0 %v4092, 17
        %v4628 = vpop.permute.xlu0 %4627
        %4629 = vrot.lane.b32.xlu0 %v4159, 17
        %v4630 = vpop.permute.xlu0 %4629
        %4631 = vrot.lane.b32.xlu0 %v4160, 17
        %v4632 = vpop.permute.xlu0 %4631
        %4633 = vrot.lane.b32.xlu0 %v4128, 17
        %v4634 = vpop.permute.xlu0 %4633
        %4635 = vrot.lane.b32.xlu0 %v4161, 17
        %v4636 = vpop.permute.xlu0 %4635
        %4637 = vrot.lane.b32.xlu0 %v4162, 17
        %v4638 = vpop.permute.xlu0 %4637
        %4639 = vrot.lane.b32.xlu0 %v4134, 17
        %v4640 = vpop.permute.xlu0 %4639
        %4641 = vrot.lane.b32.xlu0 %v4163, 17
        %v4642 = vpop.permute.xlu0 %4641
        %4643 = vrot.lane.b32.xlu0 %v4164, 17
        %v4644 = vpop.permute.xlu0 %4643
        %4645 = vrot.lane.b32.xlu0 %v4140, 17
        %v4646 = vpop.permute.xlu0 %4645
        %4647 = vrot.lane.b32.xlu0 %v4165, 17
        %v4648 = vpop.permute.xlu0 %4647
        %4649 = vrot.lane.b32.xlu0 %v4166, 17
        %v4650 = vpop.permute.xlu0 %4649
        %4651 = vrot.lane.b32.xlu0 %v4146, 17
        %v4652 = vpop.permute.xlu0 %4651
        %4653 = vrot.lane.b32.xlu0 %v4167, 17
        %v4654 = vpop.permute.xlu0 %4653
        %4655 = vrot.lane.b32.xlu0 %v4168, 17
        %v4656 = vpop.permute.xlu0 %4655
        %4657 = vrot.lane.b32.xlu0 %v4152, 17
        %v4658 = vpop.permute.xlu0 %4657
        %4659 = vrot.lane.b32.xlu0 %v4169, 17
        %v4660 = vpop.permute.xlu0 %4659
        %4661 = vrot.lane.b32.xlu0 %v4170, 17
        %v4662 = vpop.permute.xlu0 %4661
        %4663 = vrot.lane.b32.xlu0 %v4158, 17
        %v4664 = vpop.permute.xlu0 %4663
        %4665 = vrot.lane.b32.xlu0 %v4225, 17
        %v4666 = vpop.permute.xlu0 %4665
        %4667 = vrot.lane.b32.xlu0 %v4226, 17
        %v4668 = vpop.permute.xlu0 %4667
        %4669 = vrot.lane.b32.xlu0 %v4194, 17
        %v4670 = vpop.permute.xlu0 %4669
        %4671 = vrot.lane.b32.xlu0 %v4227, 17
        %v4672 = vpop.permute.xlu0 %4671
        %4673 = vrot.lane.b32.xlu0 %v4228, 17
        %v4674 = vpop.permute.xlu0 %4673
        %4675 = vrot.lane.b32.xlu0 %v4200, 17
        %v4676 = vpop.permute.xlu0 %4675
        %4677 = vrot.lane.b32.xlu0 %v4229, 17
        %v4678 = vpop.permute.xlu0 %4677
        %4679 = vrot.lane.b32.xlu0 %v4230, 17
        %v4680 = vpop.permute.xlu0 %4679
        %4681 = vrot.lane.b32.xlu0 %v4206, 17
        %v4682 = vpop.permute.xlu0 %4681
        %4683 = vrot.lane.b32.xlu0 %v4231, 17
        %v4684 = vpop.permute.xlu0 %4683
        %4685 = vrot.lane.b32.xlu0 %v4232, 17
        %v4686 = vpop.permute.xlu0 %4685
        %4687 = vrot.lane.b32.xlu0 %v4212, 17
        %v4688 = vpop.permute.xlu0 %4687
        %4689 = vrot.lane.b32.xlu0 %v4233, 17
        %v4690 = vpop.permute.xlu0 %4689
        %4691 = vrot.lane.b32.xlu0 %v4234, 17
        %v4692 = vpop.permute.xlu0 %4691
        %4693 = vrot.lane.b32.xlu0 %v4218, 17
        %v4694 = vpop.permute.xlu0 %4693
        %4695 = vrot.lane.b32.xlu0 %v4235, 17
        %v4696 = vpop.permute.xlu0 %4695
        %4697 = vrot.lane.b32.xlu0 %v4236, 17
        %v4698 = vpop.permute.xlu0 %4697
        %4699 = vrot.lane.b32.xlu0 %v4224, 17
        %v4700 = vpop.permute.xlu0 %4699
        %4701 = vrot.lane.b32.xlu0 %v4238, 17
        %v4702 = vpop.permute.xlu0 %4701
        %4703 = vrot.lane.b32.xlu0 %v4261, 17
        %v4704 = vpop.permute.xlu0 %4703
        %4705 = vrot.lane.b32.xlu0 %v4240, 17
        %v4706 = vpop.permute.xlu0 %4705
        %4707 = vrot.lane.b32.xlu0 %v4242, 17
        %v4708 = vpop.permute.xlu0 %4707
        %4709 = vrot.lane.b32.xlu0 %v4262, 17
        %v4710 = vpop.permute.xlu0 %4709
        %4711 = vrot.lane.b32.xlu0 %v4244, 17
        %v4712 = vpop.permute.xlu0 %4711
        %4713 = vrot.lane.b32.xlu0 %v4246, 17
        %v4714 = vpop.permute.xlu0 %4713
        %4715 = vrot.lane.b32.xlu0 %v4263, 17
        %v4716 = vpop.permute.xlu0 %4715
        %4717 = vrot.lane.b32.xlu0 %v4248, 17
        %v4718 = vpop.permute.xlu0 %4717
        %4719 = vrot.lane.b32.xlu0 %v4250, 17
        %v4720 = vpop.permute.xlu0 %4719
        %4721 = vrot.lane.b32.xlu0 %v4264, 17
        %v4722 = vpop.permute.xlu0 %4721
        %4723 = vrot.lane.b32.xlu0 %v4252, 17
        %v4724 = vpop.permute.xlu0 %4723
        %4725 = vrot.lane.b32.xlu0 %v4254, 17
        %v4726 = vpop.permute.xlu0 %4725
        %4727 = vrot.lane.b32.xlu0 %v4265, 17
        %v4728 = vpop.permute.xlu0 %4727
        %4729 = vrot.lane.b32.xlu0 %v4256, 17
        %v4730 = vpop.permute.xlu0 %4729
        %4731 = vrot.lane.b32.xlu0 %v4258, 17
        %v4732 = vpop.permute.xlu0 %4731
        %4733 = vrot.lane.b32.xlu0 %v4266, 17
        %v4734 = vpop.permute.xlu0 %4733
        %4735 = vrot.lane.b32.xlu0 %v4260, 17
        %v4736 = vpop.permute.xlu0 %4735
        %4737 = vrot.lane.b32.xlu0 %v4286, 17
        %v4738 = vpop.permute.xlu0 %4737
        %4739 = vrot.lane.b32.xlu0 %v4321, 17
        %v4740 = vpop.permute.xlu0 %4739
        %4741 = vrot.lane.b32.xlu0 %v4322, 17
        %v4742 = vpop.permute.xlu0 %4741
        %4743 = vrot.lane.b32.xlu0 %v4292, 17
        %v4744 = vpop.permute.xlu0 %4743
        %4745 = vrot.lane.b32.xlu0 %v4323, 17
        %v4746 = vpop.permute.xlu0 %4745
        %4747 = vrot.lane.b32.xlu0 %v4324, 17
        %v4748 = vpop.permute.xlu0 %4747
        %4749 = vrot.lane.b32.xlu0 %v4298, 17
        %v4750 = vpop.permute.xlu0 %4749
        %4751 = vrot.lane.b32.xlu0 %v4325, 17
        %v4752 = vpop.permute.xlu0 %4751
        %4753 = vrot.lane.b32.xlu0 %v4326, 17
        %v4754 = vpop.permute.xlu0 %4753
        %4755 = vrot.lane.b32.xlu0 %v4304, 17
        %v4756 = vpop.permute.xlu0 %4755
        %4757 = vrot.lane.b32.xlu0 %v4327, 17
        %v4758 = vpop.permute.xlu0 %4757
        %4759 = vrot.lane.b32.xlu0 %v4328, 17
        %v4760 = vpop.permute.xlu0 %4759
        %4761 = vrot.lane.b32.xlu0 %v4310, 17
        %v4762 = vpop.permute.xlu0 %4761
        %4763 = vrot.lane.b32.xlu0 %v4329, 17
        %v4764 = vpop.permute.xlu0 %4763
        %4765 = vrot.lane.b32.xlu0 %v4330, 17
        %v4766 = vpop.permute.xlu0 %4765
        %4767 = vrot.lane.b32.xlu0 %v4316, 17
        %v4768 = vpop.permute.xlu0 %4767
        %4769 = vrot.lane.b32.xlu0 %v4331, 17
        %v4770 = vpop.permute.xlu0 %4769
        %4771 = vrot.lane.b32.xlu0 %v4332, 17
        %v4772 = vpop.permute.xlu0 %4771
        %4773 = vrot.lane.b32.xlu0 %v4352, 17
        %v4774 = vpop.permute.xlu0 %4773
        %4775 = vrot.lane.b32.xlu0 %v4387, 17
        %v4776 = vpop.permute.xlu0 %4775
        %4777 = vrot.lane.b32.xlu0 %v4388, 17
        %v4778 = vpop.permute.xlu0 %4777
        %4779 = vrot.lane.b32.xlu0 %v4358, 17
        %v4780 = vpop.permute.xlu0 %4779
        %4781 = vrot.lane.b32.xlu0 %v4389, 17
        %v4782 = vpop.permute.xlu0 %4781
        %4783 = vrot.lane.b32.xlu0 %v4390, 17
        %v4784 = vpop.permute.xlu0 %4783
        %4785 = vrot.lane.b32.xlu0 %v4364, 17
        %v4786 = vpop.permute.xlu0 %4785
        %4787 = vrot.lane.b32.xlu0 %v4391, 17
        %v4788 = vpop.permute.xlu0 %4787
        %4789 = vrot.lane.b32.xlu0 %v4392, 17
        %v4790 = vpop.permute.xlu0 %4789
        %4791 = vrot.lane.b32.xlu0 %v4370, 17
        %v4792 = vpop.permute.xlu0 %4791
        %4793 = vrot.lane.b32.xlu0 %v4393, 17
        %v4794 = vpop.permute.xlu0 %4793
        %4795 = vrot.lane.b32.xlu0 %v4394, 17
        %v4796 = vpop.permute.xlu0 %4795
        %4797 = vrot.lane.b32.xlu0 %v4376, 17
        %v4798 = vpop.permute.xlu0 %4797
        %4799 = vrot.lane.b32.xlu0 %v4395, 17
        %v4800 = vpop.permute.xlu0 %4799
        %4801 = vrot.lane.b32.xlu0 %v4396, 17
        %v4802 = vpop.permute.xlu0 %4801
        %4803 = vrot.lane.b32.xlu0 %v4382, 17
        %v4804 = vpop.permute.xlu0 %4803
        %4805 = vrot.lane.b32.xlu0 %v4397, 17
        %v4806 = vpop.permute.xlu0 %4805
        %4807 = vrot.lane.b32.xlu0 %v4398, 17
        %v4808 = vpop.permute.xlu0 %4807
        %4809 = vrot.lane.b32.xlu0 %v4406, 17
        %v4810 = vpop.permute.xlu0 %4809
        %4811 = vrot.lane.b32.xlu0 %v4441, 17
        %v4812 = vpop.permute.xlu0 %4811
        %4813 = vrot.lane.b32.xlu0 %v4442, 17
        %v4814 = vpop.permute.xlu0 %4813
        %4815 = vrot.lane.b32.xlu0 %v4412, 17
        %v4816 = vpop.permute.xlu0 %4815
        %4817 = vrot.lane.b32.xlu0 %v4443, 17
        %v4818 = vpop.permute.xlu0 %4817
        %4819 = vrot.lane.b32.xlu0 %v4444, 17
        %v4820 = vpop.permute.xlu0 %4819
        %4821 = vrot.lane.b32.xlu0 %v4418, 17
        %v4822 = vpop.permute.xlu0 %4821
        %4823 = vrot.lane.b32.xlu0 %v4445, 17
        %v4824 = vpop.permute.xlu0 %4823
        %4825 = vrot.lane.b32.xlu0 %v4446, 17
        %v4826 = vpop.permute.xlu0 %4825
        %4827 = vrot.lane.b32.xlu0 %v4424, 17
        %v4828 = vpop.permute.xlu0 %4827
        %4829 = vrot.lane.b32.xlu0 %v4447, 17
        %v4830 = vpop.permute.xlu0 %4829
        %4831 = vrot.lane.b32.xlu0 %v4448, 17
        %v4832 = vpop.permute.xlu0 %4831
        %4833 = vrot.lane.b32.xlu0 %v4430, 17
        %v4834 = vpop.permute.xlu0 %4833
        %4835 = vrot.lane.b32.xlu0 %v4449, 17
        %v4836 = vpop.permute.xlu0 %4835
        %4837 = vrot.lane.b32.xlu0 %v4450, 17
        %v4838 = vpop.permute.xlu0 %4837
        %4839 = vrot.lane.b32.xlu0 %v4436, 17
        %v4840 = vpop.permute.xlu0 %4839
        %4841 = vrot.lane.b32.xlu0 %v4451, 17
        %v4842 = vpop.permute.xlu0 %4841
        %4843 = vrot.lane.b32.xlu0 %v4452, 17
        %v4844 = vpop.permute.xlu0 %4843
        %4845 = vrot.lane.b32.xlu0 %v4472, 17
        %v4846 = vpop.permute.xlu0 %4845
        %4847 = vrot.lane.b32.xlu0 %v4507, 17
        %v4848 = vpop.permute.xlu0 %4847
        %4849 = vrot.lane.b32.xlu0 %v4508, 17
        %v4850 = vpop.permute.xlu0 %4849
        %4851 = vrot.lane.b32.xlu0 %v4478, 17
        %v4852 = vpop.permute.xlu0 %4851
        %4853 = vrot.lane.b32.xlu0 %v4509, 17
        %v4854 = vpop.permute.xlu0 %4853
        %4855 = vrot.lane.b32.xlu0 %v4510, 17
        %v4856 = vpop.permute.xlu0 %4855
        %4857 = vrot.lane.b32.xlu0 %v4484, 17
        %v4858 = vpop.permute.xlu0 %4857
        %4859 = vrot.lane.b32.xlu0 %v4511, 17
        %v4860 = vpop.permute.xlu0 %4859
        %4861 = vrot.lane.b32.xlu0 %v4512, 17
        %v4862 = vpop.permute.xlu0 %4861
        %4863 = vrot.lane.b32.xlu0 %v4490, 17
        %v4864 = vpop.permute.xlu0 %4863
        %4865 = vrot.lane.b32.xlu0 %v4513, 17
        %v4866 = vpop.permute.xlu0 %4865
        %4867 = vrot.lane.b32.xlu0 %v4514, 17
        %v4868 = vpop.permute.xlu0 %4867
        %4869 = vrot.lane.b32.xlu0 %v4496, 17
        %v4870 = vpop.permute.xlu0 %4869
        %4871 = vrot.lane.b32.xlu0 %v4515, 17
        %v4872 = vpop.permute.xlu0 %4871
        %4873 = vrot.lane.b32.xlu0 %v4516, 17
        %v4874 = vpop.permute.xlu0 %4873
        %4875 = vrot.lane.b32.xlu0 %v4502, 17
        %v4876 = vpop.permute.xlu0 %4875
        %4877 = vrot.lane.b32.xlu0 %v4517, 17
        %v4878 = vpop.permute.xlu0 %4877
        %4879 = vrot.lane.b32.xlu0 %v4518, 17
        %v4880 = vpop.permute.xlu0 %4879
        %v4881 = vsel %vm537, %v4558, %v4560
        %v4882 = vsel %vm537, %v4560, %v4562
        %v4883 = vsel %vm537, %v4564, %v4566
        %v4884 = vsel %vm537, %v4566, %v4568
        %v4885 = vsel %vm537, %v4570, %v4572
        %v4886 = vsel %vm537, %v4572, %v4574
        %v4887 = vsel %vm537, %v4576, %v4578
        %v4888 = vsel %vm537, %v4578, %v4580
        %v4889 = vsel %vm537, %v4582, %v4584
        %v4890 = vsel %vm537, %v4584, %v4586
        %v4891 = vsel %vm537, %v4588, %v4590
        %v4892 = vsel %vm537, %v4590, %v4592
        %v4893 = vsel %vm537, %v4594, %v4596
        %v4894 = vsel %vm537, %v4596, %v4598
        %v4895 = vsel %vm537, %v4600, %v4602
        %v4896 = vsel %vm537, %v4602, %v4604
        %v4897 = vsel %vm537, %v4606, %v4608
        %v4898 = vsel %vm537, %v4608, %v4610
        %v4899 = vsel %vm537, %v4612, %v4614
        %v4900 = vsel %vm537, %v4614, %v4616
        %v4901 = vsel %vm537, %v4618, %v4620
        %v4902 = vsel %vm537, %v4620, %v4622
        %v4903 = vsel %vm537, %v4624, %v4626
        %v4904 = vsel %vm537, %v4626, %v4628
        %v4905 = vsel %vm537, %v4630, %v4632
        %v4906 = vsel %vm537, %v4632, %v4634
        %v4907 = vsel %vm537, %v4636, %v4638
        %v4908 = vsel %vm537, %v4638, %v4640
        %v4909 = vsel %vm537, %v4642, %v4644
        %v4910 = vsel %vm537, %v4644, %v4646
        %v4911 = vsel %vm537, %v4648, %v4650
        %v4912 = vsel %vm537, %v4650, %v4652
        %v4913 = vsel %vm537, %v4654, %v4656
        %v4914 = vsel %vm537, %v4656, %v4658
        %v4915 = vsel %vm537, %v4660, %v4662
        %v4916 = vsel %vm537, %v4662, %v4664
        %v4917 = vsel %vm537, %v4666, %v4668
        %v4918 = vsel %vm537, %v4668, %v4670
        %v4919 = vsel %vm537, %v4672, %v4674
        %v4920 = vsel %vm537, %v4674, %v4676
        %v4921 = vsel %vm537, %v4678, %v4680
        %v4922 = vsel %vm537, %v4680, %v4682
        %v4923 = vsel %vm537, %v4684, %v4686
        %v4924 = vsel %vm537, %v4686, %v4688
        %v4925 = vsel %vm537, %v4690, %v4692
        %v4926 = vsel %vm537, %v4692, %v4694
        %v4927 = vsel %vm537, %v4696, %v4698
        %v4928 = vsel %vm537, %v4698, %v4700
        %v4929 = vsel %vm537, %v4702, %v4704
        %v4930 = vsel %vm537, %v4704, %v4706
        %v4931 = vsel %vm537, %v4708, %v4710
        %v4932 = vsel %vm537, %v4710, %v4712
        %v4933 = vsel %vm537, %v4714, %v4716
        %v4934 = vsel %vm537, %v4716, %v4718
        %v4935 = vsel %vm537, %v4720, %v4722
        %v4936 = vsel %vm537, %v4722, %v4724
        %v4937 = vsel %vm537, %v4726, %v4728
        %v4938 = vsel %vm537, %v4728, %v4730
        %v4939 = vsel %vm537, %v4732, %v4734
        %v4940 = vsel %vm537, %v4734, %v4736
        %v4941 = vsel %vm537, %v4738, %v4740
        %v4942 = vsel %vm537, %v4740, %v4742
        %v4943 = vsel %vm537, %v4744, %v4746
        %v4944 = vsel %vm537, %v4746, %v4748
        %v4945 = vsel %vm537, %v4750, %v4752
        %v4946 = vsel %vm537, %v4752, %v4754
        %v4947 = vsel %vm537, %v4756, %v4758
        %v4948 = vsel %vm537, %v4758, %v4760
        %v4949 = vsel %vm537, %v4762, %v4764
        %v4950 = vsel %vm537, %v4764, %v4766
        %v4951 = vsel %vm537, %v4768, %v4770
        %v4952 = vsel %vm537, %v4770, %v4772
        %v4953 = vsel %vm537, %v4774, %v4776
        %v4954 = vsel %vm537, %v4776, %v4778
        %v4955 = vsel %vm537, %v4780, %v4782
        %v4956 = vsel %vm537, %v4782, %v4784
        %v4957 = vsel %vm537, %v4786, %v4788
        %v4958 = vsel %vm537, %v4788, %v4790
        %v4959 = vsel %vm537, %v4792, %v4794
        %v4960 = vsel %vm537, %v4794, %v4796
        %v4961 = vsel %vm537, %v4798, %v4800
        %v4962 = vsel %vm537, %v4800, %v4802
        %v4963 = vsel %vm537, %v4804, %v4806
        %v4964 = vsel %vm537, %v4806, %v4808
        %v4965 = vsel %vm537, %v4810, %v4812
        %v4966 = vsel %vm537, %v4812, %v4814
        %v4967 = vsel %vm537, %v4816, %v4818
        %v4968 = vsel %vm537, %v4818, %v4820
        %v4969 = vsel %vm537, %v4822, %v4824
        %v4970 = vsel %vm537, %v4824, %v4826
        %v4971 = vsel %vm537, %v4828, %v4830
        %v4972 = vsel %vm537, %v4830, %v4832
        %v4973 = vsel %vm537, %v4834, %v4836
        %v4974 = vsel %vm537, %v4836, %v4838
        %v4975 = vsel %vm537, %v4840, %v4842
        %v4976 = vsel %vm537, %v4842, %v4844
        %v4977 = vsel %vm537, %v4846, %v4848
        %v4978 = vsel %vm537, %v4848, %v4850
        %v4979 = vsel %vm537, %v4852, %v4854
        %v4980 = vsel %vm537, %v4854, %v4856
        %v4981 = vsel %vm537, %v4858, %v4860
        %v4982 = vsel %vm537, %v4860, %v4862
        %v4983 = vsel %vm537, %v4864, %v4866
        %v4984 = vsel %vm537, %v4866, %v4868
        %v4985 = vsel %vm537, %v4870, %v4872
        %v4986 = vsel %vm537, %v4872, %v4874
        %v4987 = vsel %vm537, %v4876, %v4878
        %v4988 = vsel %vm537, %v4878, %v4880
        %vm5097 = vcmask 392192
        %v5099 = vsel %vm5097, %v4522, 0
        %v5102 = vsel %vm5097, %v4526, 0
        %5104 = vmatprep.subr.mxu0 %v4882
        %5105 = vmatpush1.msra.mxu0 %v4881
        %5106 = vmatprep.subr.mxu0 %v4884
        %5107 = vmatpush1.msra.mxu0 %v4883
        %5108 = vmatprep.subr.mxu0 %v4886
        %5109 = vmatpush1.msra.mxu0 %v4885
        %5110 = vmatprep.subr.mxu0 %v4888
        %5111 = vmatpush1.msra.mxu0 %v4887
        %5112 = vmatprep.subr.mxu0 %v4890
        %5113 = vmatpush1.msra.mxu0 %v4889
        %5114 = vmatprep.subr.mxu0 %v4892
        %5115 = vmatpush1.msra.mxu0 %v4891
        %5116 = vmatprep.subr.mxu0 %v4894
        %5117 = vmatpush1.msra.mxu0 %v4893
        %5118 = vmatprep.subr.mxu0 %v4896
        %5119 = vmatpush1.msra.mxu0 %v4895
        %5120 = vmatprep.subr.mxu0 %v4898
        %5121 = vmatpush1.msra.mxu0 %v4897
        %5122 = vmatprep.subr.mxu0 %v4900
        %5123 = vmatpush1.msra.mxu0 %v4899
        %5124 = vmatprep.subr.mxu0 %v4902
        %5125 = vmatpush1.msra.mxu0 %v4901
        %5126 = vmatprep.subr.mxu0 %v4904
        %5127 = vmatpush1.msra.mxu0 %v4903
        %5128 = vmatprep.subr.mxu0 %v4906
        %5129 = vmatpush1.msra.mxu0 %v4905
        %5130 = vmatprep.subr.mxu0 %v4908
        %5131 = vmatpush1.msra.mxu0 %v4907
        %5132 = vmatprep.subr.mxu0 %v4910
        %5133 = vmatpush1.msra.mxu0 %v4909
        %5134 = vmatprep.subr.mxu0 %v4912
        %5135 = vmatpush1.msra.mxu0 %v4911
        %5136 = vmatprep.subr.mxu0 %v4914
        %5137 = vmatpush1.msra.mxu0 %v4913
        %5138 = vmatprep.subr.mxu0 %v4916
        %5139 = vmatpush1.msra.mxu0 %v4915
        %5140 = vmatprep.subr.mxu0 %v4918
        %5141 = vmatpush1.msra.mxu0 %v4917
        %5142 = vmatprep.subr.mxu0 %v4920
        %5143 = vmatpush1.msra.mxu0 %v4919
        %5144 = vmatprep.subr.mxu0 %v4922
        %5145 = vmatpush1.msra.mxu0 %v4921
        %5146 = vmatprep.subr.mxu0 %v4924
        %5147 = vmatpush1.msra.mxu0 %v4923
        %5148 = vmatprep.subr.mxu0 %v4926
        %5149 = vmatpush1.msra.mxu0 %v4925
        %5150 = vmatprep.subr.mxu0 %v4928
        %5151 = vmatpush1.msra.mxu0 %v4927
        %5152 = vmatprep.subr.mxu0 %v4930
        %5153 = vmatpush1.msra.mxu0 %v4929
        %5154 = vmatprep.subr.mxu0 %v4932
        %5155 = vmatpush1.msra.mxu0 %v4931
        %5156 = vmatprep.subr.mxu0 %v4934
        %5157 = vmatpush1.msra.mxu0 %v4933
        %5158 = vmatprep.subr.mxu0 %v4936
        %5159 = vmatpush1.msra.mxu0 %v4935
        %5160 = vmatprep.subr.mxu0 %v4938
        %5161 = vmatpush1.msra.mxu0 %v4937
        %5162 = vmatprep.subr.mxu0 %v4940
        %5163 = vmatpush1.msra.mxu0 %v4939
        %5164 = vmatprep.subr.mxu0 %v4942
        %5165 = vmatpush1.msra.mxu0 %v4941
        %5166 = vmatprep.subr.mxu0 %v4944
        %5167 = vmatpush1.msra.mxu0 %v4943
        %5168 = vmatprep.mubr.f32.mxu0 %v4520
        %5169 = vmatmul.mubr.f32.gmra.mrb[0].mxu0 %v4519
        %v5170 = vpop.f32.mrb[0].mxu0
        %v5171 = vadd.f32 %v4532, %v5170
        %v5172 = vpop.f32.mrb[0].mxu0
        %v5173 = vadd.f32 %v4532, %v5172
        %5174 = vmatprep.mubr.f32.mxu0 %v4524
        %5175 = vmatmul.mubr.f32.gmra.mrb[0].mxu0 %v4523
        %v5176 = vpop.f32.mrb[0].mxu0
        %v5177 = vadd.f32 %v4537, %v5176
        %v5178 = vpop.f32.mrb[0].mxu0
        %v5179 = vadd.f32 %v4537, %v5178
        %5180 = vdwg.mxu0
        %5181 = vmatprep.subr.mxu0 %v4946
        %5182 = vmatpush1.msra.mxu0 %v4945
        %5183 = vmatprep.subr.mxu0 %v4948
        %5184 = vmatpush1.msra.mxu0 %v4947
        %5185 = vmatprep.subr.mxu0 %v4950
        %5186 = vmatpush1.msra.mxu0 %v4949
        %5187 = vmatprep.subr.mxu0 %v4952
        %5188 = vmatpush1.msra.mxu0 %v4951
        %5189 = vmatprep.subr.mxu0 %v4954
        %5190 = vmatpush1.msra.mxu0 %v4953
        %5191 = vmatprep.subr.mxu0 %v4956
        %5192 = vmatpush1.msra.mxu0 %v4955
        %5193 = vmatprep.subr.mxu0 %v4958
        %5194 = vmatpush1.msra.mxu0 %v4957
        %5195 = vmatprep.subr.mxu0 %v4960
        %5196 = vmatpush1.msra.mxu0 %v4959
        %5197 = vmatprep.subr.mxu0 %v4962
        %5198 = vmatpush1.msra.mxu0 %v4961
        %5199 = vmatprep.subr.mxu0 %v4964
        %5200 = vmatpush1.msra.mxu0 %v4963
        %5201 = vmatprep.subr.mxu0 %v4966
        %5202 = vmatpush1.msra.mxu0 %v4965
        %5203 = vmatprep.subr.mxu0 %v4968
        %5204 = vmatpush1.msra.mxu0 %v4967
        %5205 = vmatprep.subr.mxu0 %v4970
        %5206 = vmatpush1.msra.mxu0 %v4969
        %5207 = vmatprep.subr.mxu0 %v4972
        %5208 = vmatpush1.msra.mxu0 %v4971
        %5209 = vmatprep.subr.mxu0 %v4974
        %5210 = vmatpush1.msra.mxu0 %v4973
        %5211 = vmatprep.subr.mxu0 %v4976
        %5212 = vmatpush1.msra.mxu0 %v4975
        %5213 = vmatprep.subr.mxu0 %v4978
        %5214 = vmatpush1.msra.mxu0 %v4977
        %5215 = vmatprep.subr.mxu0 %v4980
        %5216 = vmatpush1.msra.mxu0 %v4979
        %5217 = vmatprep.subr.mxu0 %v4982
        %5218 = vmatpush1.msra.mxu0 %v4981
        %5219 = vmatprep.subr.mxu0 %v4984
        %5220 = vmatpush1.msra.mxu0 %v4983
        %5221 = vmatprep.subr.mxu0 %v4986
        %5222 = vmatpush1.msra.mxu0 %v4985
        %5223 = vmatprep.subr.mxu0 %v4988
        %5224 = vmatpush1.msra.mxu0 %v4987
        %5225 = vmatprep.subr.mxu0 0.0
        %5226 = vmatpush1.msra.mxu0 0.0
        %5227 = vmatprep.subr.mxu0 0.0
        %5228 = vmatpush1.msra.mxu0 0.0
        %5229 = vmatprep.subr.mxu0 0.0
        %5230 = vmatpush1.msra.mxu0 0.0
        %5231 = vmatprep.subr.mxu0 0.0
        %5232 = vmatpush1.msra.mxu0 0.0
        %5233 = vmatprep.subr.mxu0 0.0
        %5234 = vmatpush1.msra.mxu0 0.0
        %5235 = vmatprep.subr.mxu0 0.0
        %5236 = vmatpush1.msra.mxu0 0.0
        %5237 = vmatprep.subr.mxu0 0.0
        %5238 = vmatpush1.msra.mxu0 0.0
        %5239 = vmatprep.subr.mxu0 0.0
        %5240 = vmatpush1.msra.mxu0 0.0
        %5241 = vmatprep.subr.mxu0 0.0
        %5242 = vmatpush1.msra.mxu0 0.0
        %5243 = vmatprep.subr.mxu0 0.0
        %5244 = vmatpush1.msra.mxu0 0.0
        %5245 = vmatprep.mubr.f32.mxu0 %v5099
        %5246 = vmatmul.mubr.f32.gmra.mrb[0].mxu0 %v4521
        %v5247 = vpop.f32.mrb[0].mxu0
        %v5248 = vadd.f32 %v5171, %v5247
        %v5249 = vpop.f32.mrb[0].mxu0
        %v5250 = vadd.f32 %v5173, %v5249
        %5251 = vmatprep.mubr.f32.mxu0 %v5102
        %5252 = vmatmul.mubr.f32.gmra.mrb[0].mxu0 %v4525
        %v5253 = vpop.f32.mrb[0].mxu0
        %v5254 = vadd.f32 %v5177, %v5253
        %v5255 = vpop.f32.mrb[0].mxu0
        %v5256 = vadd.f32 %v5179, %v5255
        %5257 = vdwg.mxu0
        %v5258 = vmul.f32 %v5248, 0.2
        %v5259 = vmul.f32 %v5250, 0.2
        %v5260 = vmul.f32 %v5254, 0.2
        %v5261 = vmul.f32 %v5256, 0.2
        %v5262 = vld [vmem:[#allocation2 + $0x8] sm:$0xff]
        %v5263 = vld [vmem:[#allocation2 + $0x10] sm:$0xff]
        %v5264 = vld [vmem:[#allocation2 + $0x28] sm:$0xff]
        %v5265 = vld [vmem:[#allocation2 + $0x30] sm:$0xff]
        %v5266 = vadd.f32 %v5258, %v5262
        %v5267 = vadd.f32 %v5259, %v5263
        %v5268 = vadd.f32 %v5260, %v5264
        %v5269 = vadd.f32 %v5261, %v5265
        %5270 = vst [vmem:[%s533] sm:$0xff] %v5266
        %5271 = vst [vmem:[%s533 + $0x8] sm:$0xff] %v5267
        %5272 = vst [vmem:[%s533 + $0x10] sm:$0xff] %v5268
        %5273 = vst [vmem:[%s533 + $0x18] sm:$0xff] %v5269
        %s5274 = sand.u32 %s277, 1
        %s5275 = scalar_lea.sflag [#allocation5], %s5274
        %s5276 = sand.u32 %s277, 1
        %s5277 = smul.addr %s5276, 32
        %s5278 = scalar_lea.vmem [#allocation21], %s5277
        // Predicated region
        $region109: #{tpu_custom_call.1} parent=63 // pred_check
          %p5279 = pneg %p287
        $region110: #{tpu_custom_call.1} parent=63 // pred_check_branch
          %5281 = sbr.rel (%p5279) target = $region112
        $region111: #{tpu_custom_call.1} parent=63 // pred_region
          %s5283 = ssub.s32 512, 512
          %5284 = vsyncadd %s5275, %s5283
          %s5285 = smul.addr %s33, 4
          %s5286 = smul.addr %s5285, 128
          %s5287 = scalar_lea.hbm %s11, %s5286
          %s5288 = sshll.u32 %s5278, 4
          %s5289 = int_to_ptr.vmem [resolvable:$true] %s5288
          %5294 = dma.vmem_to_hbm [thread:$0]  %s5289, 512, %s5287, %s5275, 256, 256, 16
        $region112: #{tpu_custom_call.1} parent=63 // pred_fallthru
          _
      $region64: #{tpu_custom_call.1} parent=5 // pred_fallthru
        _
      %p5295 = scmp.le.s32.totalorder 2, %s28
      // Predicated region
      $region113: #{tpu_custom_call.1} parent=5 // pred_check
        %p5296 = pneg %p5295
      $region114: #{tpu_custom_call.1} parent=5 // pred_check_branch
        %5298 = sbr.rel (%p5296) target = $region116
      $region115: #{tpu_custom_call.1} parent=5 // pred_region
        %s5299 = ssub.s32 %s28, 2
        // Predicated region
        $region117: #{tpu_custom_call.1} parent=115 // pred_check
          %p5300 = pneg %p293
        $region118: #{tpu_custom_call.1} parent=115 // pred_check_branch
          %5302 = sbr.rel (%p5300) target = $region120
        $region119: #{tpu_custom_call.1} parent=115 // pred_region
          %s5303 = sand.u32 %s278, 1
          %s5304 = scalar_lea.sflag [#allocation5], %s5303
          %s5305 = sand.u32 %s278, 1
          %s5306 = smul.addr %s5305, 32
          %s5307 = scalar_lea.vmem [#allocation21], %s5306
          %5308 = dma.done %s5304, 512
        $region120: #{tpu_custom_call.1} parent=115 // pred_fallthru
          _
      $region116: #{tpu_custom_call.1} parent=5 // pred_fallthru
        _
    $region6: #{tpu_custom_call.1} parent=1 // loop_footer
      %s32 = sadd.s32 1, %s28
    $region7: #{tpu_custom_call.1} parent=1 // loop_footer_branch
      %27 = sbr.rel target = $region3
    $region8: #{tpu_custom_call.1} parent=1 // loop_exit
      _
    %5309 = vsyncpa [#allocation4], 1
    %s5310 = scalar_lea.sflag [#allocation4], 1
    %5311 = vsyncpa %s5310, 1
    %5312 = vsyncpa [#allocation7], 1
    %5313 = vsyncpa [#allocation10], 1
    %5314 = vsyncpa [#allocation13], 1
    %5315 = vsyncpa [#allocation16], 1
    %5316 = vsyncpa [#allocation19], 1
    %5317 = vsyncpa [#allocation5], 1
    %s5318 = scalar_lea.sflag [#allocation5], 1
    %5319 = vsyncpa %s5318, 1

</llo_original>
